<compile_context>
chip_gen: v7x
topology: tpu7x:2x2x1
jax: 0.10.0
libtpu: 0.0.40
codegen_flags: <defaults>
</compile_context>

<pallas_src>
import jax
import jax.numpy as jnp
from jax.experimental import pallas as pl
from jax.experimental.pallas import tpu as pltpu

# ----- scaled dims (original: H=768, hidden=384/dir, 7 DDI classes) -----
B = 2            # batch
T = 16           # max sequence length
DH = 128         # LSTM hidden per direction (lane-aligned toy stand-in for 384)
H = 2 * DH       # hidden size (stands in for 768)
VOCAB_TOK = 50   # token vocab for the embedding standing in for BERT
NER_VOCAB = 16   # vocab_len for ner_fc
N_DDI = 7        # ddi classes
S = 2            # subjects per batch element
EPS = 1e-12      # LayerNorm epsilon (spec default 1e-12)
DDI_PAD = 128    # lane-dense padding of ddi_fc output
HEAD_PAD = 128   # lane-dense padding of fused ner/enc/pdc heads


# ---------------------------------------------------------------------------
# Pallas kernels
# ---------------------------------------------------------------------------
def _linear_kernel(x_ref, w_ref, b_ref, o_ref):
    o_ref[...] = (jnp.dot(x_ref[...], w_ref[...],
                          preferred_element_type=jnp.float32) + b_ref[...])


def linear(x, w, b):
    """Single-block Pallas matmul + bias. x: (M, K), w: (K, N), b: (N,).
    Operands may be bf16; accumulation / output are f32."""
    M, K = x.shape
    N = w.shape[1]
    # TODO(synk): at real scale (H=768, large T*B) tile the M axis and set
    # vmem_limit_bytes explicitly for v7x's 64 MiB VMEM.
    return pl.pallas_call(
        _linear_kernel,
        out_shape=jax.ShapeDtypeStruct((M, N), jnp.float32),
        grid=(1,),
        in_specs=[pl.BlockSpec((M, K), lambda i: (0, 0)),
                  pl.BlockSpec((K, N), lambda i: (0, 0)),
                  pl.BlockSpec((1, N), lambda i: (0, 0))],
        out_specs=pl.BlockSpec((M, N), lambda i: (0, 0)),
    )(x, w, b.reshape(1, N))


def _bilstm_kernel(gx_ref, whh_ref, out_ref, h_sc, c_sc):
    """Fused bidirectional LSTM recurrence. Grid = (direction,).

    The whole per-direction gate slab (T, B, 4*dh) and the per-direction output
    (T, B, dh) are resident VMEM blocks; the time loop runs inside the kernel,
    so only one grid step per direction. Input gates (x @ W_ih + b) were
    precomputed outside; only h @ W_hh and the gate nonlinearities run per step.
    """
    d = pl.program_id(0)
    Tn = gx_ref.shape[0]
    dh = h_sc.shape[-1]

    h_sc[...] = jnp.zeros_like(h_sc)
    c_sc[...] = jnp.zeros_like(c_sc)
    whh = whh_ref[0]                         # (dh, 4*dh) bf16, resident

    def step(i, carry):
        # forward direction walks t = 0..T-1, backward walks t = T-1..0
        t = d * (Tn - 1) + (1 - 2 * d) * i
        gates = gx_ref[t] + jnp.dot(h_sc[...].astype(jnp.bfloat16), whh,
                                    preferred_element_type=jnp.float32)  # (B, 4*dh)
        # gate order i, f, g, o -- 128-lane-aligned slices (dh % 128 == 0)
        ig = jax.nn.sigmoid(gates[:, 0 * dh:1 * dh])
        fg = jax.nn.sigmoid(gates[:, 1 * dh:2 * dh])
        gg = jnp.tanh(gates[:, 2 * dh:3 * dh])
        og = jax.nn.sigmoid(gates[:, 3 * dh:4 * dh])
        c = fg * c_sc[...] + ig * gg
        h = og * jnp.tanh(c)
        c_sc[...] = c
        h_sc[...] = h
        out_ref[t] = h
        return carry

    jax.lax.fori_loop(0, Tn, step, 0)


def bilstm_layer(x_tb, wih_cat, b_cat, whh_stack):
    """One bidirectional LSTM layer, time-major.

    x_tb: (T, B, Din) f32; wih_cat: (Din, 8*DH) bf16 = [fwd gates | bwd gates];
    b_cat: (8*DH,) f32; whh_stack: (2, DH, 4*DH) bf16. Returns (T, B, 2*DH) f32
    with features already laid out as [fwd | bwd] (no transpose afterwards).
    """
    Tn, Bn, Din = x_tb.shape
    dh = whh_stack.shape[1]

    # Hoisted input projection: one bf16 GEMM over all timesteps & both
    # directions (M = T*B, N = 8*DH lane-dense).
    gx = linear(x_tb.reshape(Tn * Bn, Din).astype(jnp.bfloat16), wih_cat, b_cat)
    gx = gx.reshape(Tn, Bn, 8 * dh)        # no transpose: BlockSpec picks the half

    out = pl.pallas_call(
        _bilstm_kernel,
        out_shape=jax.ShapeDtypeStruct((Tn, Bn, 2 * dh), jnp.float32),
        grid=(2,),
        in_specs=[pl.BlockSpec((Tn, Bn, 4 * dh), lambda d: (0, 0, d)),
                  pl.BlockSpec((1, dh, 4 * dh), lambda d: (d, 0, 0))],
        out_specs=pl.BlockSpec((Tn, Bn, dh), lambda d: (0, 0, d)),
        scratch_shapes=[pltpu.VMEM((Bn, dh), jnp.float32),
                        pltpu.VMEM((Bn, dh), jnp.float32)],
        compiler_params=pltpu.CompilerParams(
            dimension_semantics=("parallel",)),   # 2-way across v7x TensorCores
    )(gx, whh_stack)
    return out                              # (T, B, 2*DH) = [fwd | bwd]


def _cln_ddi_kernel(enc_ref, beta_ref, gamma_ref, wddi_ref, bddi_ref, out_ref):
    """Fused conditional LayerNorm (spec module) + ddi_fc. Grid = (batch,).

    beta/gamma per subject are precomputed by one batched affine GEMM; only the
    normalization + the ddi matmul (all S*T rows at once) run here.
    """
    enc = enc_ref[0]                                  # (T, H) f32
    Hn = enc.shape[-1]
    # two-pass (centered) variance in f32, per correctness review
    mean = jnp.sum(enc, axis=-1, keepdims=True) * (1.0 / Hn)
    xc = enc - mean
    var = jnp.sum(xc * xc, axis=-1, keepdims=True) * (1.0 / Hn)
    xhat = xc * jax.lax.rsqrt(var + EPS)              # (T, H)

    beta = beta_ref[0]                                # (S, H)
    gamma = gamma_ref[0]                              # (S, H)
    y = xhat[None, :, :] * gamma[:, None, :] + beta[:, None, :]   # (S, T, H)
    Sn, Tn = y.shape[0], y.shape[1]
    logits = jnp.dot(y.reshape(Sn * Tn, Hn).astype(jnp.bfloat16), wddi_ref[...],
                     preferred_element_type=jnp.float32) + bddi_ref[...]
    out_ref[0] = logits.reshape(Sn, Tn, logits.shape[-1])


def cln_ddi(enc, beta, gamma, wddi_p, bddi_p):
    """enc: (B, T, H) f32; beta/gamma: (B, S, H) f32; padded ddi weights.
    Returns DDI logits (B, S, T, N_DDI)."""
    Bn, Tn, Hn = enc.shape
    Sn = beta.shape[1]
    Np = wddi_p.shape[-1]
    out = pl.pallas_call(
        _cln_ddi_kernel,
        out_shape=jax.ShapeDtypeStruct((Bn, Sn, Tn, Np), jnp.float32),
        grid=(Bn,),
        in_specs=[
            pl.BlockSpec((1, Tn, Hn), lambda b: (b, 0, 0)),
            pl.BlockSpec((1, Sn, Hn), lambda b: (b, 0, 0)),
            pl.BlockSpec((1, Sn, Hn), lambda b: (b, 0, 0)),
            pl.BlockSpec((Hn, Np), lambda b: (0, 0)),
            pl.BlockSpec((1, Np), lambda b: (0, 0)),
        ],
        out_specs=pl.BlockSpec((1, Sn, Tn, Np), lambda b: (b, 0, 0, 0)),
        compiler_params=pltpu.CompilerParams(
            dimension_semantics=("parallel",)),
    )(enc, beta, gamma, wddi_p, bddi_p)
    return out[..., :N_DDI]


def fused_heads(enc_r, p):
    """One lane-dense Pallas GEMM for ner_fc + enc_fc + pdc_fc (pre-padded to 128)."""
    Bn, Tn, Hn = enc_r.shape
    out = linear(enc_r.reshape(Bn * Tn, Hn).astype(jnp.bfloat16),
                 p['heads_w_p'], p['heads_b_p']).reshape(Bn, Tn, -1)
    ner = out[..., :NER_VOCAB]                                      # (B, T, 16)
    # mean over T commutes with the linear layer, so cls @ W + b == mean(tok @ W + b)
    # TODO(synk): padded timesteps are included in this mean (no mask), matching
    # the previous synthetic implementation.
    enc_logits = jnp.mean(out[..., NER_VOCAB:NER_VOCAB + 2], axis=1)   # (B, 2)
    pdc_logits = jnp.mean(out[..., NER_VOCAB + 2:NER_VOCAB + 4], axis=1)
    return ner, enc_logits, pdc_logits


# ---------------------------------------------------------------------------
# Glue (losses, gathers, parameter setup) in plain JAX
# ---------------------------------------------------------------------------
def _ce_masked(logits_2d, labels_1d, weights_1d):
    logz = jax.nn.logsumexp(logits_2d, axis=-1)
    ll = jnp.take_along_axis(logits_2d, labels_1d[:, None], axis=-1)[:, 0]
    nll = logz - ll
    wsum = jnp.sum(weights_1d)
    return jnp.sum(nll * weights_1d) / jnp.maximum(wsum, 1.0)


def init_params(key):
    ks = jax.random.split(key, 16)
    scale = 0.02
    p = {}
    p['embed'] = jax.random.normal(ks[0], (VOCAB_TOK, H), jnp.float32) * scale
    lstm = []
    idx = 1
    for _layer in range(2):            # rnn_ner: 2 layers, bidirectional
        wihs, whhs = [], []
        for _d in range(2):            # layer input dim is H for both layers (2*DH == H)
            wihs.append(jax.random.normal(ks[idx], (H, 4 * DH), jnp.float32) * scale)
            idx += 1
            whhs.append(jax.random.normal(ks[idx], (DH, 4 * DH), jnp.float32) * scale)
            idx += 1
        wih_cat = jnp.concatenate(wihs, axis=1).astype(jnp.bfloat16)  # (H, 8*DH)
        b_cat = jnp.zeros((8 * DH,), jnp.float32)                     # b_ih + b_hh
        whh_stack = jnp.stack(whhs, axis=0).astype(jnp.bfloat16)      # (2, DH, 4*DH)
        lstm.append((wih_cat, b_cat, whh_stack))
    p['lstm'] = lstm
    # conditional LayerNorm (per spec LayerNorm.initialize_weights):
    # beta=0, gamma=1, beta_dense/gamma_dense constant_(0). Stored fused as
    # [W_beta | W_gamma] for a single batched affine GEMM.
    p['cln_w_bg'] = jnp.zeros((H, 2 * H), jnp.bfloat16)
    p['cln_b_bg'] = jnp.concatenate([jnp.zeros((H,), jnp.float32),   # beta
                                     jnp.ones((H,), jnp.float32)])   # gamma
    # ddi_fc, padded once to 128 output lanes (hoisted constant padding)
    wddi = jax.random.normal(ks[idx], (H, N_DDI), jnp.float32) * scale; idx += 1
    p['ddi_w_p'] = (jnp.zeros((H, DDI_PAD), jnp.float32)
                    .at[:, :N_DDI].set(wddi).astype(jnp.bfloat16))
    p['ddi_b_p'] = jnp.zeros((1, DDI_PAD), jnp.float32)
    # ner / enc / pdc heads fused + padded once (hoisted constant padding)
    wner = jax.random.normal(ks[idx], (H, NER_VOCAB), jnp.float32) * scale; idx += 1
    wenc = jax.random.normal(ks[idx], (H, 2), jnp.float32) * scale; idx += 1
    wpdc = jax.random.normal(ks[idx], (H, 2), jnp.float32) * scale; idx += 1
    whead = jnp.concatenate([wner, wenc, wpdc], axis=1)               # (H, 20)
    p['heads_w_p'] = (jnp.zeros((H, HEAD_PAD), jnp.float32)
                      .at[:, :whead.shape[1]].set(whead).astype(jnp.bfloat16))
    p['heads_b_p'] = jnp.zeros((HEAD_PAD,), jnp.float32)
    return p


def net_forward(p, x, mask, is_subjects, is_head, ner_tags_id, ddi_tags_id,
                tags_masks, seqlens, enc_tags, pdc_tags):
    Bn, Tn = x.shape

    # TODO(synk): BertModel is not provided in the source module; replaced by a
    # deterministic embedding lookup producing (B, T, H) encodings.
    enc = p['embed'][x]                                        # (B, T, H)

    # "valid_output" head-token compaction, vectorized as a gather matrix.
    is_head_i = is_head.astype(jnp.int32)
    pos = jnp.cumsum(is_head_i, axis=1) - 1
    gather = ((pos[:, None, :] == jnp.arange(Tn)[None, :, None])
              & (is_head_i[:, None, :] == 1)).astype(jnp.float32)   # (B, Tout, Tin)
    enc_v = jnp.einsum('bkj,bjh->bkh', gather, enc)            # (B, T, H)
    # nn.Dropout(0.3): eval-mode identity (deterministic kernel)

    # rnn_ner: 2-layer bidirectional LSTM, time-major; input projection hoisted;
    # time loop inside the kernel; output written directly in [fwd|bwd] layout.
    # TODO(synk): padded timesteps are not masked in the recurrence (no packed-
    # sequence semantics), matching the previous synthetic implementation.
    h_tb = jnp.transpose(enc_v, (1, 0, 2))                     # (T, B, H)
    for layer in range(2):
        wih_cat, b_cat, whh_stack = p['lstm'][layer]
        h_tb = bilstm_layer(h_tb, wih_cat, b_cat, whh_stack)   # (T, B, 2*DH)
    enc_r = jnp.transpose(h_tb, (1, 0, 2))                     # (B, T, H)

    # DDI branch: subject-avg pooling (tiny) + ONE batched conditional-affine
    # GEMM for beta/gamma + fused LayerNorm + ddi_fc kernel over the batch axis.
    subj = is_subjects.astype(jnp.float32)                     # (B, S, T)
    cnt = jnp.maximum(jnp.sum((subj != 0.0).astype(jnp.float32),
                              axis=-1, keepdims=True), 1.0)
    cond = jnp.einsum('bst,bth->bsh', subj, enc_r) / cnt        # (B, S, H)
    bg = linear(cond.reshape(Bn * S, H).astype(jnp.bfloat16),
                p['cln_w_bg'], p['cln_b_bg']).reshape(Bn, S, 2 * H)
    beta, gamma = bg[..., :H], bg[..., H:]
    DDI_logits = cln_ddi(enc_r, beta, gamma,
                         p['ddi_w_p'], p['ddi_b_p'])            # (B, S, T, 7)

    # DDI loss: CE(ignore_index=0) over active positions, mean over subjects/batch
    lab = ddi_tags_id
    w = ((tags_masks[:, None, :] == 1) & (lab != 0)).astype(jnp.float32)
    logz = jax.nn.logsumexp(DDI_logits, axis=-1)
    ll = jnp.take_along_axis(DDI_logits, lab[..., None], axis=-1)[..., 0]
    nll = logz - ll
    per_subj = jnp.sum(nll * w, axis=-1) / jnp.maximum(jnp.sum(w, axis=-1), 1.0)
    DDI_loss = jnp.mean(jnp.mean(per_subj, axis=-1))

    # fused classifier heads (ner / enc / pdc) in a single lane-dense GEMM
    NER_logits, ENC_logits, PDC_logits = fused_heads(enc_r, p)

    ones_b = jnp.ones((Bn,), jnp.float32)
    ENC_loss = _ce_masked(ENC_logits, enc_tags[:, 0], ones_b)
    PDC_loss = _ce_masked(PDC_logits, pdc_tags[:, 0], ones_b)

    ner_w = ((tags_masks.reshape(-1) == 1)
             & (ner_tags_id.reshape(-1) != 0)).astype(jnp.float32)
    NER_loss = _ce_masked(NER_logits.reshape(-1, NER_VOCAB),
                          ner_tags_id.reshape(-1), ner_w)

    total = NER_loss + DDI_loss + 0.1 * ENC_loss + 0.1 * PDC_loss
    return NER_logits, DDI_logits, ENC_logits, PDC_logits, total


if __name__ == "__main__":
    key = jax.random.PRNGKey(0)
    kp, kd = jax.random.split(key)
    params = init_params(kp)
    ks = jax.random.split(kd, 4)

    seqlens = jnp.array([16, 12], dtype=jnp.int32)
    col = jnp.arange(T)
    seql = seqlens[:, None]
    x = jax.random.randint(ks[0], (B, T), 0, VOCAB_TOK, dtype=jnp.int32)
    mask = (col[None, :] < seql).astype(jnp.int32)
    is_head = ((col[None, :] < seql) & (col[None, :] % 5 != 4)).astype(jnp.int32)
    tags_masks = mask
    ner_tags_id = (((col[None, :] + 1 + jnp.arange(B)[:, None]) % NER_VOCAB)
                   .astype(jnp.int32) * mask)
    ddi_tags_id = (((col[None, None, :] + jnp.arange(S)[None, :, None]
                     + 1 + jnp.arange(B)[:, None, None]) % N_DDI)
                   .astype(jnp.int32) * mask[:, None, :])
    is_subjects = jnp.zeros((B, S, T), jnp.float32)
    for s in range(S):
        is_subjects = is_subjects.at[:, s, 2 * s].set(1.0)
        is_subjects = is_subjects.at[:, s, 2 * s + 1].set(1.0)
    enc_tags = jnp.array([[1], [0]], dtype=jnp.int32)
    pdc_tags = jnp.array([[0], [1]], dtype=jnp.int32)

    fwd = jax.jit(net_forward)
    outs = fwd(params, x, mask, is_subjects, is_head, ner_tags_id,
               ddi_tags_id, tags_masks, seqlens, enc_tags, pdc_tags)
    jax.block_until_ready(outs)
    print("KERNEL_OK")
</pallas_src>

<mosaic_0001>
module attributes {stable_mosaic.version = 11 : i64} {
  func.func @_linear_kernel(%arg0: i32, %arg1: memref<32x256xbf16, #tpu.memory_space<vmem>>, %arg2: memref<256x1024xbf16, #tpu.memory_space<vmem>>, %arg3: memref<1x1024xf32, #tpu.memory_space<vmem>>, %arg4: memref<32x1024xf32, #tpu.memory_space<vmem>>) attributes {dimension_semantics = [#tpu.dimension_semantics<arbitrary>], iteration_bounds = array<i64: 1>, scalar_prefetch = 0 : i64, scratch_operands = 0 : i64, tpu.core_type = #tpu.core_type<tc>, window_params = [{pipeline_mode = #tpu.pipeline_mode<synchronous>, transform_indices = @transform_0, window_bounds = array<i64: 32, 256>}, {pipeline_mode = #tpu.pipeline_mode<synchronous>, transform_indices = @transform_1, window_bounds = array<i64: 256, 1024>}, {pipeline_mode = #tpu.pipeline_mode<synchronous>, transform_indices = @transform_2, window_bounds = array<i64: 1, 1024>}, {pipeline_mode = #tpu.pipeline_mode<synchronous>, transform_indices = @transform_3, window_bounds = array<i64: 32, 1024>}]} {
    %c0 = arith.constant 0 : index
    %c0_0 = arith.constant 0 : index
    %0 = vector.load %arg1[%c0, %c0_0] : memref<32x256xbf16, #tpu.memory_space<vmem>>, vector<32x256xbf16>
    %c0_1 = arith.constant 0 : index
    %c0_2 = arith.constant 0 : index
    %1 = vector.load %arg2[%c0_1, %c0_2] : memref<256x1024xbf16, #tpu.memory_space<vmem>>, vector<256x1024xbf16>
    %cst = arith.constant dense<0.000000e+00> : vector<32x1024xf32>
    %2 = tpu.matmul %0, %1, %cst {dimension_numbers = #tpu.dot_dimension_numbers<[1], [0], [0], [1], [0, 0, 1, 1], [], []>} : vector<32x256xbf16>, vector<256x1024xbf16>, vector<32x1024xf32> -> vector<32x1024xf32>
    %c0_3 = arith.constant 0 : index
    %c0_4 = arith.constant 0 : index
    %3 = vector.load %arg3[%c0_3, %c0_4] : memref<1x1024xf32, #tpu.memory_space<vmem>>, vector<1x1024xf32>
    %4 = vector.broadcast %3 : vector<1x1024xf32> to vector<32x1024xf32>
    %5 = arith.addf %2, %4 : vector<32x1024xf32>
    %c0_5 = arith.constant 0 : index
    %c0_6 = arith.constant 0 : index
    %6 = vector.load %arg4[%c0_5, %c0_6] : memref<32x1024xf32, #tpu.memory_space<vmem>>, vector<32x1024xf32>
    tpu.vector_store %arg4[%c0_5, %c0_6], %5 {strides = array<i32>} : memref<32x1024xf32, #tpu.memory_space<vmem>>, vector<32x1024xf32>,
    return
  }
  func.func @transform_0(%arg0: i32) -> (i32, i32) {
    %c0_i32 = arith.constant 0 : i32
    %c0_i32_0 = arith.constant 0 : i32
    %c0_i32_1 = arith.constant 0 : i32
    return %c0_i32, %c0_i32_0 : i32, i32
  }
  func.func @transform_1(%arg0: i32) -> (i32, i32) {
    %c0_i32 = arith.constant 0 : i32
    %c0_i32_0 = arith.constant 0 : i32
    %c0_i32_1 = arith.constant 0 : i32
    return %c0_i32, %c0_i32_0 : i32, i32
  }
  func.func @transform_2(%arg0: i32) -> (i32, i32) {
    %c0_i32 = arith.constant 0 : i32
    %c0_i32_0 = arith.constant 0 : i32
    %c0_i32_1 = arith.constant 0 : i32
    return %c0_i32, %c0_i32_0 : i32, i32
  }
  func.func @transform_3(%arg0: i32) -> (i32, i32) {
    %c0_i32 = arith.constant 0 : i32
    %c0_i32_0 = arith.constant 0 : i32
    %c0_i32_1 = arith.constant 0 : i32
    return %c0_i32, %c0_i32_0 : i32, i32
  }
}

module attributes {stable_mosaic.version = 11 : i64} {
  func.func @_bilstm_kernel(%arg0: i32, %arg1: memref<16x2x512xf32, #tpu.memory_space<vmem>>, %arg2: memref<1x128x512xbf16, #tpu.memory_space<vmem>>, %arg3: memref<16x2x128xf32, #tpu.memory_space<vmem>>, %arg4: memref<2x128xf32, #tpu.memory_space<vmem>>, %arg5: memref<2x128xf32, #tpu.memory_space<vmem>>) attributes {dimension_semantics = [#tpu.dimension_semantics<parallel>], iteration_bounds = array<i64: 2>, scalar_prefetch = 0 : i64, scratch_operands = 2 : i64, tpu.core_type = #tpu.core_type<tc>, window_params = [{transform_indices = @transform_0, window_bounds = array<i64: 16, 2, 512>}, {transform_indices = @transform_1, window_bounds = array<i64: 1, 128, 512>}, {transform_indices = @transform_2, window_bounds = array<i64: 16, 2, 128>}]} {
    %cst = arith.constant 0.000000e+00 : f32
    %0 = vector.broadcast %cst : f32 to vector<2x128xf32>
    %c0 = arith.constant 0 : index
    %c0_0 = arith.constant 0 : index
    %1 = vector.load %arg4[%c0, %c0_0] : memref<2x128xf32, #tpu.memory_space<vmem>>, vector<2x128xf32>
    tpu.vector_store %arg4[%c0, %c0_0], %0 {strides = array<i32>} : memref<2x128xf32, #tpu.memory_space<vmem>>, vector<2x128xf32>,
    %cst_1 = arith.constant 0.000000e+00 : f32
    %2 = vector.broadcast %cst_1 : f32 to vector<2x128xf32>
    %c0_2 = arith.constant 0 : index
    %c0_3 = arith.constant 0 : index
    %3 = vector.load %arg5[%c0_2, %c0_3] : memref<2x128xf32, #tpu.memory_space<vmem>>, vector<2x128xf32>
    tpu.vector_store %arg5[%c0_2, %c0_3], %2 {strides = array<i32>} : memref<2x128xf32, #tpu.memory_space<vmem>>, vector<2x128xf32>,
    %c0_4 = arith.constant 0 : index
    %c0_5 = arith.constant 0 : index
    %c0_6 = arith.constant 0 : index
    %4 = vector.load %arg2[%c0_4, %c0_5, %c0_6] : memref<1x128x512xbf16, #tpu.memory_space<vmem>>, vector<1x128x512xbf16>
    %5 = vector.shape_cast %4 : vector<1x128x512xbf16> to vector<128x512xbf16>
    %c0_i32 = arith.constant 0 : i32
    %c16_i32 = arith.constant 16 : i32
    %6 = arith.addi %c0_i32, %c16_i32 : i32
    %c1_i32 = arith.constant 1 : i32
    scf.for %arg6 = %c0_i32 to %6 step %c1_i32  : i32 {
      %c15_i32 = arith.constant 15 : i32
      %7 = arith.muli %arg0, %c15_i32 : i32
      %c2_i32 = arith.constant 2 : i32
      %8 = arith.muli %c2_i32, %arg0 : i32
      %c1_i32_8 = arith.constant 1 : i32
      %9 = arith.subi %c1_i32_8, %8 : i32
      %10 = arith.muli %9, %arg6 : i32
      %11 = arith.addi %7, %10 : i32
      %12 = arith.index_cast %11 : i32 to index
      %c0_9 = arith.constant 0 : index
      %c0_10 = arith.constant 0 : index
      %13 = vector.load %arg1[%12, %c0_9, %c0_10] : memref<16x2x512xf32, #tpu.memory_space<vmem>>, vector<1x2x512xf32>
      %14 = vector.shape_cast %13 : vector<1x2x512xf32> to vector<2x512xf32>
      %c0_11 = arith.constant 0 : index
      %c0_12 = arith.constant 0 : index
      %15 = vector.load %arg4[%c0_11, %c0_12] : memref<2x128xf32, #tpu.memory_space<vmem>>, vector<2x128xf32>
      %16 = arith.truncf %15 : vector<2x128xf32> to vector<2x128xbf16>
      %cst_13 = arith.constant dense<0.000000e+00> : vector<2x512xf32>
      %17 = tpu.matmul %16, %5, %cst_13 {dimension_numbers = #tpu.dot_dimension_numbers<[1], [0], [0], [1], [0, 0, 1, 1], [], []>} : vector<2x128xbf16>, vector<128x512xbf16>, vector<2x512xf32> -> vector<2x512xf32>
      %18 = arith.addf %14, %17 : vector<2x512xf32>
      %19 = vector.extract_strided_slice %18 {offsets = [0, 0], sizes = [2, 128], strides = [1, 1]} : vector<2x512xf32> to vector<2x128xf32>
      %20 = arith.negf %19 : vector<2x128xf32>
      %21 = math.exp %20 : vector<2x128xf32>
      %cst_14 = arith.constant 1.000000e+00 : f32
      %22 = vector.broadcast %cst_14 : f32 to vector<2x128xf32>
      %23 = arith.addf %22, %21 : vector<2x128xf32>
      %24 = arith.divf %22, %23 : vector<2x128xf32>
      %25 = vector.extract_strided_slice %18 {offsets = [0, 128], sizes = [2, 128], strides = [1, 1]} : vector<2x512xf32> to vector<2x128xf32>
      %26 = arith.negf %25 : vector<2x128xf32>
      %27 = math.exp %26 : vector<2x128xf32>
      %cst_15 = arith.constant 1.000000e+00 : f32
      %28 = vector.broadcast %cst_15 : f32 to vector<2x128xf32>
      %29 = arith.addf %28, %27 : vector<2x128xf32>
      %30 = arith.divf %28, %29 : vector<2x128xf32>
      %31 = vector.extract_strided_slice %18 {offsets = [0, 256], sizes = [2, 128], strides = [1, 1]} : vector<2x512xf32> to vector<2x128xf32>
      %32 = math.tanh %31 : vector<2x128xf32>
      %33 = vector.extract_strided_slice %18 {offsets = [0, 384], sizes = [2, 128], strides = [1, 1]} : vector<2x512xf32> to vector<2x128xf32>
      %34 = arith.negf %33 : vector<2x128xf32>
      %35 = math.exp %34 : vector<2x128xf32>
      %cst_16 = arith.constant 1.000000e+00 : f32
      %36 = vector.broadcast %cst_16 : f32 to vector<2x128xf32>
      %37 = arith.addf %36, %35 : vector<2x128xf32>
      %38 = arith.divf %36, %37 : vector<2x128xf32>
      %c0_17 = arith.constant 0 : index
      %c0_18 = arith.constant 0 : index
      %39 = vector.load %arg5[%c0_17, %c0_18] : memref<2x128xf32, #tpu.memory_space<vmem>>, vector<2x128xf32>
      %40 = arith.mulf %30, %39 : vector<2x128xf32>
      %41 = arith.mulf %24, %32 : vector<2x128xf32>
      %42 = arith.addf %40, %41 : vector<2x128xf32>
      %43 = math.tanh %42 : vector<2x128xf32>
      %44 = arith.mulf %38, %43 : vector<2x128xf32>
      %c0_19 = arith.constant 0 : index
      %c0_20 = arith.constant 0 : index
      %45 = vector.load %arg5[%c0_19, %c0_20] : memref<2x128xf32, #tpu.memory_space<vmem>>, vector<2x128xf32>
      tpu.vector_store %arg5[%c0_19, %c0_20], %42 {strides = array<i32>} : memref<2x128xf32, #tpu.memory_space<vmem>>, vector<2x128xf32>,
      %c0_21 = arith.constant 0 : index
      %c0_22 = arith.constant 0 : index
      %46 = vector.load %arg4[%c0_21, %c0_22] : memref<2x128xf32, #tpu.memory_space<vmem>>, vector<2x128xf32>
      tpu.vector_store %arg4[%c0_21, %c0_22], %44 {strides = array<i32>} : memref<2x128xf32, #tpu.memory_space<vmem>>, vector<2x128xf32>,
      %47 = arith.index_cast %11 : i32 to index
      %c0_23 = arith.constant 0 : index
      %c0_24 = arith.constant 0 : index
      %48 = vector.load %arg3[%47, %c0_23, %c0_24] : memref<16x2x128xf32, #tpu.memory_space<vmem>>, vector<1x2x128xf32>
      %49 = vector.shape_cast %48 : vector<1x2x128xf32> to vector<2x128xf32>
      %50 = vector.shape_cast %44 : vector<2x128xf32> to vector<1x2x128xf32>
      tpu.vector_store %arg3[%47, %c0_23, %c0_24], %50 {strides = array<i32>} : memref<16x2x128xf32, #tpu.memory_space<vmem>>, vector<1x2x128xf32>,
    }
    %c16_i32_7 = arith.constant 16 : i32
    return
  }
  func.func @transform_0(%arg0: i32) -> (i32, i32, i32) {
    %c0_i32 = arith.constant 0 : i32
    %c0_i32_0 = arith.constant 0 : i32
    %c0_i32_1 = arith.constant 0 : i32
    return %c0_i32, %c0_i32_0, %arg0 : i32, i32, i32
  }
  func.func @transform_1(%arg0: i32) -> (i32, i32, i32) {
    %c0_i32 = arith.constant 0 : i32
    %c0_i32_0 = arith.constant 0 : i32
    %c0_i32_1 = arith.constant 0 : i32
    return %arg0, %c0_i32, %c0_i32_0 : i32, i32, i32
  }
  func.func @transform_2(%arg0: i32) -> (i32, i32, i32) {
    %c0_i32 = arith.constant 0 : i32
    %c0_i32_0 = arith.constant 0 : i32
    %c0_i32_1 = arith.constant 0 : i32
    return %c0_i32, %c0_i32_0, %arg0 : i32, i32, i32
  }
}

module attributes {stable_mosaic.version = 11 : i64} {
  func.func @_linear_kernel(%arg0: i32, %arg1: memref<32x256xbf16, #tpu.memory_space<vmem>>, %arg2: memref<256x1024xbf16, #tpu.memory_space<vmem>>, %arg3: memref<1x1024xf32, #tpu.memory_space<vmem>>, %arg4: memref<32x1024xf32, #tpu.memory_space<vmem>>) attributes {dimension_semantics = [#tpu.dimension_semantics<arbitrary>], iteration_bounds = array<i64: 1>, scalar_prefetch = 0 : i64, scratch_operands = 0 : i64, tpu.core_type = #tpu.core_type<tc>, window_params = [{pipeline_mode = #tpu.pipeline_mode<synchronous>, transform_indices = @transform_0, window_bounds = array<i64: 32, 256>}, {pipeline_mode = #tpu.pipeline_mode<synchronous>, transform_indices = @transform_1, window_bounds = array<i64: 256, 1024>}, {pipeline_mode = #tpu.pipeline_mode<synchronous>, transform_indices = @transform_2, window_bounds = array<i64: 1, 1024>}, {pipeline_mode = #tpu.pipeline_mode<synchronous>, transform_indices = @transform_3, window_bounds = array<i64: 32, 1024>}]} {
    %c0 = arith.constant 0 : index
    %c0_0 = arith.constant 0 : index
    %0 = vector.load %arg1[%c0, %c0_0] : memref<32x256xbf16, #tpu.memory_space<vmem>>, vector<32x256xbf16>
    %c0_1 = arith.constant 0 : index
    %c0_2 = arith.constant 0 : index
    %1 = vector.load %arg2[%c0_1, %c0_2] : memref<256x1024xbf16, #tpu.memory_space<vmem>>, vector<256x1024xbf16>
    %cst = arith.constant dense<0.000000e+00> : vector<32x1024xf32>
    %2 = tpu.matmul %0, %1, %cst {dimension_numbers = #tpu.dot_dimension_numbers<[1], [0], [0], [1], [0, 0, 1, 1], [], []>} : vector<32x256xbf16>, vector<256x1024xbf16>, vector<32x1024xf32> -> vector<32x1024xf32>
    %c0_3 = arith.constant 0 : index
    %c0_4 = arith.constant 0 : index
    %3 = vector.load %arg3[%c0_3, %c0_4] : memref<1x1024xf32, #tpu.memory_space<vmem>>, vector<1x1024xf32>
    %4 = vector.broadcast %3 : vector<1x1024xf32> to vector<32x1024xf32>
    %5 = arith.addf %2, %4 : vector<32x1024xf32>
    %c0_5 = arith.constant 0 : index
    %c0_6 = arith.constant 0 : index
    %6 = vector.load %arg4[%c0_5, %c0_6] : memref<32x1024xf32, #tpu.memory_space<vmem>>, vector<32x1024xf32>
    tpu.vector_store %arg4[%c0_5, %c0_6], %5 {strides = array<i32>} : memref<32x1024xf32, #tpu.memory_space<vmem>>, vector<32x1024xf32>,
    return
  }
  func.func @transform_0(%arg0: i32) -> (i32, i32) {
    %c0_i32 = arith.constant 0 : i32
    %c0_i32_0 = arith.constant 0 : i32
    %c0_i32_1 = arith.constant 0 : i32
    return %c0_i32, %c0_i32_0 : i32, i32
  }
  func.func @transform_1(%arg0: i32) -> (i32, i32) {
    %c0_i32 = arith.constant 0 : i32
    %c0_i32_0 = arith.constant 0 : i32
    %c0_i32_1 = arith.constant 0 : i32
    return %c0_i32, %c0_i32_0 : i32, i32
  }
  func.func @transform_2(%arg0: i32) -> (i32, i32) {
    %c0_i32 = arith.constant 0 : i32
    %c0_i32_0 = arith.constant 0 : i32
    %c0_i32_1 = arith.constant 0 : i32
    return %c0_i32, %c0_i32_0 : i32, i32
  }
  func.func @transform_3(%arg0: i32) -> (i32, i32) {
    %c0_i32 = arith.constant 0 : i32
    %c0_i32_0 = arith.constant 0 : i32
    %c0_i32_1 = arith.constant 0 : i32
    return %c0_i32, %c0_i32_0 : i32, i32
  }
}

module attributes {stable_mosaic.version = 11 : i64} {
  func.func @_linear_kernel(%arg0: i32, %arg1: memref<32x256xbf16, #tpu.memory_space<vmem>>, %arg2: memref<256x128xbf16, #tpu.memory_space<vmem>>, %arg3: memref<1x128xf32, #tpu.memory_space<vmem>>, %arg4: memref<32x128xf32, #tpu.memory_space<vmem>>) attributes {dimension_semantics = [#tpu.dimension_semantics<arbitrary>], iteration_bounds = array<i64: 1>, scalar_prefetch = 0 : i64, scratch_operands = 0 : i64, tpu.core_type = #tpu.core_type<tc>, window_params = [{pipeline_mode = #tpu.pipeline_mode<synchronous>, transform_indices = @transform_0, window_bounds = array<i64: 32, 256>}, {pipeline_mode = #tpu.pipeline_mode<synchronous>, transform_indices = @transform_1, window_bounds = array<i64: 256, 128>}, {pipeline_mode = #tpu.pipeline_mode<synchronous>, transform_indices = @transform_2, window_bounds = array<i64: 1, 128>}, {pipeline_mode = #tpu.pipeline_mode<synchronous>, transform_indices = @transform_3, window_bounds = array<i64: 32, 128>}]} {
    %c0 = arith.constant 0 : index
    %c0_0 = arith.constant 0 : index
    %0 = vector.load %arg1[%c0, %c0_0] : memref<32x256xbf16, #tpu.memory_space<vmem>>, vector<32x256xbf16>
    %c0_1 = arith.constant 0 : index
    %c0_2 = arith.constant 0 : index
    %1 = vector.load %arg2[%c0_1, %c0_2] : memref<256x128xbf16, #tpu.memory_space<vmem>>, vector<256x128xbf16>
    %cst = arith.constant dense<0.000000e+00> : vector<32x128xf32>
    %2 = tpu.matmul %0, %1, %cst {dimension_numbers = #tpu.dot_dimension_numbers<[1], [0], [0], [1], [0, 0, 1, 1], [], []>} : vector<32x256xbf16>, vector<256x128xbf16>, vector<32x128xf32> -> vector<32x128xf32>
    %c0_3 = arith.constant 0 : index
    %c0_4 = arith.constant 0 : index
    %3 = vector.load %arg3[%c0_3, %c0_4] : memref<1x128xf32, #tpu.memory_space<vmem>>, vector<1x128xf32>
    %4 = vector.broadcast %3 : vector<1x128xf32> to vector<32x128xf32>
    %5 = arith.addf %2, %4 : vector<32x128xf32>
    %c0_5 = arith.constant 0 : index
    %c0_6 = arith.constant 0 : index
    %6 = vector.load %arg4[%c0_5, %c0_6] : memref<32x128xf32, #tpu.memory_space<vmem>>, vector<32x128xf32>
    tpu.vector_store %arg4[%c0_5, %c0_6], %5 {strides = array<i32>} : memref<32x128xf32, #tpu.memory_space<vmem>>, vector<32x128xf32>,
    return
  }
  func.func @transform_0(%arg0: i32) -> (i32, i32) {
    %c0_i32 = arith.constant 0 : i32
    %c0_i32_0 = arith.constant 0 : i32
    %c0_i32_1 = arith.constant 0 : i32
    return %c0_i32, %c0_i32_0 : i32, i32
  }
  func.func @transform_1(%arg0: i32) -> (i32, i32) {
    %c0_i32 = arith.constant 0 : i32
    %c0_i32_0 = arith.constant 0 : i32
    %c0_i32_1 = arith.constant 0 : i32
    return %c0_i32, %c0_i32_0 : i32, i32
  }
  func.func @transform_2(%arg0: i32) -> (i32, i32) {
    %c0_i32 = arith.constant 0 : i32
    %c0_i32_0 = arith.constant 0 : i32
    %c0_i32_1 = arith.constant 0 : i32
    return %c0_i32, %c0_i32_0 : i32, i32
  }
  func.func @transform_3(%arg0: i32) -> (i32, i32) {
    %c0_i32 = arith.constant 0 : i32
    %c0_i32_0 = arith.constant 0 : i32
    %c0_i32_1 = arith.constant 0 : i32
    return %c0_i32, %c0_i32_0 : i32, i32
  }
}

module attributes {stable_mosaic.version = 11 : i64} {
  func.func @_linear_kernel(%arg0: i32, %arg1: memref<4x256xbf16, #tpu.memory_space<vmem>>, %arg2: memref<256x512xbf16, #tpu.memory_space<vmem>>, %arg3: memref<1x512xf32, #tpu.memory_space<vmem>>, %arg4: memref<4x512xf32, #tpu.memory_space<vmem>>) attributes {dimension_semantics = [#tpu.dimension_semantics<arbitrary>], iteration_bounds = array<i64: 1>, scalar_prefetch = 0 : i64, scratch_operands = 0 : i64, tpu.core_type = #tpu.core_type<tc>, window_params = [{pipeline_mode = #tpu.pipeline_mode<synchronous>, transform_indices = @transform_0, window_bounds = array<i64: 4, 256>}, {pipeline_mode = #tpu.pipeline_mode<synchronous>, transform_indices = @transform_1, window_bounds = array<i64: 256, 512>}, {pipeline_mode = #tpu.pipeline_mode<synchronous>, transform_indices = @transform_2, window_bounds = array<i64: 1, 512>}, {pipeline_mode = #tpu.pipeline_mode<synchronous>, transform_indices = @transform_3, window_bounds = array<i64: 4, 512>}]} {
    %c0 = arith.constant 0 : index
    %c0_0 = arith.constant 0 : index
    %0 = vector.load %arg1[%c0, %c0_0] : memref<4x256xbf16, #tpu.memory_space<vmem>>, vector<4x256xbf16>
    %c0_1 = arith.constant 0 : index
    %c0_2 = arith.constant 0 : index
    %1 = vector.load %arg2[%c0_1, %c0_2] : memref<256x512xbf16, #tpu.memory_space<vmem>>, vector<256x512xbf16>
    %cst = arith.constant dense<0.000000e+00> : vector<4x512xf32>
    %2 = tpu.matmul %0, %1, %cst {dimension_numbers = #tpu.dot_dimension_numbers<[1], [0], [0], [1], [0, 0, 1, 1], [], []>} : vector<4x256xbf16>, vector<256x512xbf16>, vector<4x512xf32> -> vector<4x512xf32>
    %c0_3 = arith.constant 0 : index
    %c0_4 = arith.constant 0 : index
    %3 = vector.load %arg3[%c0_3, %c0_4] : memref<1x512xf32, #tpu.memory_space<vmem>>, vector<1x512xf32>
    %4 = vector.broadcast %3 : vector<1x512xf32> to vector<4x512xf32>
    %5 = arith.addf %2, %4 : vector<4x512xf32>
    %c0_5 = arith.constant 0 : index
    %c0_6 = arith.constant 0 : index
    %6 = vector.load %arg4[%c0_5, %c0_6] : memref<4x512xf32, #tpu.memory_space<vmem>>, vector<4x512xf32>
    tpu.vector_store %arg4[%c0_5, %c0_6], %5 {strides = array<i32>} : memref<4x512xf32, #tpu.memory_space<vmem>>, vector<4x512xf32>,
    return
  }
  func.func @transform_0(%arg0: i32) -> (i32, i32) {
    %c0_i32 = arith.constant 0 : i32
    %c0_i32_0 = arith.constant 0 : i32
    %c0_i32_1 = arith.constant 0 : i32
    return %c0_i32, %c0_i32_0 : i32, i32
  }
  func.func @transform_1(%arg0: i32) -> (i32, i32) {
    %c0_i32 = arith.constant 0 : i32
    %c0_i32_0 = arith.constant 0 : i32
    %c0_i32_1 = arith.constant 0 : i32
    return %c0_i32, %c0_i32_0 : i32, i32
  }
  func.func @transform_2(%arg0: i32) -> (i32, i32) {
    %c0_i32 = arith.constant 0 : i32
    %c0_i32_0 = arith.constant 0 : i32
    %c0_i32_1 = arith.constant 0 : i32
    return %c0_i32, %c0_i32_0 : i32, i32
  }
  func.func @transform_3(%arg0: i32) -> (i32, i32) {
    %c0_i32 = arith.constant 0 : i32
    %c0_i32_0 = arith.constant 0 : i32
    %c0_i32_1 = arith.constant 0 : i32
    return %c0_i32, %c0_i32_0 : i32, i32
  }
}

module attributes {stable_mosaic.version = 11 : i64} {
  func.func @_cln_ddi_kernel(%arg0: i32, %arg1: memref<1x16x256xf32, #tpu.memory_space<vmem>>, %arg2: memref<1x2x256xf32, #tpu.memory_space<vmem>>, %arg3: memref<1x2x256xf32, #tpu.memory_space<vmem>>, %arg4: memref<256x128xbf16, #tpu.memory_space<vmem>>, %arg5: memref<1x128xf32, #tpu.memory_space<vmem>>, %arg6: memref<1x2x16x128xf32, #tpu.memory_space<vmem>>) attributes {dimension_semantics = [#tpu.dimension_semantics<parallel>], iteration_bounds = array<i64: 2>, scalar_prefetch = 0 : i64, scratch_operands = 0 : i64, tpu.core_type = #tpu.core_type<tc>, window_params = [{transform_indices = @transform_0, window_bounds = array<i64: 1, 16, 256>}, {transform_indices = @transform_1, window_bounds = array<i64: 1, 2, 256>}, {transform_indices = @transform_2, window_bounds = array<i64: 1, 2, 256>}, {pipeline_mode = #tpu.pipeline_mode<synchronous>, transform_indices = @transform_3, window_bounds = array<i64: 256, 128>}, {pipeline_mode = #tpu.pipeline_mode<synchronous>, transform_indices = @transform_4, window_bounds = array<i64: 1, 128>}, {transform_indices = @transform_5, window_bounds = array<i64: 1, 2, 16, 128>}]} {
    %c0 = arith.constant 0 : index
    %c0_0 = arith.constant 0 : index
    %c0_1 = arith.constant 0 : index
    %0 = vector.load %arg1[%c0, %c0_0, %c0_1] : memref<1x16x256xf32, #tpu.memory_space<vmem>>, vector<1x16x256xf32>
    %1 = vector.shape_cast %0 : vector<1x16x256xf32> to vector<16x256xf32>
    %cst = arith.constant dense<0.000000e+00> : vector<16xf32>
    %2 = vector.multi_reduction <add>, %1, %cst [1] : vector<16x256xf32> to vector<16xf32>
    %3 = vector.shape_cast %2 : vector<16xf32> to vector<16x1xf32>
    %cst_2 = arith.constant 3.906250e-03 : f32
    %4 = vector.broadcast %cst_2 : f32 to vector<16x1xf32>
    %5 = arith.mulf %3, %4 : vector<16x1xf32>
    %6 = vector.broadcast %5 : vector<16x1xf32> to vector<16x256xf32>
    %7 = arith.subf %1, %6 : vector<16x256xf32>
    %8 = arith.mulf %7, %7 : vector<16x256xf32>
    %cst_3 = arith.constant dense<0.000000e+00> : vector<16xf32>
    %9 = vector.multi_reduction <add>, %8, %cst_3 [1] : vector<16x256xf32> to vector<16xf32>
    %10 = vector.shape_cast %9 : vector<16xf32> to vector<16x1xf32>
    %cst_4 = arith.constant 3.906250e-03 : f32
    %11 = vector.broadcast %cst_4 : f32 to vector<16x1xf32>
    %12 = arith.mulf %10, %11 : vector<16x1xf32>
    %cst_5 = arith.constant 9.99999996E-13 : f32
    %13 = vector.broadcast %cst_5 : f32 to vector<16x1xf32>
    %14 = arith.addf %12, %13 : vector<16x1xf32>
    %15 = math.rsqrt %14 : vector<16x1xf32>
    %16 = vector.broadcast %15 : vector<16x1xf32> to vector<16x256xf32>
    %17 = arith.mulf %7, %16 : vector<16x256xf32>
    %c0_6 = arith.constant 0 : index
    %c0_7 = arith.constant 0 : index
    %c0_8 = arith.constant 0 : index
    %18 = vector.load %arg2[%c0_6, %c0_7, %c0_8] : memref<1x2x256xf32, #tpu.memory_space<vmem>>, vector<1x2x256xf32>
    %19 = vector.shape_cast %18 : vector<1x2x256xf32> to vector<2x256xf32>
    %c0_9 = arith.constant 0 : index
    %c0_10 = arith.constant 0 : index
    %c0_11 = arith.constant 0 : index
    %20 = vector.load %arg3[%c0_9, %c0_10, %c0_11] : memref<1x2x256xf32, #tpu.memory_space<vmem>>, vector<1x2x256xf32>
    %21 = vector.shape_cast %20 : vector<1x2x256xf32> to vector<2x256xf32>
    %22 = vector.shape_cast %17 : vector<16x256xf32> to vector<1x16x256xf32>
    %23 = vector.shape_cast %21 : vector<2x256xf32> to vector<2x1x256xf32>
    %24 = vector.broadcast %22 : vector<1x16x256xf32> to vector<2x16x256xf32>
    %25 = vector.broadcast %23 : vector<2x1x256xf32> to vector<2x16x256xf32>
    %26 = arith.mulf %24, %25 : vector<2x16x256xf32>
    %27 = vector.shape_cast %19 : vector<2x256xf32> to vector<2x1x256xf32>
    %28 = vector.broadcast %27 : vector<2x1x256xf32> to vector<2x16x256xf32>
    %29 = arith.addf %26, %28 : vector<2x16x256xf32>
    %30 = vector.shape_cast %29 : vector<2x16x256xf32> to vector<32x256xf32>
    %31 = arith.truncf %30 : vector<32x256xf32> to vector<32x256xbf16>
    %c0_12 = arith.constant 0 : index
    %c0_13 = arith.constant 0 : index
    %32 = vector.load %arg4[%c0_12, %c0_13] : memref<256x128xbf16, #tpu.memory_space<vmem>>, vector<256x128xbf16>
    %cst_14 = arith.constant dense<0.000000e+00> : vector<32x128xf32>
    %33 = tpu.matmul %31, %32, %cst_14 {dimension_numbers = #tpu.dot_dimension_numbers<[1], [0], [0], [1], [0, 0, 1, 1], [], []>} : vector<32x256xbf16>, vector<256x128xbf16>, vector<32x128xf32> -> vector<32x128xf32>
    %c0_15 = arith.constant 0 : index
    %c0_16 = arith.constant 0 : index
    %34 = vector.load %arg5[%c0_15, %c0_16] : memref<1x128xf32, #tpu.memory_space<vmem>>, vector<1x128xf32>
    %35 = vector.broadcast %34 : vector<1x128xf32> to vector<32x128xf32>
    %36 = arith.addf %33, %35 : vector<32x128xf32>
    %37 = vector.shape_cast %36 : vector<32x128xf32> to vector<2x16x128xf32>
    %c0_17 = arith.constant 0 : index
    %c0_18 = arith.constant 0 : index
    %c0_19 = arith.constant 0 : index
    %c0_20 = arith.constant 0 : index
    %38 = vector.load %arg6[%c0_17, %c0_18, %c0_19, %c0_20] : memref<1x2x16x128xf32, #tpu.memory_space<vmem>>, vector<1x2x16x128xf32>
    %39 = vector.shape_cast %38 : vector<1x2x16x128xf32> to vector<2x16x128xf32>
    %40 = vector.shape_cast %37 : vector<2x16x128xf32> to vector<1x2x16x128xf32>
    tpu.vector_store %arg6[%c0_17, %c0_18, %c0_19, %c0_20], %40 {strides = array<i32>} : memref<1x2x16x128xf32, #tpu.memory_space<vmem>>, vector<1x2x16x128xf32>,
    return
  }
  func.func @transform_0(%arg0: i32) -> (i32, i32, i32) {
    %c0_i32 = arith.constant 0 : i32
    %c0_i32_0 = arith.constant 0 : i32
    %c0_i32_1 = arith.constant 0 : i32
    return %arg0, %c0_i32, %c0_i32_0 : i32, i32, i32
  }
  func.func @transform_1(%arg0: i32) -> (i32, i32, i32) {
    %c0_i32 = arith.constant 0 : i32
    %c0_i32_0 = arith.constant 0 : i32
    %c0_i32_1 = arith.constant 0 : i32
    return %arg0, %c0_i32, %c0_i32_0 : i32, i32, i32
  }
  func.func @transform_2(%arg0: i32) -> (i32, i32, i32) {
    %c0_i32 = arith.constant 0 : i32
    %c0_i32_0 = arith.constant 0 : i32
    %c0_i32_1 = arith.constant 0 : i32
    return %arg0, %c0_i32, %c0_i32_0 : i32, i32, i32
  }
  func.func @transform_3(%arg0: i32) -> (i32, i32) {
    %c0_i32 = arith.constant 0 : i32
    %c0_i32_0 = arith.constant 0 : i32
    %c0_i32_1 = arith.constant 0 : i32
    return %c0_i32, %c0_i32_0 : i32, i32
  }
  func.func @transform_4(%arg0: i32) -> (i32, i32) {
    %c0_i32 = arith.constant 0 : i32
    %c0_i32_0 = arith.constant 0 : i32
    %c0_i32_1 = arith.constant 0 : i32
    return %c0_i32, %c0_i32_0 : i32, i32
  }
  func.func @transform_5(%arg0: i32) -> (i32, i32, i32, i32) {
    %c0_i32 = arith.constant 0 : i32
    %c0_i32_0 = arith.constant 0 : i32
    %c0_i32_1 = arith.constant 0 : i32
    %c0_i32_2 = arith.constant 0 : i32
    return %arg0, %c0_i32, %c0_i32_0, %c0_i32_1 : i32, i32, i32, i32
  }
}

</mosaic_0001>

<llo_original>
// kernel: net_forward.8
$region0: #{net_forward.8}
  #allocation0 [shape = 'u32[]', space=smem, size = 0x4, offset = 0x4, fixed_abs, tag = 'smem constant byte address 0x4 - core index']
  #allocation1 [shape = 'u32[144,128]{1,0:T(1,128)}', space=vmem, size = 0x12000, scoped, tag = 'internal scratch']
  #allocation2 [shape = 'f32[2,128]{1,0:T(2,128)}', space=vmem, size = 0x400, scoped, tag = 'scratch operand']
  #allocation3 [shape = 'f32[2,128]{1,0:T(2,128)}', space=vmem, size = 0x400, scoped, tag = 'scratch operand']
  %s0 = inlined_call_operand.vmem [shape: f32[16,2,1024], index: 0, kind: input, shape index: {}]
  %s1 = inlined_call_operand.vmem [shape: bf16[2,128,512], index: 1, kind: input, shape index: {}]
  %s2 = inlined_call_operand.vmem [shape: f32[16,2,256], index: 2, kind: output, shape index: {}]
  %s3 = sld [smem:[#allocation0]]
  $region123: #{net_forward.8} parent=0
    _
  %s5 = ssub.s32 1, %s3
  %s6 = scalar_select 0, %s5, %s3
  $region1: #{net_forward.8} parent=0
    #allocation4 [shape = 'u8[131072]{0}', space=vmem, size = 0x20000, scoped, tag = 'input window, operand 0']
    #allocation5 [shape = 'u8[32768]{0}', space=vmem, size = 0x8000, scoped, tag = 'output window, operand 0']
    loop: start=0, step=1, limit=4
    $region2: #{net_forward.8} parent=1 // loop_pre_header
      _
    $region3: #{net_forward.8} parent=1 // loop_header
      %s8 = sphi 0, %s12
      %p9 = scmp.ge.s32.totalorder %s8, 4
      %s18 = sphi 0, %s20
      %s21 = sphi 0, %s18
      %s22 = sphi 0, %s21
      %s38 = sphi 0, %s22
      %s44 = sphi 0, %s46
      %s47 = sphi 0, %s44
      %s48 = sphi 0, %s47
      %s64 = sphi 0, %s48
      %s70 = sphi 0, %s72
      %s73 = sphi 0, %s70
      %s74 = sphi 0, %s73
      %s90 = sphi 0, %s74
    $region4: #{net_forward.8} parent=1 // loop_header_branch
      %11 = sbr.rel (%p9) target = $region8
    $region5: #{net_forward.8} parent=1 // loop_body
      %s13 = ssub.s32 %s8, 1
      %s14 = ssub.s32 %s8, 2
      %s15 = sadd.s32 %s8, 1
      %s16 = ssub.s32 %s8, %s15
      %p17 = scmp.eq.s32.totalorder %s16, 0
      %s19 = sadd.s32 %s18, 1
      %s20 = scalar_select %p17, %s18, %s19
      %p23 = pneg %p17
      %p24 = scmp.eq.s32.totalorder %s8, 1
      %p25 = por %p23, %p24
      %p26 = scmp.ne.s32.totalorder %s18, %s21
      %p27 = scmp.eq.s32.totalorder %s8, 0
      %p28 = por %p26, %p27
      %p29 = scmp.ne.s32.totalorder %s18, %s21
      %p30 = scmp.eq.s32.totalorder %s13, 1
      %p31 = por %p29, %p30
      %p32 = scmp.ne.s32.totalorder %s21, %s22
      %p33 = scmp.eq.s32.totalorder %s13, 0
      %p34 = por %p32, %p33
      %p35 = scmp.ne.s32.totalorder %s21, %s22
      %p36 = scmp.eq.s32.totalorder %s14, 1
      %p37 = por %p35, %p36
      %p39 = scmp.ne.s32.totalorder %s22, %s38
      %p40 = scmp.eq.s32.totalorder %s14, 0
      %p41 = por %p39, %p40
      %s42 = ssub.s32 %s8, %s15
      %p43 = scmp.eq.s32.totalorder %s42, 0
      %s45 = sadd.s32 %s44, 1
      %s46 = scalar_select %p43, %s44, %s45
      %p49 = pneg %p43
      %p50 = scmp.eq.s32.totalorder %s8, 1
      %p51 = por %p49, %p50
      %p52 = scmp.ne.s32.totalorder %s44, %s47
      %p53 = scmp.eq.s32.totalorder %s8, 0
      %p54 = por %p52, %p53
      %p55 = scmp.ne.s32.totalorder %s44, %s47
      %p56 = scmp.eq.s32.totalorder %s13, 1
      %p57 = por %p55, %p56
      %p58 = scmp.ne.s32.totalorder %s47, %s48
      %p59 = scmp.eq.s32.totalorder %s13, 0
      %p60 = por %p58, %p59
      %p61 = scmp.ne.s32.totalorder %s47, %s48
      %p62 = scmp.eq.s32.totalorder %s14, 1
      %p63 = por %p61, %p62
      %p65 = scmp.ne.s32.totalorder %s48, %s64
      %p66 = scmp.eq.s32.totalorder %s14, 0
      %p67 = por %p65, %p66
      %s68 = ssub.s32 %s8, %s15
      %p69 = scmp.eq.s32.totalorder %s68, 0
      %s71 = sadd.s32 %s70, 1
      %s72 = scalar_select %p69, %s70, %s71
      %p75 = pneg %p69
      %p76 = scmp.eq.s32.totalorder %s8, 1
      %p77 = por %p75, %p76
      %p78 = scmp.ne.s32.totalorder %s70, %s73
      %p79 = scmp.eq.s32.totalorder %s8, 0
      %p80 = por %p78, %p79
      %p81 = scmp.ne.s32.totalorder %s70, %s73
      %p82 = scmp.eq.s32.totalorder %s13, 1
      %p83 = por %p81, %p82
      %p84 = scmp.ne.s32.totalorder %s73, %s74
      %p85 = scmp.eq.s32.totalorder %s13, 0
      %p86 = por %p84, %p85
      %p87 = scmp.ne.s32.totalorder %s73, %s74
      %p88 = scmp.eq.s32.totalorder %s14, 1
      %p89 = por %p87, %p88
      %p91 = scmp.ne.s32.totalorder %s74, %s90
      %p92 = scmp.eq.s32.totalorder %s14, 0
      %p93 = por %p91, %p92
      %p94 = scmp.le.s32.totalorder 1, %s8
      %p95 = scmp.lt.s32.totalorder %s8, 3
      %p96 = pnand %p94, %p95
      %p97 = pneg %p96
      // Predicated region
      $region9: #{net_forward.8} parent=5 // pred_check
        _
      $region10: #{net_forward.8} parent=5 // pred_check_branch
        %99 = sbr.rel (%p96) target = $region12
      $region11: #{net_forward.8} parent=5 // pred_region
        %s100 = ssub.s32 %s8, 1
      $region12: #{net_forward.8} parent=5 // pred_fallthru
        _
      %p101 = scmp.lt.s32.totalorder %s8, 2
      // Predicated region
      $region13: #{net_forward.8} parent=5 // pred_check
        %p102 = pneg %p101
      $region14: #{net_forward.8} parent=5 // pred_check_branch
        %104 = sbr.rel (%p102) target = $region16
      $region15: #{net_forward.8} parent=5 // pred_region
        // Predicated region
        $region17: #{net_forward.8} parent=15 // pred_check
          %p105 = pneg %p28
        $region18: #{net_forward.8} parent=15 // pred_check_branch
          %107 = sbr.rel (%p105) target = $region20
        $region19: #{net_forward.8} parent=15 // pred_region
          %s108 = sand.u32 %s18, 1
          %s109 = sand.u32 %s18, 1
          %s110 = smul.addr %s109, 128
          %s111 = scalar_lea.vmem [#allocation4], %s110
          %s112 = smul.u32 4, %s8
          %s113 = smul.addr %s112, 2
          %s114 = scalar_lea.vmem %s0, %s113
          // Predicated region
          $region21: #{net_forward.8} parent=19 // pred_check
            _
          $region22: #{net_forward.8} parent=19 // pred_check_branch
            %116 = sbr.rel (0) target = $region24
          $region23: #{net_forward.8} parent=19 // pred_region
            // Predicated region
            $region25: #{net_forward.8} parent=23 // pred_check
              _
            $region26: #{net_forward.8} parent=23 // pred_check_branch
              %118 = sbr.rel (0) target = $region28
            $region27: #{net_forward.8} parent=23 // pred_region
              // Predicated region
              $region40: #{net_forward.8} parent=27 // pred_check
                _
              $region41: #{net_forward.8} parent=27 // pred_check_branch
                %163 = sbr.rel (0) target = $region43
              $region42: #{net_forward.8} parent=27 // pred_region
                loop: start=0, step=1, limit=1
                $region44: #{net_forward.8} parent=42 // loop_pre_header
                  _
                $region45: #{net_forward.8} parent=42 // loop_header
                  %s165 = sphi 0, %s169
                  %p166 = scmp.ge.s32.totalorder %s165, 1
                  %s170 = sphi %s114, %s114
                  %s171 = sphi %s111, %s111
                $region46: #{net_forward.8} parent=42 // loop_header_branch
                  %168 = sbr.rel (%p166) target = $region50
                $region47: #{net_forward.8} parent=42 // loop_body
                  %v172 = vld [vmem:[%s170] sm:$0xff]
                  %173 = vst [vmem:[%s171] sm:$0xff] %v172
                  %v174 = vld [vmem:[%s170 + $0x10] sm:$0xff]
                  %175 = vst [vmem:[%s171 + $0x8] sm:$0xff] %v174
                  %v176 = vld [vmem:[%s170 + $0x20] sm:$0xff]
                  %177 = vst [vmem:[%s171 + $0x10] sm:$0xff] %v176
                  %v178 = vld [vmem:[%s170 + $0x30] sm:$0xff]
                  %179 = vst [vmem:[%s171 + $0x18] sm:$0xff] %v178
                  %v180 = vld [vmem:[%s170 + $0x40] sm:$0xff]
                  %181 = vst [vmem:[%s171 + $0x20] sm:$0xff] %v180
                  %v182 = vld [vmem:[%s170 + $0x50] sm:$0xff]
                  %183 = vst [vmem:[%s171 + $0x28] sm:$0xff] %v182
                  %v184 = vld [vmem:[%s170 + $0x60] sm:$0xff]
                  %185 = vst [vmem:[%s171 + $0x30] sm:$0xff] %v184
                  %v186 = vld [vmem:[%s170 + $0x70] sm:$0xff]
                  %187 = vst [vmem:[%s171 + $0x38] sm:$0xff] %v186
                  %v188 = vld [vmem:[%s170 + $0x80] sm:$0xff]
                  %189 = vst [vmem:[%s171 + $0x40] sm:$0xff] %v188
                  %v190 = vld [vmem:[%s170 + $0x90] sm:$0xff]
                  %191 = vst [vmem:[%s171 + $0x48] sm:$0xff] %v190
                  %v192 = vld [vmem:[%s170 + $0xa0] sm:$0xff]
                  %193 = vst [vmem:[%s171 + $0x50] sm:$0xff] %v192
                  %v194 = vld [vmem:[%s170 + $0xb0] sm:$0xff]
                  %195 = vst [vmem:[%s171 + $0x58] sm:$0xff] %v194
                  %v196 = vld [vmem:[%s170 + $0xc0] sm:$0xff]
                  %197 = vst [vmem:[%s171 + $0x60] sm:$0xff] %v196
                  %v198 = vld [vmem:[%s170 + $0xd0] sm:$0xff]
                  %199 = vst [vmem:[%s171 + $0x68] sm:$0xff] %v198
                  %v200 = vld [vmem:[%s170 + $0xe0] sm:$0xff]
                  %201 = vst [vmem:[%s171 + $0x70] sm:$0xff] %v200
                  %v202 = vld [vmem:[%s170 + $0xf0] sm:$0xff]
                  %203 = vst [vmem:[%s171 + $0x78] sm:$0xff] %v202
                $region48: #{net_forward.8} parent=42 // loop_footer
                  %s169 = sadd.s32 1, %s165
                $region49: #{net_forward.8} parent=42 // loop_footer_branch
                  %164 = sbr.rel target = $region45
                $region50: #{net_forward.8} parent=42 // loop_exit
                  _
              $region43: #{net_forward.8} parent=27 // pred_fallthru
                _
              // Predicated region
              $region51: #{net_forward.8} parent=27 // pred_check
                _
              $region52: #{net_forward.8} parent=27 // pred_check_branch
                %205 = sbr.rel target = $region54
              $region53: #{net_forward.8} parent=27 // pred_region
                _
              $region54: #{net_forward.8} parent=27 // pred_fallthru
                _
            $region28: #{net_forward.8} parent=23 // pred_fallthru
              _
            // Predicated region
            $region29: #{net_forward.8} parent=23 // pred_check
              _
            $region30: #{net_forward.8} parent=23 // pred_check_branch
              %120 = sbr.rel target = $region32
            $region31: #{net_forward.8} parent=23 // pred_region
              loop: start=0, step=1, limit=1
              $region33: #{net_forward.8} parent=31 // loop_pre_header
                _
              $region34: #{net_forward.8} parent=31 // loop_header
                %s123 = sphi 0, %s127
                %p124 = scmp.ge.s32.totalorder %s123, 1
                %s128 = sphi %s114, %s114
                %s129 = sphi %s111, %s111
              $region35: #{net_forward.8} parent=31 // loop_header_branch
                %126 = sbr.rel (%p124) target = $region39
              $region36: #{net_forward.8} parent=31 // loop_body
                %v130 = vld [vmem:[%s128] sm:$0xff]
                %131 = vst [vmem:[%s129] sm:$0xff] %v130
                %v132 = vld [vmem:[%s128 + $0x10] sm:$0xff]
                %133 = vst [vmem:[%s129 + $0x8] sm:$0xff] %v132
                %v134 = vld [vmem:[%s128 + $0x20] sm:$0xff]
                %135 = vst [vmem:[%s129 + $0x10] sm:$0xff] %v134
                %v136 = vld [vmem:[%s128 + $0x30] sm:$0xff]
                %137 = vst [vmem:[%s129 + $0x18] sm:$0xff] %v136
                %v138 = vld [vmem:[%s128 + $0x40] sm:$0xff]
                %139 = vst [vmem:[%s129 + $0x20] sm:$0xff] %v138
                %v140 = vld [vmem:[%s128 + $0x50] sm:$0xff]
                %141 = vst [vmem:[%s129 + $0x28] sm:$0xff] %v140
                %v142 = vld [vmem:[%s128 + $0x60] sm:$0xff]
                %143 = vst [vmem:[%s129 + $0x30] sm:$0xff] %v142
                %v144 = vld [vmem:[%s128 + $0x70] sm:$0xff]
                %145 = vst [vmem:[%s129 + $0x38] sm:$0xff] %v144
                %v146 = vld [vmem:[%s128 + $0x80] sm:$0xff]
                %147 = vst [vmem:[%s129 + $0x40] sm:$0xff] %v146
                %v148 = vld [vmem:[%s128 + $0x90] sm:$0xff]
                %149 = vst [vmem:[%s129 + $0x48] sm:$0xff] %v148
                %v150 = vld [vmem:[%s128 + $0xa0] sm:$0xff]
                %151 = vst [vmem:[%s129 + $0x50] sm:$0xff] %v150
                %v152 = vld [vmem:[%s128 + $0xb0] sm:$0xff]
                %153 = vst [vmem:[%s129 + $0x58] sm:$0xff] %v152
                %v154 = vld [vmem:[%s128 + $0xc0] sm:$0xff]
                %155 = vst [vmem:[%s129 + $0x60] sm:$0xff] %v154
                %v156 = vld [vmem:[%s128 + $0xd0] sm:$0xff]
                %157 = vst [vmem:[%s129 + $0x68] sm:$0xff] %v156
                %v158 = vld [vmem:[%s128 + $0xe0] sm:$0xff]
                %159 = vst [vmem:[%s129 + $0x70] sm:$0xff] %v158
                %v160 = vld [vmem:[%s128 + $0xf0] sm:$0xff]
                %161 = vst [vmem:[%s129 + $0x78] sm:$0xff] %v160
              $region37: #{net_forward.8} parent=31 // loop_footer
                %s127 = sadd.s32 1, %s123
              $region38: #{net_forward.8} parent=31 // loop_footer_branch
                %122 = sbr.rel target = $region34
              $region39: #{net_forward.8} parent=31 // loop_exit
                _
            $region32: #{net_forward.8} parent=23 // pred_fallthru
              _
          $region24: #{net_forward.8} parent=19 // pred_fallthru
            _
          %206 = vnop
        $region20: #{net_forward.8} parent=15 // pred_fallthru
          _
        // Predicated region
        $region55: #{net_forward.8} parent=15 // pred_check
          %p207 = pneg %p54
        $region56: #{net_forward.8} parent=15 // pred_check_branch
          %209 = sbr.rel (%p207) target = $region58
        $region57: #{net_forward.8} parent=15 // pred_region
          %p210 = scmp.lt.s32.totalorder %s8, 1
          %s211 = scalar_select %p210, %s8, 1
          %s212 = smul.addr %s211, 64
          %s213 = smul.addr %s212, 4
          %s214 = scalar_lea.vmem %s1, %s213
        $region58: #{net_forward.8} parent=15 // pred_fallthru
          _
      $region16: #{net_forward.8} parent=5 // pred_fallthru
        _
      %p215 = scmp.le.s32.totalorder 1, %s8
      %p216 = scmp.lt.s32.totalorder %s8, 3
      %p217 = pnand %p215, %p216
      %p218 = pneg %p217
      // Predicated region
      $region59: #{net_forward.8} parent=5 // pred_check
        _
      $region60: #{net_forward.8} parent=5 // pred_check_branch
        %220 = sbr.rel (%p217) target = $region62
      $region61: #{net_forward.8} parent=5 // pred_region
        %s221 = ssub.s32 %s8, 1
        %s222 = sand.u32 %s21, 1
        %s223 = sand.u32 %s21, 1
        %s224 = smul.addr %s223, 128
        %s225 = scalar_lea.vmem [#allocation4], %s224
        // Predicated region
        $region63: #{net_forward.8} parent=61 // pred_check
          %p226 = pneg %p34
        $region64: #{net_forward.8} parent=61 // pred_check_branch
          %228 = sbr.rel (%p226) target = $region66
        $region65: #{net_forward.8} parent=61 // pred_region
          _
        $region66: #{net_forward.8} parent=61 // pred_fallthru
          _
        %s229 = sand.u32 %s21, 1
        %s230 = sand.u32 %s21, 1
        %s231 = smul.addr %s230, 128
        %s232 = scalar_lea.vmem [#allocation4], %s231
        %p233 = pneg %p34
        %p234 = pneg %p31
        %p235 = scmp.lt.s32.totalorder %s13, 1
        %s236 = scalar_select %p235, %s13, 1
        %s237 = smul.addr %s236, 64
        %s238 = smul.addr %s237, 4
        %s239 = scalar_lea.vmem %s1, %s238
        %p240 = pneg %p60
        %p241 = pneg %p57
        %p242 = pneg %p86
        %p243 = pneg %p83
        %s244 = sand.u32 %s73, 1
        %s245 = sand.u32 %s73, 1
        %s246 = smul.addr %s245, 32
        %s247 = scalar_lea.vmem [#allocation5], %s246
        %s248 = smul.u32 4, %s13
        %p249 = scmp.lt.s32.totalorder %s13, 1
        %s250 = scalar_select %p249, %s13, 1
        %s251 = smul.addr %s250, 64
        %s252 = smul.addr %s251, 4
        %s253 = scalar_lea.vmem %s1, %s252
        %255 = vst [vmem:[#allocation2] sm:$0x3] 0.0
        %256 = vst [vmem:[#allocation3] sm:$0x3] 0.0
        %v257 = vld [vmem:[%s253] sm:$0xff]
        %v258 = vld [vmem:[%s253 + $0x8] sm:$0xff]
        %v259 = vld [vmem:[%s253 + $0x10] sm:$0xff]
        %v260 = vld [vmem:[%s253 + $0x18] sm:$0xff]
        %v261 = vld [vmem:[%s253 + $0x20] sm:$0xff]
        %v262 = vld [vmem:[%s253 + $0x28] sm:$0xff]
        %v263 = vld [vmem:[%s253 + $0x30] sm:$0xff]
        %v264 = vld [vmem:[%s253 + $0x38] sm:$0xff]
        %v265 = vld [vmem:[%s253 + $0x40] sm:$0xff]
        %v266 = vld [vmem:[%s253 + $0x48] sm:$0xff]
        %v267 = vld [vmem:[%s253 + $0x50] sm:$0xff]
        %v268 = vld [vmem:[%s253 + $0x58] sm:$0xff]
        %v269 = vld [vmem:[%s253 + $0x60] sm:$0xff]
        %v270 = vld [vmem:[%s253 + $0x68] sm:$0xff]
        %v271 = vld [vmem:[%s253 + $0x70] sm:$0xff]
        %v272 = vld [vmem:[%s253 + $0x78] sm:$0xff]
        %v273 = vld [vmem:[%s253 + $0x80] sm:$0xff]
        %v274 = vld [vmem:[%s253 + $0x88] sm:$0xff]
        %v275 = vld [vmem:[%s253 + $0x90] sm:$0xff]
        %v276 = vld [vmem:[%s253 + $0x98] sm:$0xff]
        %v277 = vld [vmem:[%s253 + $0xa0] sm:$0xff]
        %v278 = vld [vmem:[%s253 + $0xa8] sm:$0xff]
        %v279 = vld [vmem:[%s253 + $0xb0] sm:$0xff]
        %v280 = vld [vmem:[%s253 + $0xb8] sm:$0xff]
        %v281 = vld [vmem:[%s253 + $0xc0] sm:$0xff]
        %v282 = vld [vmem:[%s253 + $0xc8] sm:$0xff]
        %v283 = vld [vmem:[%s253 + $0xd0] sm:$0xff]
        %v284 = vld [vmem:[%s253 + $0xd8] sm:$0xff]
        %v285 = vld [vmem:[%s253 + $0xe0] sm:$0xff]
        %v286 = vld [vmem:[%s253 + $0xe8] sm:$0xff]
        %v287 = vld [vmem:[%s253 + $0xf0] sm:$0xff]
        %v288 = vld [vmem:[%s253 + $0xf8] sm:$0xff]
        loop: start=0, step=1, limit=16
        $region67: #{net_forward.8} parent=61 // loop_pre_header
          _
        $region68: #{net_forward.8} parent=61 // loop_header
          %s290 = sphi 0, %s294
          %p291 = scmp.ge.s32.totalorder %s290, 16
        $region69: #{net_forward.8} parent=61 // loop_header_branch
          %293 = sbr.rel (%p291) target = $region73
        $region70: #{net_forward.8} parent=61 // loop_body
          %s295 = smul.u32 %s13, 15
          %s296 = smul.u32 %s13, 2
          %s297 = ssub.s32 1, %s296
          %s298 = smul.u32 %s297, %s290
          %s299 = sadd.s32 %s295, %s298
          %s300 = smul.u32 %s299, 4
          %s301 = smul.addr %s300, 2
          %s302 = scalar_lea.vmem %s225, %s301 [#allocation4]
          %v303 = vld [vmem:[%s302] sm:$0xff]
          %v304 = vld [vmem:[#allocation2] sm:$0x3]
          %v305 = vpack.c.bf16 %v304, %v304
          %v338 = vunpack.c.l.b16 %v257
          %v339 = vunpack.c.h.b16 %v257
          %v340 = vunpack.c.l.b16 %v258
          %v341 = vunpack.c.h.b16 %v258
          %v342 = vunpack.c.l.b16 %v259
          %v343 = vunpack.c.h.b16 %v259
          %v344 = vunpack.c.l.b16 %v260
          %v345 = vunpack.c.h.b16 %v260
          %v346 = vunpack.c.l.b16 %v261
          %v347 = vunpack.c.h.b16 %v261
          %v348 = vunpack.c.l.b16 %v262
          %v349 = vunpack.c.h.b16 %v262
          %v350 = vunpack.c.l.b16 %v263
          %v351 = vunpack.c.h.b16 %v263
          %v352 = vunpack.c.l.b16 %v264
          %v353 = vunpack.c.h.b16 %v264
          %v354 = vunpack.c.l.b16 %v265
          %v355 = vunpack.c.h.b16 %v265
          %v356 = vunpack.c.l.b16 %v266
          %v357 = vunpack.c.h.b16 %v266
          %v358 = vunpack.c.l.b16 %v267
          %v359 = vunpack.c.h.b16 %v267
          %v360 = vunpack.c.l.b16 %v268
          %v361 = vunpack.c.h.b16 %v268
          %v362 = vunpack.c.l.b16 %v269
          %v363 = vunpack.c.h.b16 %v269
          %v364 = vunpack.c.l.b16 %v270
          %v365 = vunpack.c.h.b16 %v270
          %v366 = vunpack.c.l.b16 %v271
          %v367 = vunpack.c.h.b16 %v271
          %v368 = vunpack.c.l.b16 %v272
          %v369 = vunpack.c.h.b16 %v272
          %v370 = vunpack.c.l.b16 %v273
          %v371 = vunpack.c.h.b16 %v273
          %v372 = vunpack.c.l.b16 %v274
          %v373 = vunpack.c.h.b16 %v274
          %v374 = vunpack.c.l.b16 %v275
          %v375 = vunpack.c.h.b16 %v275
          %v376 = vunpack.c.l.b16 %v276
          %v377 = vunpack.c.h.b16 %v276
          %v378 = vunpack.c.l.b16 %v277
          %v379 = vunpack.c.h.b16 %v277
          %v380 = vunpack.c.l.b16 %v278
          %v381 = vunpack.c.h.b16 %v278
          %v382 = vunpack.c.l.b16 %v279
          %v383 = vunpack.c.h.b16 %v279
          %v384 = vunpack.c.l.b16 %v280
          %v385 = vunpack.c.h.b16 %v280
          %v386 = vunpack.c.l.b16 %v281
          %v387 = vunpack.c.h.b16 %v281
          %v388 = vunpack.c.l.b16 %v282
          %v389 = vunpack.c.h.b16 %v282
          %v390 = vunpack.c.l.b16 %v283
          %v391 = vunpack.c.h.b16 %v283
          %v392 = vunpack.c.l.b16 %v284
          %v393 = vunpack.c.h.b16 %v284
          %v394 = vunpack.c.l.b16 %v285
          %v395 = vunpack.c.h.b16 %v285
          %v396 = vunpack.c.l.b16 %v286
          %v397 = vunpack.c.h.b16 %v286
          %v398 = vunpack.c.l.b16 %v287
          %v399 = vunpack.c.h.b16 %v287
          %v400 = vunpack.c.l.b16 %v288
          %v401 = vunpack.c.h.b16 %v288
          %v402 = vpack.c.b16 %v342, %v338
          %v403 = vpack.c.b16 %v343, %v339
          %v404 = vpack.c.b16 %v344, %v340
          %v405 = vpack.c.b16 %v345, %v341
          %v406 = vpack.c.b16 %v350, %v346
          %v407 = vpack.c.b16 %v351, %v347
          %v408 = vpack.c.b16 %v352, %v348
          %v409 = vpack.c.b16 %v353, %v349
          %v410 = vpack.c.b16 %v358, %v354
          %v411 = vpack.c.b16 %v359, %v355
          %v412 = vpack.c.b16 %v360, %v356
          %v413 = vpack.c.b16 %v361, %v357
          %v414 = vpack.c.b16 %v366, %v362
          %v415 = vpack.c.b16 %v367, %v363
          %v416 = vpack.c.b16 %v368, %v364
          %v417 = vpack.c.b16 %v369, %v365
          %v418 = vpack.c.b16 %v374, %v370
          %v419 = vpack.c.b16 %v375, %v371
          %v420 = vpack.c.b16 %v376, %v372
          %v421 = vpack.c.b16 %v377, %v373
          %v422 = vpack.c.b16 %v382, %v378
          %v423 = vpack.c.b16 %v383, %v379
          %v424 = vpack.c.b16 %v384, %v380
          %v425 = vpack.c.b16 %v385, %v381
          %v426 = vpack.c.b16 %v390, %v386
          %v427 = vpack.c.b16 %v391, %v387
          %v428 = vpack.c.b16 %v392, %v388
          %v429 = vpack.c.b16 %v393, %v389
          %v430 = vpack.c.b16 %v398, %v394
          %v431 = vpack.c.b16 %v399, %v395
          %v432 = vpack.c.b16 %v400, %v396
          %v433 = vpack.c.b16 %v401, %v397
          %466 = vmatprep.subr.bf16.mxu0 %v403
          %467 = vmatpush1.bf16.msra.mxu0 %v402
          %468 = vmatprep.subr.bf16.mxu0 %v407
          %469 = vmatpush1.bf16.msra.mxu0 %v406
          %470 = vmatprep.subr.bf16.mxu0 %v411
          %471 = vmatpush1.bf16.msra.mxu0 %v410
          %472 = vmatprep.subr.bf16.mxu0 %v415
          %473 = vmatpush1.bf16.msra.mxu0 %v414
          %474 = vmatprep.subr.bf16.mxu0 %v419
          %475 = vmatpush1.bf16.msra.mxu0 %v418
          %476 = vmatprep.subr.bf16.mxu0 %v423
          %477 = vmatpush1.bf16.msra.mxu0 %v422
          %478 = vmatprep.subr.bf16.mxu0 %v427
          %479 = vmatpush1.bf16.msra.mxu0 %v426
          %480 = vmatprep.subr.bf16.mxu0 %v431
          %481 = vmatpush1.bf16.msra.mxu0 %v430
          %482 = vmatprep.subr.bf16.mxu0 0
          %483 = vmatpush1.bf16.msra.mxu0 0
          %484 = vmatprep.subr.bf16.mxu0 0
          %485 = vmatpush1.bf16.msra.mxu0 0
          %486 = vmatprep.subr.bf16.mxu0 0
          %487 = vmatpush1.bf16.msra.mxu0 0
          %488 = vmatprep.subr.bf16.mxu0 0
          %489 = vmatpush1.bf16.msra.mxu0 0
          %490 = vmatprep.subr.bf16.mxu0 0
          %491 = vmatpush1.bf16.msra.mxu0 0
          %492 = vmatprep.subr.bf16.mxu0 0
          %493 = vmatpush1.bf16.msra.mxu0 0
          %494 = vmatprep.subr.bf16.mxu0 0
          %495 = vmatpush1.bf16.msra.mxu0 0
          %496 = vmatprep.subr.bf16.mxu0 0
          %497 = vmatpush1.bf16.msra.mxu0 0
          %498 = vmatprep.mubr.bf16.mxu0 0
          %499 = vmatmul.mubr.bf16.gmra.mrb[0].mxu0 %v305
          %v500 = vpop.f32.mrb[0].mxu0
          %v501 = vadd.f32 0.0, %v500
          %v502 = vpop.f32.mrb[0].mxu0
          %v503 = vadd.f32 0.0, %v502
          %v504 = vpop.f32.mrb[0].mxu0
          %v505 = vpop.f32.mrb[0].mxu0
          %506 = vdwg.mxu0
          %507 = vmatprep.subr.bf16.mxu0 %v405
          %508 = vmatpush1.bf16.msra.mxu0 %v404
          %509 = vmatprep.subr.bf16.mxu0 %v409
          %510 = vmatpush1.bf16.msra.mxu0 %v408
          %511 = vmatprep.subr.bf16.mxu0 %v413
          %512 = vmatpush1.bf16.msra.mxu0 %v412
          %513 = vmatprep.subr.bf16.mxu0 %v417
          %514 = vmatpush1.bf16.msra.mxu0 %v416
          %515 = vmatprep.subr.bf16.mxu0 %v421
          %516 = vmatpush1.bf16.msra.mxu0 %v420
          %517 = vmatprep.subr.bf16.mxu0 %v425
          %518 = vmatpush1.bf16.msra.mxu0 %v424
          %519 = vmatprep.subr.bf16.mxu0 %v429
          %520 = vmatpush1.bf16.msra.mxu0 %v428
          %521 = vmatprep.subr.bf16.mxu0 %v433
          %522 = vmatpush1.bf16.msra.mxu0 %v432
          %523 = vmatprep.subr.bf16.mxu0 0
          %524 = vmatpush1.bf16.msra.mxu0 0
          %525 = vmatprep.subr.bf16.mxu0 0
          %526 = vmatpush1.bf16.msra.mxu0 0
          %527 = vmatprep.subr.bf16.mxu0 0
          %528 = vmatpush1.bf16.msra.mxu0 0
          %529 = vmatprep.subr.bf16.mxu0 0
          %530 = vmatpush1.bf16.msra.mxu0 0
          %531 = vmatprep.subr.bf16.mxu0 0
          %532 = vmatpush1.bf16.msra.mxu0 0
          %533 = vmatprep.subr.bf16.mxu0 0
          %534 = vmatpush1.bf16.msra.mxu0 0
          %535 = vmatprep.subr.bf16.mxu0 0
          %536 = vmatpush1.bf16.msra.mxu0 0
          %537 = vmatprep.subr.bf16.mxu0 0
          %538 = vmatpush1.bf16.msra.mxu0 0
          %539 = vmatprep.mubr.bf16.mxu0 0
          %540 = vmatmul.mubr.bf16.gmra.mrb[0].mxu0 %v305
          %v541 = vpop.f32.mrb[0].mxu0
          %v542 = vadd.f32 0.0, %v541
          %v543 = vpop.f32.mrb[0].mxu0
          %v544 = vadd.f32 0.0, %v543
          %v545 = vpop.f32.mrb[0].mxu0
          %v546 = vpop.f32.mrb[0].mxu0
          %547 = vdwg.mxu0
          %v552 = vcombine.low %v501, %v503
          %v553 = vcombine.low %v542, %v544
          %v555 = vunpack.c.l.s4 1983009808
          %v556 = vunpack.c.0.s8 %v555
          %v557 = vlaneseq
          %v558 = vshrl.u32 %v557, 7
          %v559 = vsub.s32 %v556, %v558
          %v560 = vrot.slane %v552, %v559
          %v562 = vunpack.c.l.s4 1983009808
          %v563 = vunpack.c.0.s8 %v562
          %v564 = vlaneseq
          %v565 = vshrl.u32 %v564, 7
          %v566 = vsub.s32 %v563, %v565
          %v567 = vrot.slane %v553, %v566
          %v568 = vcombine.low %v560, %v567
          %v570 = vadd.f32 %v303, %v568
          %v571 = vxor.u32 %v570, 2147483648
          %v572 = vmul.f32 %v571, 1.442695
          %v573 = vpow.pop %v572
          %v574 = vadd.f32 %v573, 1.0
          %v575 = vrcp.pop %v574
          %v576 = vmul.f32 1.0, %v575
          %v578 = vrot.slane %v570, 2
          %v580 = vxor.u32 %v578, 2147483648
          %v581 = vmul.f32 %v580, 1.442695
          %v582 = vpow.pop %v581
          %v583 = vadd.f32 %v582, 1.0
          %v584 = vrcp.pop %v583
          %v585 = vmul.f32 1.0, %v584
          %v586 = vrot.slane %v570, 4
          %v588 = vtanh.pop %v586
          %v589 = vrot.slane %v570, 6
          %v591 = vxor.u32 %v589, 2147483648
          %v592 = vmul.f32 %v591, 1.442695
          %v593 = vpow.pop %v592
          %v594 = vadd.f32 %v593, 1.0
          %v595 = vrcp.pop %v594
          %v596 = vmul.f32 1.0, %v595
          %v597 = vld [vmem:[#allocation3] sm:$0x3]
          %v598 = vmul.f32 %v585, %v597
          %v599 = vmul.f32 %v576, %v588
          %v600 = vadd.f32 %v598, %v599
          %v601 = vtanh.pop %v600
          %v602 = vmul.f32 %v596, %v601
          %603 = vst [vmem:[#allocation3] sm:$0x3] %v600
          %604 = vst [vmem:[#allocation2] sm:$0x3] %v602
          %s605 = smul.u32 %s299, 2
          %s606 = scalar_lea.vmem %s247, %s605 [#allocation5]
          %607 = vst [vmem:[%s606] sm:$0x3] %v602
        $region71: #{net_forward.8} parent=61 // loop_footer
          %s294 = sadd.s32 1, %s290
        $region72: #{net_forward.8} parent=61 // loop_footer_branch
          %289 = sbr.rel target = $region68
        $region73: #{net_forward.8} parent=61 // loop_exit
          _
        %s608 = sand.u32 %s73, 1
        %s609 = sand.u32 %s73, 1
        %s610 = smul.addr %s609, 32
        %s611 = scalar_lea.vmem [#allocation5], %s610
        // Predicated region
        $region74: #{net_forward.8} parent=61 // pred_check
          %p612 = pneg %p83
        $region75: #{net_forward.8} parent=61 // pred_check_branch
          %614 = sbr.rel (%p612) target = $region77
        $region76: #{net_forward.8} parent=61 // pred_region
          %s615 = smul.addr %s13, 2
          %s616 = scalar_lea.vmem %s2, %s615
          // Predicated region
          $region78: #{net_forward.8} parent=76 // pred_check
            _
          $region79: #{net_forward.8} parent=76 // pred_check_branch
            %618 = sbr.rel (0) target = $region81
          $region80: #{net_forward.8} parent=76 // pred_region
            // Predicated region
            $region82: #{net_forward.8} parent=80 // pred_check
              _
            $region83: #{net_forward.8} parent=80 // pred_check_branch
              %620 = sbr.rel target = $region85
            $region84: #{net_forward.8} parent=80 // pred_region
              // Predicated region
              $region97: #{net_forward.8} parent=84 // pred_check
                _
              $region98: #{net_forward.8} parent=84 // pred_check_branch
                %665 = sbr.rel (0) target = $region100
              $region99: #{net_forward.8} parent=84 // pred_region
                loop: start=0, step=1, limit=1
                $region101: #{net_forward.8} parent=99 // loop_pre_header
                  _
                $region102: #{net_forward.8} parent=99 // loop_header
                  %s667 = sphi 0, %s671
                  %p668 = scmp.ge.s32.totalorder %s667, 1
                  %s672 = sphi %s611, %s611
                  %s673 = sphi %s616, %s616
                $region103: #{net_forward.8} parent=99 // loop_header_branch
                  %670 = sbr.rel (%p668) target = $region107
                $region104: #{net_forward.8} parent=99 // loop_body
                  _
                $region105: #{net_forward.8} parent=99 // loop_footer
                  %s671 = sadd.s32 1, %s667
                $region106: #{net_forward.8} parent=99 // loop_footer_branch
                  %666 = sbr.rel target = $region102
                $region107: #{net_forward.8} parent=99 // loop_exit
                  _
                loop: start=0, step=1, limit=1
                $region108: #{net_forward.8} parent=99 // loop_pre_header
                  _
                $region109: #{net_forward.8} parent=99 // loop_header
                  %s676 = sphi 0, %s680
                  %p677 = scmp.ge.s32.totalorder %s676, 1
                  %s681 = sphi %s611, %s611
                  %s682 = sphi %s616, %s616
                $region110: #{net_forward.8} parent=99 // loop_header_branch
                  %679 = sbr.rel (%p677) target = $region114
                $region111: #{net_forward.8} parent=99 // loop_body
                  %v683 = vld [vmem:[%s681] sm:$0x3]
                  %684 = vst [vmem:[%s682] sm:$0x3] %v683
                  %v685 = vld [vmem:[%s681 + $0x2] sm:$0x3]
                  %686 = vst [vmem:[%s682 + $0x4] sm:$0x3] %v685
                  %v687 = vld [vmem:[%s681 + $0x4] sm:$0x3]
                  %688 = vst [vmem:[%s682 + $0x8] sm:$0x3] %v687
                  %v689 = vld [vmem:[%s681 + $0x6] sm:$0x3]
                  %690 = vst [vmem:[%s682 + $0xc] sm:$0x3] %v689
                  %v691 = vld [vmem:[%s681 + $0x8] sm:$0x3]
                  %692 = vst [vmem:[%s682 + $0x10] sm:$0x3] %v691
                  %v693 = vld [vmem:[%s681 + $0xa] sm:$0x3]
                  %694 = vst [vmem:[%s682 + $0x14] sm:$0x3] %v693
                  %v695 = vld [vmem:[%s681 + $0xc] sm:$0x3]
                  %696 = vst [vmem:[%s682 + $0x18] sm:$0x3] %v695
                  %v697 = vld [vmem:[%s681 + $0xe] sm:$0x3]
                  %698 = vst [vmem:[%s682 + $0x1c] sm:$0x3] %v697
                  %v699 = vld [vmem:[%s681 + $0x10] sm:$0x3]
                  %700 = vst [vmem:[%s682 + $0x20] sm:$0x3] %v699
                  %v701 = vld [vmem:[%s681 + $0x12] sm:$0x3]
                  %702 = vst [vmem:[%s682 + $0x24] sm:$0x3] %v701
                  %v703 = vld [vmem:[%s681 + $0x14] sm:$0x3]
                  %704 = vst [vmem:[%s682 + $0x28] sm:$0x3] %v703
                  %v705 = vld [vmem:[%s681 + $0x16] sm:$0x3]
                  %706 = vst [vmem:[%s682 + $0x2c] sm:$0x3] %v705
                  %v707 = vld [vmem:[%s681 + $0x18] sm:$0x3]
                  %708 = vst [vmem:[%s682 + $0x30] sm:$0x3] %v707
                  %v709 = vld [vmem:[%s681 + $0x1a] sm:$0x3]
                  %710 = vst [vmem:[%s682 + $0x34] sm:$0x3] %v709
                  %v711 = vld [vmem:[%s681 + $0x1c] sm:$0x3]
                  %712 = vst [vmem:[%s682 + $0x38] sm:$0x3] %v711
                  %v713 = vld [vmem:[%s681 + $0x1e] sm:$0x3]
                  %714 = vst [vmem:[%s682 + $0x3c] sm:$0x3] %v713
                $region112: #{net_forward.8} parent=99 // loop_footer
                  %s680 = sadd.s32 1, %s676
                $region113: #{net_forward.8} parent=99 // loop_footer_branch
                  %675 = sbr.rel target = $region109
                $region114: #{net_forward.8} parent=99 // loop_exit
                  _
              $region100: #{net_forward.8} parent=84 // pred_fallthru
                _
            $region85: #{net_forward.8} parent=80 // pred_fallthru
              _
            // Predicated region
            $region86: #{net_forward.8} parent=80 // pred_check
              _
            $region87: #{net_forward.8} parent=80 // pred_check_branch
              %622 = sbr.rel (0) target = $region89
            $region88: #{net_forward.8} parent=80 // pred_region
              loop: start=0, step=1, limit=1
              $region90: #{net_forward.8} parent=88 // loop_pre_header
                _
              $region91: #{net_forward.8} parent=88 // loop_header
                %s625 = sphi 0, %s629
                %p626 = scmp.ge.s32.totalorder %s625, 1
                %s630 = sphi %s611, %s611
                %s631 = sphi %s616, %s616
              $region92: #{net_forward.8} parent=88 // loop_header_branch
                %628 = sbr.rel (%p626) target = $region96
              $region93: #{net_forward.8} parent=88 // loop_body
                %v632 = vld [vmem:[%s630] sm:$0x3]
                %633 = vst [vmem:[%s631] sm:$0x3] %v632
                %v634 = vld [vmem:[%s630 + $0x2] sm:$0x3]
                %635 = vst [vmem:[%s631 + $0x4] sm:$0x3] %v634
                %v636 = vld [vmem:[%s630 + $0x4] sm:$0x3]
                %637 = vst [vmem:[%s631 + $0x8] sm:$0x3] %v636
                %v638 = vld [vmem:[%s630 + $0x6] sm:$0x3]
                %639 = vst [vmem:[%s631 + $0xc] sm:$0x3] %v638
                %v640 = vld [vmem:[%s630 + $0x8] sm:$0x3]
                %641 = vst [vmem:[%s631 + $0x10] sm:$0x3] %v640
                %v642 = vld [vmem:[%s630 + $0xa] sm:$0x3]
                %643 = vst [vmem:[%s631 + $0x14] sm:$0x3] %v642
                %v644 = vld [vmem:[%s630 + $0xc] sm:$0x3]
                %645 = vst [vmem:[%s631 + $0x18] sm:$0x3] %v644
                %v646 = vld [vmem:[%s630 + $0xe] sm:$0x3]
                %647 = vst [vmem:[%s631 + $0x1c] sm:$0x3] %v646
                %v648 = vld [vmem:[%s630 + $0x10] sm:$0x3]
                %649 = vst [vmem:[%s631 + $0x20] sm:$0x3] %v648
                %v650 = vld [vmem:[%s630 + $0x12] sm:$0x3]
                %651 = vst [vmem:[%s631 + $0x24] sm:$0x3] %v650
                %v652 = vld [vmem:[%s630 + $0x14] sm:$0x3]
                %653 = vst [vmem:[%s631 + $0x28] sm:$0x3] %v652
                %v654 = vld [vmem:[%s630 + $0x16] sm:$0x3]
                %655 = vst [vmem:[%s631 + $0x2c] sm:$0x3] %v654
                %v656 = vld [vmem:[%s630 + $0x18] sm:$0x3]
                %657 = vst [vmem:[%s631 + $0x30] sm:$0x3] %v656
                %v658 = vld [vmem:[%s630 + $0x1a] sm:$0x3]
                %659 = vst [vmem:[%s631 + $0x34] sm:$0x3] %v658
                %v660 = vld [vmem:[%s630 + $0x1c] sm:$0x3]
                %661 = vst [vmem:[%s631 + $0x38] sm:$0x3] %v660
                %v662 = vld [vmem:[%s630 + $0x1e] sm:$0x3]
                %663 = vst [vmem:[%s631 + $0x3c] sm:$0x3] %v662
              $region94: #{net_forward.8} parent=88 // loop_footer
                %s629 = sadd.s32 1, %s625
              $region95: #{net_forward.8} parent=88 // loop_footer_branch
                %624 = sbr.rel target = $region91
              $region96: #{net_forward.8} parent=88 // loop_exit
                _
            $region89: #{net_forward.8} parent=80 // pred_fallthru
              _
          $region81: #{net_forward.8} parent=76 // pred_fallthru
            _
          %715 = vnop
        $region77: #{net_forward.8} parent=61 // pred_fallthru
          _
      $region62: #{net_forward.8} parent=5 // pred_fallthru
        _
      %p716 = scmp.le.s32.totalorder 2, %s8
      // Predicated region
      $region115: #{net_forward.8} parent=5 // pred_check
        %p717 = pneg %p716
      $region116: #{net_forward.8} parent=5 // pred_check_branch
        %719 = sbr.rel (%p717) target = $region118
      $region117: #{net_forward.8} parent=5 // pred_region
        %s720 = ssub.s32 %s8, 2
        // Predicated region
        $region119: #{net_forward.8} parent=117 // pred_check
          %p721 = pneg %p89
        $region120: #{net_forward.8} parent=117 // pred_check_branch
          %723 = sbr.rel (%p721) target = $region122
        $region121: #{net_forward.8} parent=117 // pred_region
          %s724 = sand.u32 %s74, 1
          %s725 = sand.u32 %s74, 1
          %s726 = smul.addr %s725, 32
          %s727 = scalar_lea.vmem [#allocation5], %s726
        $region122: #{net_forward.8} parent=117 // pred_fallthru
          _
      $region118: #{net_forward.8} parent=5 // pred_fallthru
        _
    $region6: #{net_forward.8} parent=1 // loop_footer
      %s12 = sadd.s32 1, %s8
    $region7: #{net_forward.8} parent=1 // loop_footer_branch
      %7 = sbr.rel target = $region3
    $region8: #{net_forward.8} parent=1 // loop_exit
      _

// kernel: net_forward.7
$region0: #{net_forward.7}
  #allocation0 [shape = 'u32[]', space=smem, size = 0x4, offset = 0x4, fixed_abs, tag = 'smem constant byte address 0x4 - core index']
  #allocation1 [shape = 'u32[144,128]{1,0:T(1,128)}', space=vmem, size = 0x12000, scoped, tag = 'internal scratch']
  %s0 = inlined_call_operand.vmem [shape: bf16[32,256], index: 0, kind: input, shape index: {}]
  %s1 = inlined_call_operand.hbm [shape: bf16[256,1024], index: 1, kind: input, shape index: {}]
  %s2 = inlined_call_operand.vmem [shape: f32[1,1024], index: 2, kind: input, shape index: {}]
  %s3 = inlined_call_operand.vmem [shape: f32[32,1024], index: 3, kind: output, shape index: {}]
  %s4 = sld [smem:[#allocation0]]
  $region26: #{net_forward.7} parent=0
    _
  %s6 = ssub.s32 1, %s4
  %s7 = scalar_select 0, %s6, %s4
  $region1: #{net_forward.7} parent=0
    #allocation2 [shape = 'u8[524288]{0}', space=vmem, size = 0x80000, scoped, tag = 'input window, operand 1, single buffered']
    #allocation3 [shape = 's32[1]{0}', space=sflag, size = 0x4, scoped, tag = 'scoped memory for net_forward.7']
    %8 = vsyncpa [#allocation3], 0
    // Predicated region
    $region2: #{net_forward.7} parent=1 // pred_check
      _
    $region3: #{net_forward.7} parent=1 // pred_check_branch
      %10 = sbr.rel (0) target = $region5
    $region4: #{net_forward.7} parent=1 // pred_region
      _
    $region5: #{net_forward.7} parent=1 // pred_fallthru
      _
    // Predicated region
    $region6: #{net_forward.7} parent=1 // pred_check
      _
    $region7: #{net_forward.7} parent=1 // pred_check_branch
      %12 = sbr.rel (0) target = $region9
    $region8: #{net_forward.7} parent=1 // pred_region
      %s14 = ssub.s32 16384, 16384
      %15 = vsyncadd [#allocation3], %s14
      %s16 = sshll.u32 [#allocation2], 4
      %s17 = int_to_ptr.vmem [resolvable:$true] %s16
      %22 = dma.hbm_to_vmem [thread:$0]  %s1, 16384, %s17, [#allocation3], 512, 512, 32
    $region9: #{net_forward.7} parent=1 // pred_fallthru
      _
    // Predicated region
    $region10: #{net_forward.7} parent=1 // pred_check
      _
    $region11: #{net_forward.7} parent=1 // pred_check_branch
      %24 = sbr.rel (0) target = $region13
    $region12: #{net_forward.7} parent=1 // pred_region
      _
    $region13: #{net_forward.7} parent=1 // pred_fallthru
      _
    // Predicated region
    $region14: #{net_forward.7} parent=1 // pred_check
      _
    $region15: #{net_forward.7} parent=1 // pred_check_branch
      %26 = sbr.rel (0) target = $region17
    $region16: #{net_forward.7} parent=1 // pred_region
      %27 = dma.done [#allocation3], 16384
    $region17: #{net_forward.7} parent=1 // pred_fallthru
      _
    %v28 = vld [vmem:[%s0] sm:$0xff]
    %v29 = vld [vmem:[%s0 + $0x8] sm:$0xff]
    %v30 = vld [vmem:[%s0 + $0x10] sm:$0xff]
    %v31 = vld [vmem:[%s0 + $0x18] sm:$0xff]
    %v32 = vld [vmem:[#allocation2] sm:$0xff]
    %v33 = vld [vmem:[#allocation2 + $0x8] sm:$0xff]
    %v34 = vld [vmem:[#allocation2 + $0x10] sm:$0xff]
    %v35 = vld [vmem:[#allocation2 + $0x18] sm:$0xff]
    %v36 = vld [vmem:[#allocation2 + $0x20] sm:$0xff]
    %v37 = vld [vmem:[#allocation2 + $0x28] sm:$0xff]
    %v38 = vld [vmem:[#allocation2 + $0x30] sm:$0xff]
    %v39 = vld [vmem:[#allocation2 + $0x38] sm:$0xff]
    %v40 = vld [vmem:[#allocation2 + $0x40] sm:$0xff]
    %v41 = vld [vmem:[#allocation2 + $0x48] sm:$0xff]
    %v42 = vld [vmem:[#allocation2 + $0x50] sm:$0xff]
    %v43 = vld [vmem:[#allocation2 + $0x58] sm:$0xff]
    %v44 = vld [vmem:[#allocation2 + $0x60] sm:$0xff]
    %v45 = vld [vmem:[#allocation2 + $0x68] sm:$0xff]
    %v46 = vld [vmem:[#allocation2 + $0x70] sm:$0xff]
    %v47 = vld [vmem:[#allocation2 + $0x78] sm:$0xff]
    %v48 = vld [vmem:[#allocation2 + $0x80] sm:$0xff]
    %v49 = vld [vmem:[#allocation2 + $0x88] sm:$0xff]
    %v50 = vld [vmem:[#allocation2 + $0x90] sm:$0xff]
    %v51 = vld [vmem:[#allocation2 + $0x98] sm:$0xff]
    %v52 = vld [vmem:[#allocation2 + $0xa0] sm:$0xff]
    %v53 = vld [vmem:[#allocation2 + $0xa8] sm:$0xff]
    %v54 = vld [vmem:[#allocation2 + $0xb0] sm:$0xff]
    %v55 = vld [vmem:[#allocation2 + $0xb8] sm:$0xff]
    %v56 = vld [vmem:[#allocation2 + $0xc0] sm:$0xff]
    %v57 = vld [vmem:[#allocation2 + $0xc8] sm:$0xff]
    %v58 = vld [vmem:[#allocation2 + $0xd0] sm:$0xff]
    %v59 = vld [vmem:[#allocation2 + $0xd8] sm:$0xff]
    %v60 = vld [vmem:[#allocation2 + $0xe0] sm:$0xff]
    %v61 = vld [vmem:[#allocation2 + $0xe8] sm:$0xff]
    %v62 = vld [vmem:[#allocation2 + $0xf0] sm:$0xff]
    %v63 = vld [vmem:[#allocation2 + $0xf8] sm:$0xff]
    %v64 = vld [vmem:[#allocation2 + $0x100] sm:$0xff]
    %v65 = vld [vmem:[#allocation2 + $0x108] sm:$0xff]
    %v66 = vld [vmem:[#allocation2 + $0x110] sm:$0xff]
    %v67 = vld [vmem:[#allocation2 + $0x118] sm:$0xff]
    %v68 = vld [vmem:[#allocation2 + $0x120] sm:$0xff]
    %v69 = vld [vmem:[#allocation2 + $0x128] sm:$0xff]
    %v70 = vld [vmem:[#allocation2 + $0x130] sm:$0xff]
    %v71 = vld [vmem:[#allocation2 + $0x138] sm:$0xff]
    %v72 = vld [vmem:[#allocation2 + $0x140] sm:$0xff]
    %v73 = vld [vmem:[#allocation2 + $0x148] sm:$0xff]
    %v74 = vld [vmem:[#allocation2 + $0x150] sm:$0xff]
    %v75 = vld [vmem:[#allocation2 + $0x158] sm:$0xff]
    %v76 = vld [vmem:[#allocation2 + $0x160] sm:$0xff]
    %v77 = vld [vmem:[#allocation2 + $0x168] sm:$0xff]
    %v78 = vld [vmem:[#allocation2 + $0x170] sm:$0xff]
    %v79 = vld [vmem:[#allocation2 + $0x178] sm:$0xff]
    %v80 = vld [vmem:[#allocation2 + $0x180] sm:$0xff]
    %v81 = vld [vmem:[#allocation2 + $0x188] sm:$0xff]
    %v82 = vld [vmem:[#allocation2 + $0x190] sm:$0xff]
    %v83 = vld [vmem:[#allocation2 + $0x198] sm:$0xff]
    %v84 = vld [vmem:[#allocation2 + $0x1a0] sm:$0xff]
    %v85 = vld [vmem:[#allocation2 + $0x1a8] sm:$0xff]
    %v86 = vld [vmem:[#allocation2 + $0x1b0] sm:$0xff]
    %v87 = vld [vmem:[#allocation2 + $0x1b8] sm:$0xff]
    %v88 = vld [vmem:[#allocation2 + $0x1c0] sm:$0xff]
    %v89 = vld [vmem:[#allocation2 + $0x1c8] sm:$0xff]
    %v90 = vld [vmem:[#allocation2 + $0x1d0] sm:$0xff]
    %v91 = vld [vmem:[#allocation2 + $0x1d8] sm:$0xff]
    %v92 = vld [vmem:[#allocation2 + $0x1e0] sm:$0xff]
    %v93 = vld [vmem:[#allocation2 + $0x1e8] sm:$0xff]
    %v94 = vld [vmem:[#allocation2 + $0x1f0] sm:$0xff]
    %v95 = vld [vmem:[#allocation2 + $0x1f8] sm:$0xff]
    %v96 = vld [vmem:[#allocation2 + $0x200] sm:$0xff]
    %v97 = vld [vmem:[#allocation2 + $0x208] sm:$0xff]
    %v98 = vld [vmem:[#allocation2 + $0x210] sm:$0xff]
    %v99 = vld [vmem:[#allocation2 + $0x218] sm:$0xff]
    %v100 = vld [vmem:[#allocation2 + $0x220] sm:$0xff]
    %v101 = vld [vmem:[#allocation2 + $0x228] sm:$0xff]
    %v102 = vld [vmem:[#allocation2 + $0x230] sm:$0xff]
    %v103 = vld [vmem:[#allocation2 + $0x238] sm:$0xff]
    %v104 = vld [vmem:[#allocation2 + $0x240] sm:$0xff]
    %v105 = vld [vmem:[#allocation2 + $0x248] sm:$0xff]
    %v106 = vld [vmem:[#allocation2 + $0x250] sm:$0xff]
    %v107 = vld [vmem:[#allocation2 + $0x258] sm:$0xff]
    %v108 = vld [vmem:[#allocation2 + $0x260] sm:$0xff]
    %v109 = vld [vmem:[#allocation2 + $0x268] sm:$0xff]
    %v110 = vld [vmem:[#allocation2 + $0x270] sm:$0xff]
    %v111 = vld [vmem:[#allocation2 + $0x278] sm:$0xff]
    %v112 = vld [vmem:[#allocation2 + $0x280] sm:$0xff]
    %v113 = vld [vmem:[#allocation2 + $0x288] sm:$0xff]
    %v114 = vld [vmem:[#allocation2 + $0x290] sm:$0xff]
    %v115 = vld [vmem:[#allocation2 + $0x298] sm:$0xff]
    %v116 = vld [vmem:[#allocation2 + $0x2a0] sm:$0xff]
    %v117 = vld [vmem:[#allocation2 + $0x2a8] sm:$0xff]
    %v118 = vld [vmem:[#allocation2 + $0x2b0] sm:$0xff]
    %v119 = vld [vmem:[#allocation2 + $0x2b8] sm:$0xff]
    %v120 = vld [vmem:[#allocation2 + $0x2c0] sm:$0xff]
    %v121 = vld [vmem:[#allocation2 + $0x2c8] sm:$0xff]
    %v122 = vld [vmem:[#allocation2 + $0x2d0] sm:$0xff]
    %v123 = vld [vmem:[#allocation2 + $0x2d8] sm:$0xff]
    %v124 = vld [vmem:[#allocation2 + $0x2e0] sm:$0xff]
    %v125 = vld [vmem:[#allocation2 + $0x2e8] sm:$0xff]
    %v126 = vld [vmem:[#allocation2 + $0x2f0] sm:$0xff]
    %v127 = vld [vmem:[#allocation2 + $0x2f8] sm:$0xff]
    %v128 = vld [vmem:[#allocation2 + $0x300] sm:$0xff]
    %v129 = vld [vmem:[#allocation2 + $0x308] sm:$0xff]
    %v130 = vld [vmem:[#allocation2 + $0x310] sm:$0xff]
    %v131 = vld [vmem:[#allocation2 + $0x318] sm:$0xff]
    %v132 = vld [vmem:[#allocation2 + $0x320] sm:$0xff]
    %v133 = vld [vmem:[#allocation2 + $0x328] sm:$0xff]
    %v134 = vld [vmem:[#allocation2 + $0x330] sm:$0xff]
    %v135 = vld [vmem:[#allocation2 + $0x338] sm:$0xff]
    %v136 = vld [vmem:[#allocation2 + $0x340] sm:$0xff]
    %v137 = vld [vmem:[#allocation2 + $0x348] sm:$0xff]
    %v138 = vld [vmem:[#allocation2 + $0x350] sm:$0xff]
    %v139 = vld [vmem:[#allocation2 + $0x358] sm:$0xff]
    %v140 = vld [vmem:[#allocation2 + $0x360] sm:$0xff]
    %v141 = vld [vmem:[#allocation2 + $0x368] sm:$0xff]
    %v142 = vld [vmem:[#allocation2 + $0x370] sm:$0xff]
    %v143 = vld [vmem:[#allocation2 + $0x378] sm:$0xff]
    %v144 = vld [vmem:[#allocation2 + $0x380] sm:$0xff]
    %v145 = vld [vmem:[#allocation2 + $0x388] sm:$0xff]
    %v146 = vld [vmem:[#allocation2 + $0x390] sm:$0xff]
    %v147 = vld [vmem:[#allocation2 + $0x398] sm:$0xff]
    %v148 = vld [vmem:[#allocation2 + $0x3a0] sm:$0xff]
    %v149 = vld [vmem:[#allocation2 + $0x3a8] sm:$0xff]
    %v150 = vld [vmem:[#allocation2 + $0x3b0] sm:$0xff]
    %v151 = vld [vmem:[#allocation2 + $0x3b8] sm:$0xff]
    %v152 = vld [vmem:[#allocation2 + $0x3c0] sm:$0xff]
    %v153 = vld [vmem:[#allocation2 + $0x3c8] sm:$0xff]
    %v154 = vld [vmem:[#allocation2 + $0x3d0] sm:$0xff]
    %v155 = vld [vmem:[#allocation2 + $0x3d8] sm:$0xff]
    %v156 = vld [vmem:[#allocation2 + $0x3e0] sm:$0xff]
    %v157 = vld [vmem:[#allocation2 + $0x3e8] sm:$0xff]
    %v158 = vld [vmem:[#allocation2 + $0x3f0] sm:$0xff]
    %v159 = vld [vmem:[#allocation2 + $0x3f8] sm:$0xff]
    %v160 = vld [vmem:[%s2] sm:$0xff]
    %v162 = vlaneseq
    %v163 = vshrl.u32 %v162, 7
    %v164 = vsub.s32 0, %v163
    %v165 = vrot.slane %v160, %v164
    %v166 = vlaneseq
    %v167 = vshrl.u32 %v166, 7
    %v168 = vsub.s32 1, %v167
    %v169 = vrot.slane %v160, %v168
    %v170 = vlaneseq
    %v171 = vshrl.u32 %v170, 7
    %v172 = vsub.s32 2, %v171
    %v173 = vrot.slane %v160, %v172
    %v174 = vlaneseq
    %v175 = vshrl.u32 %v174, 7
    %v176 = vsub.s32 3, %v175
    %v177 = vrot.slane %v160, %v176
    %v178 = vlaneseq
    %v179 = vshrl.u32 %v178, 7
    %v180 = vsub.s32 4, %v179
    %v181 = vrot.slane %v160, %v180
    %v182 = vlaneseq
    %v183 = vshrl.u32 %v182, 7
    %v184 = vsub.s32 5, %v183
    %v185 = vrot.slane %v160, %v184
    %v186 = vlaneseq
    %v187 = vshrl.u32 %v186, 7
    %v188 = vsub.s32 6, %v187
    %v189 = vrot.slane %v160, %v188
    %v190 = vlaneseq
    %v191 = vshrl.u32 %v190, 7
    %v192 = vsub.s32 7, %v191
    %v193 = vrot.slane %v160, %v192
    %v206 = vunpack.c.l.b16 %v28
    %v207 = vunpack.c.h.b16 %v28
    %v208 = vunpack.c.l.b16 %v29
    %v209 = vunpack.c.h.b16 %v29
    %v210 = vunpack.c.l.b16 %v30
    %v211 = vunpack.c.h.b16 %v30
    %v212 = vunpack.c.l.b16 %v31
    %v213 = vunpack.c.h.b16 %v31
    %v214 = vpack.c.b16 %v208, %v206
    %v215 = vpack.c.b16 %v209, %v207
    %v216 = vpack.c.b16 %v212, %v210
    %v217 = vpack.c.b16 %v213, %v211
    %v350 = vunpack.c.l.b16 %v32
    %v351 = vunpack.c.h.b16 %v32
    %v352 = vunpack.c.l.b16 %v33
    %v353 = vunpack.c.h.b16 %v33
    %v354 = vunpack.c.l.b16 %v34
    %v355 = vunpack.c.h.b16 %v34
    %v356 = vunpack.c.l.b16 %v35
    %v357 = vunpack.c.h.b16 %v35
    %v358 = vunpack.c.l.b16 %v36
    %v359 = vunpack.c.h.b16 %v36
    %v360 = vunpack.c.l.b16 %v37
    %v361 = vunpack.c.h.b16 %v37
    %v362 = vunpack.c.l.b16 %v38
    %v363 = vunpack.c.h.b16 %v38
    %v364 = vunpack.c.l.b16 %v39
    %v365 = vunpack.c.h.b16 %v39
    %v366 = vunpack.c.l.b16 %v40
    %v367 = vunpack.c.h.b16 %v40
    %v368 = vunpack.c.l.b16 %v41
    %v369 = vunpack.c.h.b16 %v41
    %v370 = vunpack.c.l.b16 %v42
    %v371 = vunpack.c.h.b16 %v42
    %v372 = vunpack.c.l.b16 %v43
    %v373 = vunpack.c.h.b16 %v43
    %v374 = vunpack.c.l.b16 %v44
    %v375 = vunpack.c.h.b16 %v44
    %v376 = vunpack.c.l.b16 %v45
    %v377 = vunpack.c.h.b16 %v45
    %v378 = vunpack.c.l.b16 %v46
    %v379 = vunpack.c.h.b16 %v46
    %v380 = vunpack.c.l.b16 %v47
    %v381 = vunpack.c.h.b16 %v47
    %v382 = vunpack.c.l.b16 %v48
    %v383 = vunpack.c.h.b16 %v48
    %v384 = vunpack.c.l.b16 %v49
    %v385 = vunpack.c.h.b16 %v49
    %v386 = vunpack.c.l.b16 %v50
    %v387 = vunpack.c.h.b16 %v50
    %v388 = vunpack.c.l.b16 %v51
    %v389 = vunpack.c.h.b16 %v51
    %v390 = vunpack.c.l.b16 %v52
    %v391 = vunpack.c.h.b16 %v52
    %v392 = vunpack.c.l.b16 %v53
    %v393 = vunpack.c.h.b16 %v53
    %v394 = vunpack.c.l.b16 %v54
    %v395 = vunpack.c.h.b16 %v54
    %v396 = vunpack.c.l.b16 %v55
    %v397 = vunpack.c.h.b16 %v55
    %v398 = vunpack.c.l.b16 %v56
    %v399 = vunpack.c.h.b16 %v56
    %v400 = vunpack.c.l.b16 %v57
    %v401 = vunpack.c.h.b16 %v57
    %v402 = vunpack.c.l.b16 %v58
    %v403 = vunpack.c.h.b16 %v58
    %v404 = vunpack.c.l.b16 %v59
    %v405 = vunpack.c.h.b16 %v59
    %v406 = vunpack.c.l.b16 %v60
    %v407 = vunpack.c.h.b16 %v60
    %v408 = vunpack.c.l.b16 %v61
    %v409 = vunpack.c.h.b16 %v61
    %v410 = vunpack.c.l.b16 %v62
    %v411 = vunpack.c.h.b16 %v62
    %v412 = vunpack.c.l.b16 %v63
    %v413 = vunpack.c.h.b16 %v63
    %v414 = vunpack.c.l.b16 %v64
    %v415 = vunpack.c.h.b16 %v64
    %v416 = vunpack.c.l.b16 %v65
    %v417 = vunpack.c.h.b16 %v65
    %v418 = vunpack.c.l.b16 %v66
    %v419 = vunpack.c.h.b16 %v66
    %v420 = vunpack.c.l.b16 %v67
    %v421 = vunpack.c.h.b16 %v67
    %v422 = vunpack.c.l.b16 %v68
    %v423 = vunpack.c.h.b16 %v68
    %v424 = vunpack.c.l.b16 %v69
    %v425 = vunpack.c.h.b16 %v69
    %v426 = vunpack.c.l.b16 %v70
    %v427 = vunpack.c.h.b16 %v70
    %v428 = vunpack.c.l.b16 %v71
    %v429 = vunpack.c.h.b16 %v71
    %v430 = vunpack.c.l.b16 %v72
    %v431 = vunpack.c.h.b16 %v72
    %v432 = vunpack.c.l.b16 %v73
    %v433 = vunpack.c.h.b16 %v73
    %v434 = vunpack.c.l.b16 %v74
    %v435 = vunpack.c.h.b16 %v74
    %v436 = vunpack.c.l.b16 %v75
    %v437 = vunpack.c.h.b16 %v75
    %v438 = vunpack.c.l.b16 %v76
    %v439 = vunpack.c.h.b16 %v76
    %v440 = vunpack.c.l.b16 %v77
    %v441 = vunpack.c.h.b16 %v77
    %v442 = vunpack.c.l.b16 %v78
    %v443 = vunpack.c.h.b16 %v78
    %v444 = vunpack.c.l.b16 %v79
    %v445 = vunpack.c.h.b16 %v79
    %v446 = vunpack.c.l.b16 %v80
    %v447 = vunpack.c.h.b16 %v80
    %v448 = vunpack.c.l.b16 %v81
    %v449 = vunpack.c.h.b16 %v81
    %v450 = vunpack.c.l.b16 %v82
    %v451 = vunpack.c.h.b16 %v82
    %v452 = vunpack.c.l.b16 %v83
    %v453 = vunpack.c.h.b16 %v83
    %v454 = vunpack.c.l.b16 %v84
    %v455 = vunpack.c.h.b16 %v84
    %v456 = vunpack.c.l.b16 %v85
    %v457 = vunpack.c.h.b16 %v85
    %v458 = vunpack.c.l.b16 %v86
    %v459 = vunpack.c.h.b16 %v86
    %v460 = vunpack.c.l.b16 %v87
    %v461 = vunpack.c.h.b16 %v87
    %v462 = vunpack.c.l.b16 %v88
    %v463 = vunpack.c.h.b16 %v88
    %v464 = vunpack.c.l.b16 %v89
    %v465 = vunpack.c.h.b16 %v89
    %v466 = vunpack.c.l.b16 %v90
    %v467 = vunpack.c.h.b16 %v90
    %v468 = vunpack.c.l.b16 %v91
    %v469 = vunpack.c.h.b16 %v91
    %v470 = vunpack.c.l.b16 %v92
    %v471 = vunpack.c.h.b16 %v92
    %v472 = vunpack.c.l.b16 %v93
    %v473 = vunpack.c.h.b16 %v93
    %v474 = vunpack.c.l.b16 %v94
    %v475 = vunpack.c.h.b16 %v94
    %v476 = vunpack.c.l.b16 %v95
    %v477 = vunpack.c.h.b16 %v95
    %v478 = vunpack.c.l.b16 %v96
    %v479 = vunpack.c.h.b16 %v96
    %v480 = vunpack.c.l.b16 %v97
    %v481 = vunpack.c.h.b16 %v97
    %v482 = vunpack.c.l.b16 %v98
    %v483 = vunpack.c.h.b16 %v98
    %v484 = vunpack.c.l.b16 %v99
    %v485 = vunpack.c.h.b16 %v99
    %v486 = vunpack.c.l.b16 %v100
    %v487 = vunpack.c.h.b16 %v100
    %v488 = vunpack.c.l.b16 %v101
    %v489 = vunpack.c.h.b16 %v101
    %v490 = vunpack.c.l.b16 %v102
    %v491 = vunpack.c.h.b16 %v102
    %v492 = vunpack.c.l.b16 %v103
    %v493 = vunpack.c.h.b16 %v103
    %v494 = vunpack.c.l.b16 %v104
    %v495 = vunpack.c.h.b16 %v104
    %v496 = vunpack.c.l.b16 %v105
    %v497 = vunpack.c.h.b16 %v105
    %v498 = vunpack.c.l.b16 %v106
    %v499 = vunpack.c.h.b16 %v106
    %v500 = vunpack.c.l.b16 %v107
    %v501 = vunpack.c.h.b16 %v107
    %v502 = vunpack.c.l.b16 %v108
    %v503 = vunpack.c.h.b16 %v108
    %v504 = vunpack.c.l.b16 %v109
    %v505 = vunpack.c.h.b16 %v109
    %v506 = vunpack.c.l.b16 %v110
    %v507 = vunpack.c.h.b16 %v110
    %v508 = vunpack.c.l.b16 %v111
    %v509 = vunpack.c.h.b16 %v111
    %v510 = vunpack.c.l.b16 %v112
    %v511 = vunpack.c.h.b16 %v112
    %v512 = vunpack.c.l.b16 %v113
    %v513 = vunpack.c.h.b16 %v113
    %v514 = vunpack.c.l.b16 %v114
    %v515 = vunpack.c.h.b16 %v114
    %v516 = vunpack.c.l.b16 %v115
    %v517 = vunpack.c.h.b16 %v115
    %v518 = vunpack.c.l.b16 %v116
    %v519 = vunpack.c.h.b16 %v116
    %v520 = vunpack.c.l.b16 %v117
    %v521 = vunpack.c.h.b16 %v117
    %v522 = vunpack.c.l.b16 %v118
    %v523 = vunpack.c.h.b16 %v118
    %v524 = vunpack.c.l.b16 %v119
    %v525 = vunpack.c.h.b16 %v119
    %v526 = vunpack.c.l.b16 %v120
    %v527 = vunpack.c.h.b16 %v120
    %v528 = vunpack.c.l.b16 %v121
    %v529 = vunpack.c.h.b16 %v121
    %v530 = vunpack.c.l.b16 %v122
    %v531 = vunpack.c.h.b16 %v122
    %v532 = vunpack.c.l.b16 %v123
    %v533 = vunpack.c.h.b16 %v123
    %v534 = vunpack.c.l.b16 %v124
    %v535 = vunpack.c.h.b16 %v124
    %v536 = vunpack.c.l.b16 %v125
    %v537 = vunpack.c.h.b16 %v125
    %v538 = vunpack.c.l.b16 %v126
    %v539 = vunpack.c.h.b16 %v126
    %v540 = vunpack.c.l.b16 %v127
    %v541 = vunpack.c.h.b16 %v127
    %v542 = vunpack.c.l.b16 %v128
    %v543 = vunpack.c.h.b16 %v128
    %v544 = vunpack.c.l.b16 %v129
    %v545 = vunpack.c.h.b16 %v129
    %v546 = vunpack.c.l.b16 %v130
    %v547 = vunpack.c.h.b16 %v130
    %v548 = vunpack.c.l.b16 %v131
    %v549 = vunpack.c.h.b16 %v131
    %v550 = vunpack.c.l.b16 %v132
    %v551 = vunpack.c.h.b16 %v132
    %v552 = vunpack.c.l.b16 %v133
    %v553 = vunpack.c.h.b16 %v133
    %v554 = vunpack.c.l.b16 %v134
    %v555 = vunpack.c.h.b16 %v134
    %v556 = vunpack.c.l.b16 %v135
    %v557 = vunpack.c.h.b16 %v135
    %v558 = vunpack.c.l.b16 %v136
    %v559 = vunpack.c.h.b16 %v136
    %v560 = vunpack.c.l.b16 %v137
    %v561 = vunpack.c.h.b16 %v137
    %v562 = vunpack.c.l.b16 %v138
    %v563 = vunpack.c.h.b16 %v138
    %v564 = vunpack.c.l.b16 %v139
    %v565 = vunpack.c.h.b16 %v139
    %v566 = vunpack.c.l.b16 %v140
    %v567 = vunpack.c.h.b16 %v140
    %v568 = vunpack.c.l.b16 %v141
    %v569 = vunpack.c.h.b16 %v141
    %v570 = vunpack.c.l.b16 %v142
    %v571 = vunpack.c.h.b16 %v142
    %v572 = vunpack.c.l.b16 %v143
    %v573 = vunpack.c.h.b16 %v143
    %v574 = vunpack.c.l.b16 %v144
    %v575 = vunpack.c.h.b16 %v144
    %v576 = vunpack.c.l.b16 %v145
    %v577 = vunpack.c.h.b16 %v145
    %v578 = vunpack.c.l.b16 %v146
    %v579 = vunpack.c.h.b16 %v146
    %v580 = vunpack.c.l.b16 %v147
    %v581 = vunpack.c.h.b16 %v147
    %v582 = vunpack.c.l.b16 %v148
    %v583 = vunpack.c.h.b16 %v148
    %v584 = vunpack.c.l.b16 %v149
    %v585 = vunpack.c.h.b16 %v149
    %v586 = vunpack.c.l.b16 %v150
    %v587 = vunpack.c.h.b16 %v150
    %v588 = vunpack.c.l.b16 %v151
    %v589 = vunpack.c.h.b16 %v151
    %v590 = vunpack.c.l.b16 %v152
    %v591 = vunpack.c.h.b16 %v152
    %v592 = vunpack.c.l.b16 %v153
    %v593 = vunpack.c.h.b16 %v153
    %v594 = vunpack.c.l.b16 %v154
    %v595 = vunpack.c.h.b16 %v154
    %v596 = vunpack.c.l.b16 %v155
    %v597 = vunpack.c.h.b16 %v155
    %v598 = vunpack.c.l.b16 %v156
    %v599 = vunpack.c.h.b16 %v156
    %v600 = vunpack.c.l.b16 %v157
    %v601 = vunpack.c.h.b16 %v157
    %v602 = vunpack.c.l.b16 %v158
    %v603 = vunpack.c.h.b16 %v158
    %v604 = vunpack.c.l.b16 %v159
    %v605 = vunpack.c.h.b16 %v159
    %v606 = vpack.c.b16 %v358, %v350
    %v607 = vpack.c.b16 %v359, %v351
    %v608 = vpack.c.b16 %v360, %v352
    %v609 = vpack.c.b16 %v361, %v353
    %v610 = vpack.c.b16 %v362, %v354
    %v611 = vpack.c.b16 %v363, %v355
    %v612 = vpack.c.b16 %v364, %v356
    %v613 = vpack.c.b16 %v365, %v357
    %v614 = vpack.c.b16 %v374, %v366
    %v615 = vpack.c.b16 %v375, %v367
    %v616 = vpack.c.b16 %v376, %v368
    %v617 = vpack.c.b16 %v377, %v369
    %v618 = vpack.c.b16 %v378, %v370
    %v619 = vpack.c.b16 %v379, %v371
    %v620 = vpack.c.b16 %v380, %v372
    %v621 = vpack.c.b16 %v381, %v373
    %v622 = vpack.c.b16 %v390, %v382
    %v623 = vpack.c.b16 %v391, %v383
    %v624 = vpack.c.b16 %v392, %v384
    %v625 = vpack.c.b16 %v393, %v385
    %v626 = vpack.c.b16 %v394, %v386
    %v627 = vpack.c.b16 %v395, %v387
    %v628 = vpack.c.b16 %v396, %v388
    %v629 = vpack.c.b16 %v397, %v389
    %v630 = vpack.c.b16 %v406, %v398
    %v631 = vpack.c.b16 %v407, %v399
    %v632 = vpack.c.b16 %v408, %v400
    %v633 = vpack.c.b16 %v409, %v401
    %v634 = vpack.c.b16 %v410, %v402
    %v635 = vpack.c.b16 %v411, %v403
    %v636 = vpack.c.b16 %v412, %v404
    %v637 = vpack.c.b16 %v413, %v405
    %v638 = vpack.c.b16 %v422, %v414
    %v639 = vpack.c.b16 %v423, %v415
    %v640 = vpack.c.b16 %v424, %v416
    %v641 = vpack.c.b16 %v425, %v417
    %v642 = vpack.c.b16 %v426, %v418
    %v643 = vpack.c.b16 %v427, %v419
    %v644 = vpack.c.b16 %v428, %v420
    %v645 = vpack.c.b16 %v429, %v421
    %v646 = vpack.c.b16 %v438, %v430
    %v647 = vpack.c.b16 %v439, %v431
    %v648 = vpack.c.b16 %v440, %v432
    %v649 = vpack.c.b16 %v441, %v433
    %v650 = vpack.c.b16 %v442, %v434
    %v651 = vpack.c.b16 %v443, %v435
    %v652 = vpack.c.b16 %v444, %v436
    %v653 = vpack.c.b16 %v445, %v437
    %v654 = vpack.c.b16 %v454, %v446
    %v655 = vpack.c.b16 %v455, %v447
    %v656 = vpack.c.b16 %v456, %v448
    %v657 = vpack.c.b16 %v457, %v449
    %v658 = vpack.c.b16 %v458, %v450
    %v659 = vpack.c.b16 %v459, %v451
    %v660 = vpack.c.b16 %v460, %v452
    %v661 = vpack.c.b16 %v461, %v453
    %v662 = vpack.c.b16 %v470, %v462
    %v663 = vpack.c.b16 %v471, %v463
    %v664 = vpack.c.b16 %v472, %v464
    %v665 = vpack.c.b16 %v473, %v465
    %v666 = vpack.c.b16 %v474, %v466
    %v667 = vpack.c.b16 %v475, %v467
    %v668 = vpack.c.b16 %v476, %v468
    %v669 = vpack.c.b16 %v477, %v469
    %v670 = vpack.c.b16 %v486, %v478
    %v671 = vpack.c.b16 %v487, %v479
    %v672 = vpack.c.b16 %v488, %v480
    %v673 = vpack.c.b16 %v489, %v481
    %v674 = vpack.c.b16 %v490, %v482
    %v675 = vpack.c.b16 %v491, %v483
    %v676 = vpack.c.b16 %v492, %v484
    %v677 = vpack.c.b16 %v493, %v485
    %v678 = vpack.c.b16 %v502, %v494
    %v679 = vpack.c.b16 %v503, %v495
    %v680 = vpack.c.b16 %v504, %v496
    %v681 = vpack.c.b16 %v505, %v497
    %v682 = vpack.c.b16 %v506, %v498
    %v683 = vpack.c.b16 %v507, %v499
    %v684 = vpack.c.b16 %v508, %v500
    %v685 = vpack.c.b16 %v509, %v501
    %v686 = vpack.c.b16 %v518, %v510
    %v687 = vpack.c.b16 %v519, %v511
    %v688 = vpack.c.b16 %v520, %v512
    %v689 = vpack.c.b16 %v521, %v513
    %v690 = vpack.c.b16 %v522, %v514
    %v691 = vpack.c.b16 %v523, %v515
    %v692 = vpack.c.b16 %v524, %v516
    %v693 = vpack.c.b16 %v525, %v517
    %v694 = vpack.c.b16 %v534, %v526
    %v695 = vpack.c.b16 %v535, %v527
    %v696 = vpack.c.b16 %v536, %v528
    %v697 = vpack.c.b16 %v537, %v529
    %v698 = vpack.c.b16 %v538, %v530
    %v699 = vpack.c.b16 %v539, %v531
    %v700 = vpack.c.b16 %v540, %v532
    %v701 = vpack.c.b16 %v541, %v533
    %v702 = vpack.c.b16 %v550, %v542
    %v703 = vpack.c.b16 %v551, %v543
    %v704 = vpack.c.b16 %v552, %v544
    %v705 = vpack.c.b16 %v553, %v545
    %v706 = vpack.c.b16 %v554, %v546
    %v707 = vpack.c.b16 %v555, %v547
    %v708 = vpack.c.b16 %v556, %v548
    %v709 = vpack.c.b16 %v557, %v549
    %v710 = vpack.c.b16 %v566, %v558
    %v711 = vpack.c.b16 %v567, %v559
    %v712 = vpack.c.b16 %v568, %v560
    %v713 = vpack.c.b16 %v569, %v561
    %v714 = vpack.c.b16 %v570, %v562
    %v715 = vpack.c.b16 %v571, %v563
    %v716 = vpack.c.b16 %v572, %v564
    %v717 = vpack.c.b16 %v573, %v565
    %v718 = vpack.c.b16 %v582, %v574
    %v719 = vpack.c.b16 %v583, %v575
    %v720 = vpack.c.b16 %v584, %v576
    %v721 = vpack.c.b16 %v585, %v577
    %v722 = vpack.c.b16 %v586, %v578
    %v723 = vpack.c.b16 %v587, %v579
    %v724 = vpack.c.b16 %v588, %v580
    %v725 = vpack.c.b16 %v589, %v581
    %v726 = vpack.c.b16 %v598, %v590
    %v727 = vpack.c.b16 %v599, %v591
    %v728 = vpack.c.b16 %v600, %v592
    %v729 = vpack.c.b16 %v601, %v593
    %v730 = vpack.c.b16 %v602, %v594
    %v731 = vpack.c.b16 %v603, %v595
    %v732 = vpack.c.b16 %v604, %v596
    %v733 = vpack.c.b16 %v605, %v597
    %862 = vmatprep.subr.bf16.mxu0 %v607
    %863 = vmatpush1.bf16.msra.mxu0 %v606
    %864 = vmatprep.subr.bf16.mxu0 %v615
    %865 = vmatpush1.bf16.msra.mxu0 %v614
    %866 = vmatprep.subr.bf16.mxu0 %v623
    %867 = vmatpush1.bf16.msra.mxu0 %v622
    %868 = vmatprep.subr.bf16.mxu0 %v631
    %869 = vmatpush1.bf16.msra.mxu0 %v630
    %870 = vmatprep.subr.bf16.mxu0 %v639
    %871 = vmatpush1.bf16.msra.mxu0 %v638
    %872 = vmatprep.subr.bf16.mxu0 %v647
    %873 = vmatpush1.bf16.msra.mxu0 %v646
    %874 = vmatprep.subr.bf16.mxu0 %v655
    %875 = vmatpush1.bf16.msra.mxu0 %v654
    %876 = vmatprep.subr.bf16.mxu0 %v663
    %877 = vmatpush1.bf16.msra.mxu0 %v662
    %878 = vmatprep.subr.bf16.mxu0 %v671
    %879 = vmatpush1.bf16.msra.mxu0 %v670
    %880 = vmatprep.subr.bf16.mxu0 %v679
    %881 = vmatpush1.bf16.msra.mxu0 %v678
    %882 = vmatprep.subr.bf16.mxu0 %v687
    %883 = vmatpush1.bf16.msra.mxu0 %v686
    %884 = vmatprep.subr.bf16.mxu0 %v695
    %885 = vmatpush1.bf16.msra.mxu0 %v694
    %886 = vmatprep.subr.bf16.mxu0 %v703
    %887 = vmatpush1.bf16.msra.mxu0 %v702
    %888 = vmatprep.subr.bf16.mxu0 %v711
    %889 = vmatpush1.bf16.msra.mxu0 %v710
    %890 = vmatprep.subr.bf16.mxu0 %v719
    %891 = vmatpush1.bf16.msra.mxu0 %v718
    %892 = vmatprep.subr.bf16.mxu0 %v727
    %893 = vmatpush1.bf16.msra.mxu0 %v726
    %894 = vmatprep.mubr.bf16.mxu0 %v215
    %895 = vmatmul.mubr.bf16.gmra.mrb[0].mxu0 %v214
    %v896 = vpop.f32.mrb[0].mxu0
    %v897 = vadd.f32 %v165, %v896
    %v898 = vpop.f32.mrb[0].mxu0
    %v899 = vadd.f32 %v169, %v898
    %v900 = vpop.f32.mrb[0].mxu0
    %v901 = vadd.f32 %v165, %v900
    %v902 = vpop.f32.mrb[0].mxu0
    %v903 = vadd.f32 %v169, %v902
    %904 = vmatprep.mubr.bf16.mxu0 %v217
    %905 = vmatmul.mubr.bf16.gmra.mrb[0].mxu0 %v216
    %v906 = vpop.f32.mrb[0].mxu0
    %v907 = vadd.f32 %v165, %v906
    %v908 = vpop.f32.mrb[0].mxu0
    %v909 = vadd.f32 %v169, %v908
    %v910 = vpop.f32.mrb[0].mxu0
    %v911 = vadd.f32 %v165, %v910
    %v912 = vpop.f32.mrb[0].mxu0
    %v913 = vadd.f32 %v169, %v912
    %914 = vdwg.mxu0
    %915 = vmatprep.subr.bf16.mxu0 %v609
    %916 = vmatpush1.bf16.msra.mxu0 %v608
    %917 = vmatprep.subr.bf16.mxu0 %v617
    %918 = vmatpush1.bf16.msra.mxu0 %v616
    %919 = vmatprep.subr.bf16.mxu0 %v625
    %920 = vmatpush1.bf16.msra.mxu0 %v624
    %921 = vmatprep.subr.bf16.mxu0 %v633
    %922 = vmatpush1.bf16.msra.mxu0 %v632
    %923 = vmatprep.subr.bf16.mxu0 %v641
    %924 = vmatpush1.bf16.msra.mxu0 %v640
    %925 = vmatprep.subr.bf16.mxu0 %v649
    %926 = vmatpush1.bf16.msra.mxu0 %v648
    %927 = vmatprep.subr.bf16.mxu0 %v657
    %928 = vmatpush1.bf16.msra.mxu0 %v656
    %929 = vmatprep.subr.bf16.mxu0 %v665
    %930 = vmatpush1.bf16.msra.mxu0 %v664
    %931 = vmatprep.subr.bf16.mxu0 %v673
    %932 = vmatpush1.bf16.msra.mxu0 %v672
    %933 = vmatprep.subr.bf16.mxu0 %v681
    %934 = vmatpush1.bf16.msra.mxu0 %v680
    %935 = vmatprep.subr.bf16.mxu0 %v689
    %936 = vmatpush1.bf16.msra.mxu0 %v688
    %937 = vmatprep.subr.bf16.mxu0 %v697
    %938 = vmatpush1.bf16.msra.mxu0 %v696
    %939 = vmatprep.subr.bf16.mxu0 %v705
    %940 = vmatpush1.bf16.msra.mxu0 %v704
    %941 = vmatprep.subr.bf16.mxu0 %v713
    %942 = vmatpush1.bf16.msra.mxu0 %v712
    %943 = vmatprep.subr.bf16.mxu0 %v721
    %944 = vmatpush1.bf16.msra.mxu0 %v720
    %945 = vmatprep.subr.bf16.mxu0 %v729
    %946 = vmatpush1.bf16.msra.mxu0 %v728
    %947 = vmatprep.mubr.bf16.mxu0 %v215
    %948 = vmatmul.mubr.bf16.gmra.mrb[0].mxu0 %v214
    %v949 = vpop.f32.mrb[0].mxu0
    %v950 = vadd.f32 %v173, %v949
    %v951 = vpop.f32.mrb[0].mxu0
    %v952 = vadd.f32 %v177, %v951
    %v953 = vpop.f32.mrb[0].mxu0
    %v954 = vadd.f32 %v173, %v953
    %v955 = vpop.f32.mrb[0].mxu0
    %v956 = vadd.f32 %v177, %v955
    %957 = vmatprep.mubr.bf16.mxu0 %v217
    %958 = vmatmul.mubr.bf16.gmra.mrb[0].mxu0 %v216
    %v959 = vpop.f32.mrb[0].mxu0
    %v960 = vadd.f32 %v173, %v959
    %v961 = vpop.f32.mrb[0].mxu0
    %v962 = vadd.f32 %v177, %v961
    %v963 = vpop.f32.mrb[0].mxu0
    %v964 = vadd.f32 %v173, %v963
    %v965 = vpop.f32.mrb[0].mxu0
    %v966 = vadd.f32 %v177, %v965
    %967 = vdwg.mxu0
    %968 = vmatprep.subr.bf16.mxu0 %v611
    %969 = vmatpush1.bf16.msra.mxu0 %v610
    %970 = vmatprep.subr.bf16.mxu0 %v619
    %971 = vmatpush1.bf16.msra.mxu0 %v618
    %972 = vmatprep.subr.bf16.mxu0 %v627
    %973 = vmatpush1.bf16.msra.mxu0 %v626
    %974 = vmatprep.subr.bf16.mxu0 %v635
    %975 = vmatpush1.bf16.msra.mxu0 %v634
    %976 = vmatprep.subr.bf16.mxu0 %v643
    %977 = vmatpush1.bf16.msra.mxu0 %v642
    %978 = vmatprep.subr.bf16.mxu0 %v651
    %979 = vmatpush1.bf16.msra.mxu0 %v650
    %980 = vmatprep.subr.bf16.mxu0 %v659
    %981 = vmatpush1.bf16.msra.mxu0 %v658
    %982 = vmatprep.subr.bf16.mxu0 %v667
    %983 = vmatpush1.bf16.msra.mxu0 %v666
    %984 = vmatprep.subr.bf16.mxu0 %v675
    %985 = vmatpush1.bf16.msra.mxu0 %v674
    %986 = vmatprep.subr.bf16.mxu0 %v683
    %987 = vmatpush1.bf16.msra.mxu0 %v682
    %988 = vmatprep.subr.bf16.mxu0 %v691
    %989 = vmatpush1.bf16.msra.mxu0 %v690
    %990 = vmatprep.subr.bf16.mxu0 %v699
    %991 = vmatpush1.bf16.msra.mxu0 %v698
    %992 = vmatprep.subr.bf16.mxu0 %v707
    %993 = vmatpush1.bf16.msra.mxu0 %v706
    %994 = vmatprep.subr.bf16.mxu0 %v715
    %995 = vmatpush1.bf16.msra.mxu0 %v714
    %996 = vmatprep.subr.bf16.mxu0 %v723
    %997 = vmatpush1.bf16.msra.mxu0 %v722
    %998 = vmatprep.subr.bf16.mxu0 %v731
    %999 = vmatpush1.bf16.msra.mxu0 %v730
    %1000 = vmatprep.mubr.bf16.mxu0 %v215
    %1001 = vmatmul.mubr.bf16.gmra.mrb[0].mxu0 %v214
    %v1002 = vpop.f32.mrb[0].mxu0
    %v1003 = vadd.f32 %v181, %v1002
    %v1004 = vpop.f32.mrb[0].mxu0
    %v1005 = vadd.f32 %v185, %v1004
    %v1006 = vpop.f32.mrb[0].mxu0
    %v1007 = vadd.f32 %v181, %v1006
    %v1008 = vpop.f32.mrb[0].mxu0
    %v1009 = vadd.f32 %v185, %v1008
    %1010 = vmatprep.mubr.bf16.mxu0 %v217
    %1011 = vmatmul.mubr.bf16.gmra.mrb[0].mxu0 %v216
    %v1012 = vpop.f32.mrb[0].mxu0
    %v1013 = vadd.f32 %v181, %v1012
    %v1014 = vpop.f32.mrb[0].mxu0
    %v1015 = vadd.f32 %v185, %v1014
    %v1016 = vpop.f32.mrb[0].mxu0
    %v1017 = vadd.f32 %v181, %v1016
    %v1018 = vpop.f32.mrb[0].mxu0
    %v1019 = vadd.f32 %v185, %v1018
    %1020 = vdwg.mxu0
    %1021 = vmatprep.subr.bf16.mxu0 %v613
    %1022 = vmatpush1.bf16.msra.mxu0 %v612
    %1023 = vmatprep.subr.bf16.mxu0 %v621
    %1024 = vmatpush1.bf16.msra.mxu0 %v620
    %1025 = vmatprep.subr.bf16.mxu0 %v629
    %1026 = vmatpush1.bf16.msra.mxu0 %v628
    %1027 = vmatprep.subr.bf16.mxu0 %v637
    %1028 = vmatpush1.bf16.msra.mxu0 %v636
    %1029 = vmatprep.subr.bf16.mxu0 %v645
    %1030 = vmatpush1.bf16.msra.mxu0 %v644
    %1031 = vmatprep.subr.bf16.mxu0 %v653
    %1032 = vmatpush1.bf16.msra.mxu0 %v652
    %1033 = vmatprep.subr.bf16.mxu0 %v661
    %1034 = vmatpush1.bf16.msra.mxu0 %v660
    %1035 = vmatprep.subr.bf16.mxu0 %v669
    %1036 = vmatpush1.bf16.msra.mxu0 %v668
    %1037 = vmatprep.subr.bf16.mxu0 %v677
    %1038 = vmatpush1.bf16.msra.mxu0 %v676
    %1039 = vmatprep.subr.bf16.mxu0 %v685
    %1040 = vmatpush1.bf16.msra.mxu0 %v684
    %1041 = vmatprep.subr.bf16.mxu0 %v693
    %1042 = vmatpush1.bf16.msra.mxu0 %v692
    %1043 = vmatprep.subr.bf16.mxu0 %v701
    %1044 = vmatpush1.bf16.msra.mxu0 %v700
    %1045 = vmatprep.subr.bf16.mxu0 %v709
    %1046 = vmatpush1.bf16.msra.mxu0 %v708
    %1047 = vmatprep.subr.bf16.mxu0 %v717
    %1048 = vmatpush1.bf16.msra.mxu0 %v716
    %1049 = vmatprep.subr.bf16.mxu0 %v725
    %1050 = vmatpush1.bf16.msra.mxu0 %v724
    %1051 = vmatprep.subr.bf16.mxu0 %v733
    %1052 = vmatpush1.bf16.msra.mxu0 %v732
    %1053 = vmatprep.mubr.bf16.mxu0 %v215
    %1054 = vmatmul.mubr.bf16.gmra.mrb[0].mxu0 %v214
    %v1055 = vpop.f32.mrb[0].mxu0
    %v1056 = vadd.f32 %v189, %v1055
    %v1057 = vpop.f32.mrb[0].mxu0
    %v1058 = vadd.f32 %v193, %v1057
    %v1059 = vpop.f32.mrb[0].mxu0
    %v1060 = vadd.f32 %v189, %v1059
    %v1061 = vpop.f32.mrb[0].mxu0
    %v1062 = vadd.f32 %v193, %v1061
    %1063 = vmatprep.mubr.bf16.mxu0 %v217
    %1064 = vmatmul.mubr.bf16.gmra.mrb[0].mxu0 %v216
    %v1065 = vpop.f32.mrb[0].mxu0
    %v1066 = vadd.f32 %v189, %v1065
    %v1067 = vpop.f32.mrb[0].mxu0
    %v1068 = vadd.f32 %v193, %v1067
    %v1069 = vpop.f32.mrb[0].mxu0
    %v1070 = vadd.f32 %v189, %v1069
    %v1071 = vpop.f32.mrb[0].mxu0
    %v1072 = vadd.f32 %v193, %v1071
    %1073 = vdwg.mxu0
    %1074 = vst [vmem:[%s3] sm:$0xff] %v897
    %1075 = vst [vmem:[%s3 + $0x8] sm:$0xff] %v899
    %1076 = vst [vmem:[%s3 + $0x10] sm:$0xff] %v950
    %1077 = vst [vmem:[%s3 + $0x18] sm:$0xff] %v952
    %1078 = vst [vmem:[%s3 + $0x20] sm:$0xff] %v1003
    %1079 = vst [vmem:[%s3 + $0x28] sm:$0xff] %v1005
    %1080 = vst [vmem:[%s3 + $0x30] sm:$0xff] %v1056
    %1081 = vst [vmem:[%s3 + $0x38] sm:$0xff] %v1058
    %1082 = vst [vmem:[%s3 + $0x40] sm:$0xff] %v901
    %1083 = vst [vmem:[%s3 + $0x48] sm:$0xff] %v903
    %1084 = vst [vmem:[%s3 + $0x50] sm:$0xff] %v954
    %1085 = vst [vmem:[%s3 + $0x58] sm:$0xff] %v956
    %1086 = vst [vmem:[%s3 + $0x60] sm:$0xff] %v1007
    %1087 = vst [vmem:[%s3 + $0x68] sm:$0xff] %v1009
    %1088 = vst [vmem:[%s3 + $0x70] sm:$0xff] %v1060
    %1089 = vst [vmem:[%s3 + $0x78] sm:$0xff] %v1062
    %1090 = vst [vmem:[%s3 + $0x80] sm:$0xff] %v907
    %1091 = vst [vmem:[%s3 + $0x88] sm:$0xff] %v909
    %1092 = vst [vmem:[%s3 + $0x90] sm:$0xff] %v960
    %1093 = vst [vmem:[%s3 + $0x98] sm:$0xff] %v962
    %1094 = vst [vmem:[%s3 + $0xa0] sm:$0xff] %v1013
    %1095 = vst [vmem:[%s3 + $0xa8] sm:$0xff] %v1015
    %1096 = vst [vmem:[%s3 + $0xb0] sm:$0xff] %v1066
    %1097 = vst [vmem:[%s3 + $0xb8] sm:$0xff] %v1068
    %1098 = vst [vmem:[%s3 + $0xc0] sm:$0xff] %v911
    %1099 = vst [vmem:[%s3 + $0xc8] sm:$0xff] %v913
    %1100 = vst [vmem:[%s3 + $0xd0] sm:$0xff] %v964
    %1101 = vst [vmem:[%s3 + $0xd8] sm:$0xff] %v966
    %1102 = vst [vmem:[%s3 + $0xe0] sm:$0xff] %v1017
    %1103 = vst [vmem:[%s3 + $0xe8] sm:$0xff] %v1019
    %1104 = vst [vmem:[%s3 + $0xf0] sm:$0xff] %v1070
    %1105 = vst [vmem:[%s3 + $0xf8] sm:$0xff] %v1072
    // Predicated region
    $region18: #{net_forward.7} parent=1 // pred_check
      _
    $region19: #{net_forward.7} parent=1 // pred_check_branch
      %1107 = sbr.rel (0) target = $region21
    $region20: #{net_forward.7} parent=1 // pred_region
      _
    $region21: #{net_forward.7} parent=1 // pred_fallthru
      _
    // Predicated region
    $region22: #{net_forward.7} parent=1 // pred_check
      _
    $region23: #{net_forward.7} parent=1 // pred_check_branch
      %1109 = sbr.rel (0) target = $region25
    $region24: #{net_forward.7} parent=1 // pred_region
      _
    $region25: #{net_forward.7} parent=1 // pred_fallthru
      _
    %1110 = vsyncpa [#allocation3], 1

// kernel: net_forward.9
$region0: #{net_forward.9}
  #allocation0 [shape = 'u32[]', space=smem, size = 0x4, offset = 0x4, fixed_abs, tag = 'smem constant byte address 0x4 - core index']
  #allocation1 [shape = 'u32[144,128]{1,0:T(1,128)}', space=vmem, size = 0x12000, scoped, tag = 'internal scratch']
  %s0 = inlined_call_operand.vmem [shape: bf16[32,256], index: 0, kind: input, shape index: {}]
  %s1 = inlined_call_operand.vmem [shape: bf16[256,1024], index: 1, kind: input, shape index: {}]
  %s2 = inlined_call_operand.vmem [shape: f32[1,1024], index: 2, kind: input, shape index: {}]
  %s3 = inlined_call_operand.vmem [shape: f32[32,1024], index: 3, kind: output, shape index: {}]
  %s4 = sld [smem:[#allocation0]]
  $region22: #{net_forward.9} parent=0
    _
  %s6 = ssub.s32 1, %s4
  %s7 = scalar_select 0, %s6, %s4
  // Predicated region
  $region2: #{net_forward.9} parent=0 // pred_check
    _
  $region3: #{net_forward.9} parent=0 // pred_check_branch
    %9 = sbr.rel (0) target = $region5
  $region4: #{net_forward.9} parent=0 // pred_region
    _
  $region5: #{net_forward.9} parent=0 // pred_fallthru
    _
  // Predicated region
  $region6: #{net_forward.9} parent=0 // pred_check
    _
  $region7: #{net_forward.9} parent=0 // pred_check_branch
    %11 = sbr.rel (0) target = $region9
  $region8: #{net_forward.9} parent=0 // pred_region
    _
  $region9: #{net_forward.9} parent=0 // pred_fallthru
    _
  // Predicated region
  $region10: #{net_forward.9} parent=0 // pred_check
    _
  $region11: #{net_forward.9} parent=0 // pred_check_branch
    %13 = sbr.rel (0) target = $region13
  $region12: #{net_forward.9} parent=0 // pred_region
    _
  $region13: #{net_forward.9} parent=0 // pred_fallthru
    _
  %v14 = vld [vmem:[%s0] sm:$0xff]
  %v15 = vld [vmem:[%s0 + $0x8] sm:$0xff]
  %v16 = vld [vmem:[%s0 + $0x10] sm:$0xff]
  %v17 = vld [vmem:[%s0 + $0x18] sm:$0xff]
  %v18 = vld [vmem:[%s1] sm:$0xff]
  %v19 = vld [vmem:[%s1 + $0x8] sm:$0xff]
  %v20 = vld [vmem:[%s1 + $0x10] sm:$0xff]
  %v21 = vld [vmem:[%s1 + $0x18] sm:$0xff]
  %v22 = vld [vmem:[%s1 + $0x20] sm:$0xff]
  %v23 = vld [vmem:[%s1 + $0x28] sm:$0xff]
  %v24 = vld [vmem:[%s1 + $0x30] sm:$0xff]
  %v25 = vld [vmem:[%s1 + $0x38] sm:$0xff]
  %v26 = vld [vmem:[%s1 + $0x40] sm:$0xff]
  %v27 = vld [vmem:[%s1 + $0x48] sm:$0xff]
  %v28 = vld [vmem:[%s1 + $0x50] sm:$0xff]
  %v29 = vld [vmem:[%s1 + $0x58] sm:$0xff]
  %v30 = vld [vmem:[%s1 + $0x60] sm:$0xff]
  %v31 = vld [vmem:[%s1 + $0x68] sm:$0xff]
  %v32 = vld [vmem:[%s1 + $0x70] sm:$0xff]
  %v33 = vld [vmem:[%s1 + $0x78] sm:$0xff]
  %v34 = vld [vmem:[%s1 + $0x80] sm:$0xff]
  %v35 = vld [vmem:[%s1 + $0x88] sm:$0xff]
  %v36 = vld [vmem:[%s1 + $0x90] sm:$0xff]
  %v37 = vld [vmem:[%s1 + $0x98] sm:$0xff]
  %v38 = vld [vmem:[%s1 + $0xa0] sm:$0xff]
  %v39 = vld [vmem:[%s1 + $0xa8] sm:$0xff]
  %v40 = vld [vmem:[%s1 + $0xb0] sm:$0xff]
  %v41 = vld [vmem:[%s1 + $0xb8] sm:$0xff]
  %v42 = vld [vmem:[%s1 + $0xc0] sm:$0xff]
  %v43 = vld [vmem:[%s1 + $0xc8] sm:$0xff]
  %v44 = vld [vmem:[%s1 + $0xd0] sm:$0xff]
  %v45 = vld [vmem:[%s1 + $0xd8] sm:$0xff]
  %v46 = vld [vmem:[%s1 + $0xe0] sm:$0xff]
  %v47 = vld [vmem:[%s1 + $0xe8] sm:$0xff]
  %v48 = vld [vmem:[%s1 + $0xf0] sm:$0xff]
  %v49 = vld [vmem:[%s1 + $0xf8] sm:$0xff]
  %v50 = vld [vmem:[%s1 + $0x100] sm:$0xff]
  %v51 = vld [vmem:[%s1 + $0x108] sm:$0xff]
  %v52 = vld [vmem:[%s1 + $0x110] sm:$0xff]
  %v53 = vld [vmem:[%s1 + $0x118] sm:$0xff]
  %v54 = vld [vmem:[%s1 + $0x120] sm:$0xff]
  %v55 = vld [vmem:[%s1 + $0x128] sm:$0xff]
  %v56 = vld [vmem:[%s1 + $0x130] sm:$0xff]
  %v57 = vld [vmem:[%s1 + $0x138] sm:$0xff]
  %v58 = vld [vmem:[%s1 + $0x140] sm:$0xff]
  %v59 = vld [vmem:[%s1 + $0x148] sm:$0xff]
  %v60 = vld [vmem:[%s1 + $0x150] sm:$0xff]
  %v61 = vld [vmem:[%s1 + $0x158] sm:$0xff]
  %v62 = vld [vmem:[%s1 + $0x160] sm:$0xff]
  %v63 = vld [vmem:[%s1 + $0x168] sm:$0xff]
  %v64 = vld [vmem:[%s1 + $0x170] sm:$0xff]
  %v65 = vld [vmem:[%s1 + $0x178] sm:$0xff]
  %v66 = vld [vmem:[%s1 + $0x180] sm:$0xff]
  %v67 = vld [vmem:[%s1 + $0x188] sm:$0xff]
  %v68 = vld [vmem:[%s1 + $0x190] sm:$0xff]
  %v69 = vld [vmem:[%s1 + $0x198] sm:$0xff]
  %v70 = vld [vmem:[%s1 + $0x1a0] sm:$0xff]
  %v71 = vld [vmem:[%s1 + $0x1a8] sm:$0xff]
  %v72 = vld [vmem:[%s1 + $0x1b0] sm:$0xff]
  %v73 = vld [vmem:[%s1 + $0x1b8] sm:$0xff]
  %v74 = vld [vmem:[%s1 + $0x1c0] sm:$0xff]
  %v75 = vld [vmem:[%s1 + $0x1c8] sm:$0xff]
  %v76 = vld [vmem:[%s1 + $0x1d0] sm:$0xff]
  %v77 = vld [vmem:[%s1 + $0x1d8] sm:$0xff]
  %v78 = vld [vmem:[%s1 + $0x1e0] sm:$0xff]
  %v79 = vld [vmem:[%s1 + $0x1e8] sm:$0xff]
  %v80 = vld [vmem:[%s1 + $0x1f0] sm:$0xff]
  %v81 = vld [vmem:[%s1 + $0x1f8] sm:$0xff]
  %v82 = vld [vmem:[%s1 + $0x200] sm:$0xff]
  %v83 = vld [vmem:[%s1 + $0x208] sm:$0xff]
  %v84 = vld [vmem:[%s1 + $0x210] sm:$0xff]
  %v85 = vld [vmem:[%s1 + $0x218] sm:$0xff]
  %v86 = vld [vmem:[%s1 + $0x220] sm:$0xff]
  %v87 = vld [vmem:[%s1 + $0x228] sm:$0xff]
  %v88 = vld [vmem:[%s1 + $0x230] sm:$0xff]
  %v89 = vld [vmem:[%s1 + $0x238] sm:$0xff]
  %v90 = vld [vmem:[%s1 + $0x240] sm:$0xff]
  %v91 = vld [vmem:[%s1 + $0x248] sm:$0xff]
  %v92 = vld [vmem:[%s1 + $0x250] sm:$0xff]
  %v93 = vld [vmem:[%s1 + $0x258] sm:$0xff]
  %v94 = vld [vmem:[%s1 + $0x260] sm:$0xff]
  %v95 = vld [vmem:[%s1 + $0x268] sm:$0xff]
  %v96 = vld [vmem:[%s1 + $0x270] sm:$0xff]
  %v97 = vld [vmem:[%s1 + $0x278] sm:$0xff]
  %v98 = vld [vmem:[%s1 + $0x280] sm:$0xff]
  %v99 = vld [vmem:[%s1 + $0x288] sm:$0xff]
  %v100 = vld [vmem:[%s1 + $0x290] sm:$0xff]
  %v101 = vld [vmem:[%s1 + $0x298] sm:$0xff]
  %v102 = vld [vmem:[%s1 + $0x2a0] sm:$0xff]
  %v103 = vld [vmem:[%s1 + $0x2a8] sm:$0xff]
  %v104 = vld [vmem:[%s1 + $0x2b0] sm:$0xff]
  %v105 = vld [vmem:[%s1 + $0x2b8] sm:$0xff]
  %v106 = vld [vmem:[%s1 + $0x2c0] sm:$0xff]
  %v107 = vld [vmem:[%s1 + $0x2c8] sm:$0xff]
  %v108 = vld [vmem:[%s1 + $0x2d0] sm:$0xff]
  %v109 = vld [vmem:[%s1 + $0x2d8] sm:$0xff]
  %v110 = vld [vmem:[%s1 + $0x2e0] sm:$0xff]
  %v111 = vld [vmem:[%s1 + $0x2e8] sm:$0xff]
  %v112 = vld [vmem:[%s1 + $0x2f0] sm:$0xff]
  %v113 = vld [vmem:[%s1 + $0x2f8] sm:$0xff]
  %v114 = vld [vmem:[%s1 + $0x300] sm:$0xff]
  %v115 = vld [vmem:[%s1 + $0x308] sm:$0xff]
  %v116 = vld [vmem:[%s1 + $0x310] sm:$0xff]
  %v117 = vld [vmem:[%s1 + $0x318] sm:$0xff]
  %v118 = vld [vmem:[%s1 + $0x320] sm:$0xff]
  %v119 = vld [vmem:[%s1 + $0x328] sm:$0xff]
  %v120 = vld [vmem:[%s1 + $0x330] sm:$0xff]
  %v121 = vld [vmem:[%s1 + $0x338] sm:$0xff]
  %v122 = vld [vmem:[%s1 + $0x340] sm:$0xff]
  %v123 = vld [vmem:[%s1 + $0x348] sm:$0xff]
  %v124 = vld [vmem:[%s1 + $0x350] sm:$0xff]
  %v125 = vld [vmem:[%s1 + $0x358] sm:$0xff]
  %v126 = vld [vmem:[%s1 + $0x360] sm:$0xff]
  %v127 = vld [vmem:[%s1 + $0x368] sm:$0xff]
  %v128 = vld [vmem:[%s1 + $0x370] sm:$0xff]
  %v129 = vld [vmem:[%s1 + $0x378] sm:$0xff]
  %v130 = vld [vmem:[%s1 + $0x380] sm:$0xff]
  %v131 = vld [vmem:[%s1 + $0x388] sm:$0xff]
  %v132 = vld [vmem:[%s1 + $0x390] sm:$0xff]
  %v133 = vld [vmem:[%s1 + $0x398] sm:$0xff]
  %v134 = vld [vmem:[%s1 + $0x3a0] sm:$0xff]
  %v135 = vld [vmem:[%s1 + $0x3a8] sm:$0xff]
  %v136 = vld [vmem:[%s1 + $0x3b0] sm:$0xff]
  %v137 = vld [vmem:[%s1 + $0x3b8] sm:$0xff]
  %v138 = vld [vmem:[%s1 + $0x3c0] sm:$0xff]
  %v139 = vld [vmem:[%s1 + $0x3c8] sm:$0xff]
  %v140 = vld [vmem:[%s1 + $0x3d0] sm:$0xff]
  %v141 = vld [vmem:[%s1 + $0x3d8] sm:$0xff]
  %v142 = vld [vmem:[%s1 + $0x3e0] sm:$0xff]
  %v143 = vld [vmem:[%s1 + $0x3e8] sm:$0xff]
  %v144 = vld [vmem:[%s1 + $0x3f0] sm:$0xff]
  %v145 = vld [vmem:[%s1 + $0x3f8] sm:$0xff]
  %v146 = vld [vmem:[%s2] sm:$0xff]
  %v148 = vlaneseq
  %v149 = vshrl.u32 %v148, 7
  %v150 = vsub.s32 0, %v149
  %v151 = vrot.slane %v146, %v150
  %v152 = vlaneseq
  %v153 = vshrl.u32 %v152, 7
  %v154 = vsub.s32 1, %v153
  %v155 = vrot.slane %v146, %v154
  %v156 = vlaneseq
  %v157 = vshrl.u32 %v156, 7
  %v158 = vsub.s32 2, %v157
  %v159 = vrot.slane %v146, %v158
  %v160 = vlaneseq
  %v161 = vshrl.u32 %v160, 7
  %v162 = vsub.s32 3, %v161
  %v163 = vrot.slane %v146, %v162
  %v164 = vlaneseq
  %v165 = vshrl.u32 %v164, 7
  %v166 = vsub.s32 4, %v165
  %v167 = vrot.slane %v146, %v166
  %v168 = vlaneseq
  %v169 = vshrl.u32 %v168, 7
  %v170 = vsub.s32 5, %v169
  %v171 = vrot.slane %v146, %v170
  %v172 = vlaneseq
  %v173 = vshrl.u32 %v172, 7
  %v174 = vsub.s32 6, %v173
  %v175 = vrot.slane %v146, %v174
  %v176 = vlaneseq
  %v177 = vshrl.u32 %v176, 7
  %v178 = vsub.s32 7, %v177
  %v179 = vrot.slane %v146, %v178
  %v192 = vunpack.c.l.b16 %v14
  %v193 = vunpack.c.h.b16 %v14
  %v194 = vunpack.c.l.b16 %v15
  %v195 = vunpack.c.h.b16 %v15
  %v196 = vunpack.c.l.b16 %v16
  %v197 = vunpack.c.h.b16 %v16
  %v198 = vunpack.c.l.b16 %v17
  %v199 = vunpack.c.h.b16 %v17
  %v200 = vpack.c.b16 %v194, %v192
  %v201 = vpack.c.b16 %v195, %v193
  %v202 = vpack.c.b16 %v198, %v196
  %v203 = vpack.c.b16 %v199, %v197
  %v336 = vunpack.c.l.b16 %v18
  %v337 = vunpack.c.h.b16 %v18
  %v338 = vunpack.c.l.b16 %v19
  %v339 = vunpack.c.h.b16 %v19
  %v340 = vunpack.c.l.b16 %v20
  %v341 = vunpack.c.h.b16 %v20
  %v342 = vunpack.c.l.b16 %v21
  %v343 = vunpack.c.h.b16 %v21
  %v344 = vunpack.c.l.b16 %v22
  %v345 = vunpack.c.h.b16 %v22
  %v346 = vunpack.c.l.b16 %v23
  %v347 = vunpack.c.h.b16 %v23
  %v348 = vunpack.c.l.b16 %v24
  %v349 = vunpack.c.h.b16 %v24
  %v350 = vunpack.c.l.b16 %v25
  %v351 = vunpack.c.h.b16 %v25
  %v352 = vunpack.c.l.b16 %v26
  %v353 = vunpack.c.h.b16 %v26
  %v354 = vunpack.c.l.b16 %v27
  %v355 = vunpack.c.h.b16 %v27
  %v356 = vunpack.c.l.b16 %v28
  %v357 = vunpack.c.h.b16 %v28
  %v358 = vunpack.c.l.b16 %v29
  %v359 = vunpack.c.h.b16 %v29
  %v360 = vunpack.c.l.b16 %v30
  %v361 = vunpack.c.h.b16 %v30
  %v362 = vunpack.c.l.b16 %v31
  %v363 = vunpack.c.h.b16 %v31
  %v364 = vunpack.c.l.b16 %v32
  %v365 = vunpack.c.h.b16 %v32
  %v366 = vunpack.c.l.b16 %v33
  %v367 = vunpack.c.h.b16 %v33
  %v368 = vunpack.c.l.b16 %v34
  %v369 = vunpack.c.h.b16 %v34
  %v370 = vunpack.c.l.b16 %v35
  %v371 = vunpack.c.h.b16 %v35
  %v372 = vunpack.c.l.b16 %v36
  %v373 = vunpack.c.h.b16 %v36
  %v374 = vunpack.c.l.b16 %v37
  %v375 = vunpack.c.h.b16 %v37
  %v376 = vunpack.c.l.b16 %v38
  %v377 = vunpack.c.h.b16 %v38
  %v378 = vunpack.c.l.b16 %v39
  %v379 = vunpack.c.h.b16 %v39
  %v380 = vunpack.c.l.b16 %v40
  %v381 = vunpack.c.h.b16 %v40
  %v382 = vunpack.c.l.b16 %v41
  %v383 = vunpack.c.h.b16 %v41
  %v384 = vunpack.c.l.b16 %v42
  %v385 = vunpack.c.h.b16 %v42
  %v386 = vunpack.c.l.b16 %v43
  %v387 = vunpack.c.h.b16 %v43
  %v388 = vunpack.c.l.b16 %v44
  %v389 = vunpack.c.h.b16 %v44
  %v390 = vunpack.c.l.b16 %v45
  %v391 = vunpack.c.h.b16 %v45
  %v392 = vunpack.c.l.b16 %v46
  %v393 = vunpack.c.h.b16 %v46
  %v394 = vunpack.c.l.b16 %v47
  %v395 = vunpack.c.h.b16 %v47
  %v396 = vunpack.c.l.b16 %v48
  %v397 = vunpack.c.h.b16 %v48
  %v398 = vunpack.c.l.b16 %v49
  %v399 = vunpack.c.h.b16 %v49
  %v400 = vunpack.c.l.b16 %v50
  %v401 = vunpack.c.h.b16 %v50
  %v402 = vunpack.c.l.b16 %v51
  %v403 = vunpack.c.h.b16 %v51
  %v404 = vunpack.c.l.b16 %v52
  %v405 = vunpack.c.h.b16 %v52
  %v406 = vunpack.c.l.b16 %v53
  %v407 = vunpack.c.h.b16 %v53
  %v408 = vunpack.c.l.b16 %v54
  %v409 = vunpack.c.h.b16 %v54
  %v410 = vunpack.c.l.b16 %v55
  %v411 = vunpack.c.h.b16 %v55
  %v412 = vunpack.c.l.b16 %v56
  %v413 = vunpack.c.h.b16 %v56
  %v414 = vunpack.c.l.b16 %v57
  %v415 = vunpack.c.h.b16 %v57
  %v416 = vunpack.c.l.b16 %v58
  %v417 = vunpack.c.h.b16 %v58
  %v418 = vunpack.c.l.b16 %v59
  %v419 = vunpack.c.h.b16 %v59
  %v420 = vunpack.c.l.b16 %v60
  %v421 = vunpack.c.h.b16 %v60
  %v422 = vunpack.c.l.b16 %v61
  %v423 = vunpack.c.h.b16 %v61
  %v424 = vunpack.c.l.b16 %v62
  %v425 = vunpack.c.h.b16 %v62
  %v426 = vunpack.c.l.b16 %v63
  %v427 = vunpack.c.h.b16 %v63
  %v428 = vunpack.c.l.b16 %v64
  %v429 = vunpack.c.h.b16 %v64
  %v430 = vunpack.c.l.b16 %v65
  %v431 = vunpack.c.h.b16 %v65
  %v432 = vunpack.c.l.b16 %v66
  %v433 = vunpack.c.h.b16 %v66
  %v434 = vunpack.c.l.b16 %v67
  %v435 = vunpack.c.h.b16 %v67
  %v436 = vunpack.c.l.b16 %v68
  %v437 = vunpack.c.h.b16 %v68
  %v438 = vunpack.c.l.b16 %v69
  %v439 = vunpack.c.h.b16 %v69
  %v440 = vunpack.c.l.b16 %v70
  %v441 = vunpack.c.h.b16 %v70
  %v442 = vunpack.c.l.b16 %v71
  %v443 = vunpack.c.h.b16 %v71
  %v444 = vunpack.c.l.b16 %v72
  %v445 = vunpack.c.h.b16 %v72
  %v446 = vunpack.c.l.b16 %v73
  %v447 = vunpack.c.h.b16 %v73
  %v448 = vunpack.c.l.b16 %v74
  %v449 = vunpack.c.h.b16 %v74
  %v450 = vunpack.c.l.b16 %v75
  %v451 = vunpack.c.h.b16 %v75
  %v452 = vunpack.c.l.b16 %v76
  %v453 = vunpack.c.h.b16 %v76
  %v454 = vunpack.c.l.b16 %v77
  %v455 = vunpack.c.h.b16 %v77
  %v456 = vunpack.c.l.b16 %v78
  %v457 = vunpack.c.h.b16 %v78
  %v458 = vunpack.c.l.b16 %v79
  %v459 = vunpack.c.h.b16 %v79
  %v460 = vunpack.c.l.b16 %v80
  %v461 = vunpack.c.h.b16 %v80
  %v462 = vunpack.c.l.b16 %v81
  %v463 = vunpack.c.h.b16 %v81
  %v464 = vunpack.c.l.b16 %v82
  %v465 = vunpack.c.h.b16 %v82
  %v466 = vunpack.c.l.b16 %v83
  %v467 = vunpack.c.h.b16 %v83
  %v468 = vunpack.c.l.b16 %v84
  %v469 = vunpack.c.h.b16 %v84
  %v470 = vunpack.c.l.b16 %v85
  %v471 = vunpack.c.h.b16 %v85
  %v472 = vunpack.c.l.b16 %v86
  %v473 = vunpack.c.h.b16 %v86
  %v474 = vunpack.c.l.b16 %v87
  %v475 = vunpack.c.h.b16 %v87
  %v476 = vunpack.c.l.b16 %v88
  %v477 = vunpack.c.h.b16 %v88
  %v478 = vunpack.c.l.b16 %v89
  %v479 = vunpack.c.h.b16 %v89
  %v480 = vunpack.c.l.b16 %v90
  %v481 = vunpack.c.h.b16 %v90
  %v482 = vunpack.c.l.b16 %v91
  %v483 = vunpack.c.h.b16 %v91
  %v484 = vunpack.c.l.b16 %v92
  %v485 = vunpack.c.h.b16 %v92
  %v486 = vunpack.c.l.b16 %v93
  %v487 = vunpack.c.h.b16 %v93
  %v488 = vunpack.c.l.b16 %v94
  %v489 = vunpack.c.h.b16 %v94
  %v490 = vunpack.c.l.b16 %v95
  %v491 = vunpack.c.h.b16 %v95
  %v492 = vunpack.c.l.b16 %v96
  %v493 = vunpack.c.h.b16 %v96
  %v494 = vunpack.c.l.b16 %v97
  %v495 = vunpack.c.h.b16 %v97
  %v496 = vunpack.c.l.b16 %v98
  %v497 = vunpack.c.h.b16 %v98
  %v498 = vunpack.c.l.b16 %v99
  %v499 = vunpack.c.h.b16 %v99
  %v500 = vunpack.c.l.b16 %v100
  %v501 = vunpack.c.h.b16 %v100
  %v502 = vunpack.c.l.b16 %v101
  %v503 = vunpack.c.h.b16 %v101
  %v504 = vunpack.c.l.b16 %v102
  %v505 = vunpack.c.h.b16 %v102
  %v506 = vunpack.c.l.b16 %v103
  %v507 = vunpack.c.h.b16 %v103
  %v508 = vunpack.c.l.b16 %v104
  %v509 = vunpack.c.h.b16 %v104
  %v510 = vunpack.c.l.b16 %v105
  %v511 = vunpack.c.h.b16 %v105
  %v512 = vunpack.c.l.b16 %v106
  %v513 = vunpack.c.h.b16 %v106
  %v514 = vunpack.c.l.b16 %v107
  %v515 = vunpack.c.h.b16 %v107
  %v516 = vunpack.c.l.b16 %v108
  %v517 = vunpack.c.h.b16 %v108
  %v518 = vunpack.c.l.b16 %v109
  %v519 = vunpack.c.h.b16 %v109
  %v520 = vunpack.c.l.b16 %v110
  %v521 = vunpack.c.h.b16 %v110
  %v522 = vunpack.c.l.b16 %v111
  %v523 = vunpack.c.h.b16 %v111
  %v524 = vunpack.c.l.b16 %v112
  %v525 = vunpack.c.h.b16 %v112
  %v526 = vunpack.c.l.b16 %v113
  %v527 = vunpack.c.h.b16 %v113
  %v528 = vunpack.c.l.b16 %v114
  %v529 = vunpack.c.h.b16 %v114
  %v530 = vunpack.c.l.b16 %v115
  %v531 = vunpack.c.h.b16 %v115
  %v532 = vunpack.c.l.b16 %v116
  %v533 = vunpack.c.h.b16 %v116
  %v534 = vunpack.c.l.b16 %v117
  %v535 = vunpack.c.h.b16 %v117
  %v536 = vunpack.c.l.b16 %v118
  %v537 = vunpack.c.h.b16 %v118
  %v538 = vunpack.c.l.b16 %v119
  %v539 = vunpack.c.h.b16 %v119
  %v540 = vunpack.c.l.b16 %v120
  %v541 = vunpack.c.h.b16 %v120
  %v542 = vunpack.c.l.b16 %v121
  %v543 = vunpack.c.h.b16 %v121
  %v544 = vunpack.c.l.b16 %v122
  %v545 = vunpack.c.h.b16 %v122
  %v546 = vunpack.c.l.b16 %v123
  %v547 = vunpack.c.h.b16 %v123
  %v548 = vunpack.c.l.b16 %v124
  %v549 = vunpack.c.h.b16 %v124
  %v550 = vunpack.c.l.b16 %v125
  %v551 = vunpack.c.h.b16 %v125
  %v552 = vunpack.c.l.b16 %v126
  %v553 = vunpack.c.h.b16 %v126
  %v554 = vunpack.c.l.b16 %v127
  %v555 = vunpack.c.h.b16 %v127
  %v556 = vunpack.c.l.b16 %v128
  %v557 = vunpack.c.h.b16 %v128
  %v558 = vunpack.c.l.b16 %v129
  %v559 = vunpack.c.h.b16 %v129
  %v560 = vunpack.c.l.b16 %v130
  %v561 = vunpack.c.h.b16 %v130
  %v562 = vunpack.c.l.b16 %v131
  %v563 = vunpack.c.h.b16 %v131
  %v564 = vunpack.c.l.b16 %v132
  %v565 = vunpack.c.h.b16 %v132
  %v566 = vunpack.c.l.b16 %v133
  %v567 = vunpack.c.h.b16 %v133
  %v568 = vunpack.c.l.b16 %v134
  %v569 = vunpack.c.h.b16 %v134
  %v570 = vunpack.c.l.b16 %v135
  %v571 = vunpack.c.h.b16 %v135
  %v572 = vunpack.c.l.b16 %v136
  %v573 = vunpack.c.h.b16 %v136
  %v574 = vunpack.c.l.b16 %v137
  %v575 = vunpack.c.h.b16 %v137
  %v576 = vunpack.c.l.b16 %v138
  %v577 = vunpack.c.h.b16 %v138
  %v578 = vunpack.c.l.b16 %v139
  %v579 = vunpack.c.h.b16 %v139
  %v580 = vunpack.c.l.b16 %v140
  %v581 = vunpack.c.h.b16 %v140
  %v582 = vunpack.c.l.b16 %v141
  %v583 = vunpack.c.h.b16 %v141
  %v584 = vunpack.c.l.b16 %v142
  %v585 = vunpack.c.h.b16 %v142
  %v586 = vunpack.c.l.b16 %v143
  %v587 = vunpack.c.h.b16 %v143
  %v588 = vunpack.c.l.b16 %v144
  %v589 = vunpack.c.h.b16 %v144
  %v590 = vunpack.c.l.b16 %v145
  %v591 = vunpack.c.h.b16 %v145
  %v592 = vpack.c.b16 %v344, %v336
  %v593 = vpack.c.b16 %v345, %v337
  %v594 = vpack.c.b16 %v346, %v338
  %v595 = vpack.c.b16 %v347, %v339
  %v596 = vpack.c.b16 %v348, %v340
  %v597 = vpack.c.b16 %v349, %v341
  %v598 = vpack.c.b16 %v350, %v342
  %v599 = vpack.c.b16 %v351, %v343
  %v600 = vpack.c.b16 %v360, %v352
  %v601 = vpack.c.b16 %v361, %v353
  %v602 = vpack.c.b16 %v362, %v354
  %v603 = vpack.c.b16 %v363, %v355
  %v604 = vpack.c.b16 %v364, %v356
  %v605 = vpack.c.b16 %v365, %v357
  %v606 = vpack.c.b16 %v366, %v358
  %v607 = vpack.c.b16 %v367, %v359
  %v608 = vpack.c.b16 %v376, %v368
  %v609 = vpack.c.b16 %v377, %v369
  %v610 = vpack.c.b16 %v378, %v370
  %v611 = vpack.c.b16 %v379, %v371
  %v612 = vpack.c.b16 %v380, %v372
  %v613 = vpack.c.b16 %v381, %v373
  %v614 = vpack.c.b16 %v382, %v374
  %v615 = vpack.c.b16 %v383, %v375
  %v616 = vpack.c.b16 %v392, %v384
  %v617 = vpack.c.b16 %v393, %v385
  %v618 = vpack.c.b16 %v394, %v386
  %v619 = vpack.c.b16 %v395, %v387
  %v620 = vpack.c.b16 %v396, %v388
  %v621 = vpack.c.b16 %v397, %v389
  %v622 = vpack.c.b16 %v398, %v390
  %v623 = vpack.c.b16 %v399, %v391
  %v624 = vpack.c.b16 %v408, %v400
  %v625 = vpack.c.b16 %v409, %v401
  %v626 = vpack.c.b16 %v410, %v402
  %v627 = vpack.c.b16 %v411, %v403
  %v628 = vpack.c.b16 %v412, %v404
  %v629 = vpack.c.b16 %v413, %v405
  %v630 = vpack.c.b16 %v414, %v406
  %v631 = vpack.c.b16 %v415, %v407
  %v632 = vpack.c.b16 %v424, %v416
  %v633 = vpack.c.b16 %v425, %v417
  %v634 = vpack.c.b16 %v426, %v418
  %v635 = vpack.c.b16 %v427, %v419
  %v636 = vpack.c.b16 %v428, %v420
  %v637 = vpack.c.b16 %v429, %v421
  %v638 = vpack.c.b16 %v430, %v422
  %v639 = vpack.c.b16 %v431, %v423
  %v640 = vpack.c.b16 %v440, %v432
  %v641 = vpack.c.b16 %v441, %v433
  %v642 = vpack.c.b16 %v442, %v434
  %v643 = vpack.c.b16 %v443, %v435
  %v644 = vpack.c.b16 %v444, %v436
  %v645 = vpack.c.b16 %v445, %v437
  %v646 = vpack.c.b16 %v446, %v438
  %v647 = vpack.c.b16 %v447, %v439
  %v648 = vpack.c.b16 %v456, %v448
  %v649 = vpack.c.b16 %v457, %v449
  %v650 = vpack.c.b16 %v458, %v450
  %v651 = vpack.c.b16 %v459, %v451
  %v652 = vpack.c.b16 %v460, %v452
  %v653 = vpack.c.b16 %v461, %v453
  %v654 = vpack.c.b16 %v462, %v454
  %v655 = vpack.c.b16 %v463, %v455
  %v656 = vpack.c.b16 %v472, %v464
  %v657 = vpack.c.b16 %v473, %v465
  %v658 = vpack.c.b16 %v474, %v466
  %v659 = vpack.c.b16 %v475, %v467
  %v660 = vpack.c.b16 %v476, %v468
  %v661 = vpack.c.b16 %v477, %v469
  %v662 = vpack.c.b16 %v478, %v470
  %v663 = vpack.c.b16 %v479, %v471
  %v664 = vpack.c.b16 %v488, %v480
  %v665 = vpack.c.b16 %v489, %v481
  %v666 = vpack.c.b16 %v490, %v482
  %v667 = vpack.c.b16 %v491, %v483
  %v668 = vpack.c.b16 %v492, %v484
  %v669 = vpack.c.b16 %v493, %v485
  %v670 = vpack.c.b16 %v494, %v486
  %v671 = vpack.c.b16 %v495, %v487
  %v672 = vpack.c.b16 %v504, %v496
  %v673 = vpack.c.b16 %v505, %v497
  %v674 = vpack.c.b16 %v506, %v498
  %v675 = vpack.c.b16 %v507, %v499
  %v676 = vpack.c.b16 %v508, %v500
  %v677 = vpack.c.b16 %v509, %v501
  %v678 = vpack.c.b16 %v510, %v502
  %v679 = vpack.c.b16 %v511, %v503
  %v680 = vpack.c.b16 %v520, %v512
  %v681 = vpack.c.b16 %v521, %v513
  %v682 = vpack.c.b16 %v522, %v514
  %v683 = vpack.c.b16 %v523, %v515
  %v684 = vpack.c.b16 %v524, %v516
  %v685 = vpack.c.b16 %v525, %v517
  %v686 = vpack.c.b16 %v526, %v518
  %v687 = vpack.c.b16 %v527, %v519
  %v688 = vpack.c.b16 %v536, %v528
  %v689 = vpack.c.b16 %v537, %v529
  %v690 = vpack.c.b16 %v538, %v530
  %v691 = vpack.c.b16 %v539, %v531
  %v692 = vpack.c.b16 %v540, %v532
  %v693 = vpack.c.b16 %v541, %v533
  %v694 = vpack.c.b16 %v542, %v534
  %v695 = vpack.c.b16 %v543, %v535
  %v696 = vpack.c.b16 %v552, %v544
  %v697 = vpack.c.b16 %v553, %v545
  %v698 = vpack.c.b16 %v554, %v546
  %v699 = vpack.c.b16 %v555, %v547
  %v700 = vpack.c.b16 %v556, %v548
  %v701 = vpack.c.b16 %v557, %v549
  %v702 = vpack.c.b16 %v558, %v550
  %v703 = vpack.c.b16 %v559, %v551
  %v704 = vpack.c.b16 %v568, %v560
  %v705 = vpack.c.b16 %v569, %v561
  %v706 = vpack.c.b16 %v570, %v562
  %v707 = vpack.c.b16 %v571, %v563
  %v708 = vpack.c.b16 %v572, %v564
  %v709 = vpack.c.b16 %v573, %v565
  %v710 = vpack.c.b16 %v574, %v566
  %v711 = vpack.c.b16 %v575, %v567
  %v712 = vpack.c.b16 %v584, %v576
  %v713 = vpack.c.b16 %v585, %v577
  %v714 = vpack.c.b16 %v586, %v578
  %v715 = vpack.c.b16 %v587, %v579
  %v716 = vpack.c.b16 %v588, %v580
  %v717 = vpack.c.b16 %v589, %v581
  %v718 = vpack.c.b16 %v590, %v582
  %v719 = vpack.c.b16 %v591, %v583
  %848 = vmatprep.subr.bf16.mxu0 %v593
  %849 = vmatpush1.bf16.msra.mxu0 %v592
  %850 = vmatprep.subr.bf16.mxu0 %v601
  %851 = vmatpush1.bf16.msra.mxu0 %v600
  %852 = vmatprep.subr.bf16.mxu0 %v609
  %853 = vmatpush1.bf16.msra.mxu0 %v608
  %854 = vmatprep.subr.bf16.mxu0 %v617
  %855 = vmatpush1.bf16.msra.mxu0 %v616
  %856 = vmatprep.subr.bf16.mxu0 %v625
  %857 = vmatpush1.bf16.msra.mxu0 %v624
  %858 = vmatprep.subr.bf16.mxu0 %v633
  %859 = vmatpush1.bf16.msra.mxu0 %v632
  %860 = vmatprep.subr.bf16.mxu0 %v641
  %861 = vmatpush1.bf16.msra.mxu0 %v640
  %862 = vmatprep.subr.bf16.mxu0 %v649
  %863 = vmatpush1.bf16.msra.mxu0 %v648
  %864 = vmatprep.subr.bf16.mxu0 %v657
  %865 = vmatpush1.bf16.msra.mxu0 %v656
  %866 = vmatprep.subr.bf16.mxu0 %v665
  %867 = vmatpush1.bf16.msra.mxu0 %v664
  %868 = vmatprep.subr.bf16.mxu0 %v673
  %869 = vmatpush1.bf16.msra.mxu0 %v672
  %870 = vmatprep.subr.bf16.mxu0 %v681
  %871 = vmatpush1.bf16.msra.mxu0 %v680
  %872 = vmatprep.subr.bf16.mxu0 %v689
  %873 = vmatpush1.bf16.msra.mxu0 %v688
  %874 = vmatprep.subr.bf16.mxu0 %v697
  %875 = vmatpush1.bf16.msra.mxu0 %v696
  %876 = vmatprep.subr.bf16.mxu0 %v705
  %877 = vmatpush1.bf16.msra.mxu0 %v704
  %878 = vmatprep.subr.bf16.mxu0 %v713
  %879 = vmatpush1.bf16.msra.mxu0 %v712
  %880 = vmatprep.mubr.bf16.mxu0 %v201
  %881 = vmatmul.mubr.bf16.gmra.mrb[0].mxu0 %v200
  %v882 = vpop.f32.mrb[0].mxu0
  %v883 = vadd.f32 %v151, %v882
  %v884 = vpop.f32.mrb[0].mxu0
  %v885 = vadd.f32 %v155, %v884
  %v886 = vpop.f32.mrb[0].mxu0
  %v887 = vadd.f32 %v151, %v886
  %v888 = vpop.f32.mrb[0].mxu0
  %v889 = vadd.f32 %v155, %v888
  %890 = vmatprep.mubr.bf16.mxu0 %v203
  %891 = vmatmul.mubr.bf16.gmra.mrb[0].mxu0 %v202
  %v892 = vpop.f32.mrb[0].mxu0
  %v893 = vadd.f32 %v151, %v892
  %v894 = vpop.f32.mrb[0].mxu0
  %v895 = vadd.f32 %v155, %v894
  %v896 = vpop.f32.mrb[0].mxu0
  %v897 = vadd.f32 %v151, %v896
  %v898 = vpop.f32.mrb[0].mxu0
  %v899 = vadd.f32 %v155, %v898
  %900 = vdwg.mxu0
  %901 = vmatprep.subr.bf16.mxu0 %v595
  %902 = vmatpush1.bf16.msra.mxu0 %v594
  %903 = vmatprep.subr.bf16.mxu0 %v603
  %904 = vmatpush1.bf16.msra.mxu0 %v602
  %905 = vmatprep.subr.bf16.mxu0 %v611
  %906 = vmatpush1.bf16.msra.mxu0 %v610
  %907 = vmatprep.subr.bf16.mxu0 %v619
  %908 = vmatpush1.bf16.msra.mxu0 %v618
  %909 = vmatprep.subr.bf16.mxu0 %v627
  %910 = vmatpush1.bf16.msra.mxu0 %v626
  %911 = vmatprep.subr.bf16.mxu0 %v635
  %912 = vmatpush1.bf16.msra.mxu0 %v634
  %913 = vmatprep.subr.bf16.mxu0 %v643
  %914 = vmatpush1.bf16.msra.mxu0 %v642
  %915 = vmatprep.subr.bf16.mxu0 %v651
  %916 = vmatpush1.bf16.msra.mxu0 %v650
  %917 = vmatprep.subr.bf16.mxu0 %v659
  %918 = vmatpush1.bf16.msra.mxu0 %v658
  %919 = vmatprep.subr.bf16.mxu0 %v667
  %920 = vmatpush1.bf16.msra.mxu0 %v666
  %921 = vmatprep.subr.bf16.mxu0 %v675
  %922 = vmatpush1.bf16.msra.mxu0 %v674
  %923 = vmatprep.subr.bf16.mxu0 %v683
  %924 = vmatpush1.bf16.msra.mxu0 %v682
  %925 = vmatprep.subr.bf16.mxu0 %v691
  %926 = vmatpush1.bf16.msra.mxu0 %v690
  %927 = vmatprep.subr.bf16.mxu0 %v699
  %928 = vmatpush1.bf16.msra.mxu0 %v698
  %929 = vmatprep.subr.bf16.mxu0 %v707
  %930 = vmatpush1.bf16.msra.mxu0 %v706
  %931 = vmatprep.subr.bf16.mxu0 %v715
  %932 = vmatpush1.bf16.msra.mxu0 %v714
  %933 = vmatprep.mubr.bf16.mxu0 %v201
  %934 = vmatmul.mubr.bf16.gmra.mrb[0].mxu0 %v200
  %v935 = vpop.f32.mrb[0].mxu0
  %v936 = vadd.f32 %v159, %v935
  %v937 = vpop.f32.mrb[0].mxu0
  %v938 = vadd.f32 %v163, %v937
  %v939 = vpop.f32.mrb[0].mxu0
  %v940 = vadd.f32 %v159, %v939
  %v941 = vpop.f32.mrb[0].mxu0
  %v942 = vadd.f32 %v163, %v941
  %943 = vmatprep.mubr.bf16.mxu0 %v203
  %944 = vmatmul.mubr.bf16.gmra.mrb[0].mxu0 %v202
  %v945 = vpop.f32.mrb[0].mxu0
  %v946 = vadd.f32 %v159, %v945
  %v947 = vpop.f32.mrb[0].mxu0
  %v948 = vadd.f32 %v163, %v947
  %v949 = vpop.f32.mrb[0].mxu0
  %v950 = vadd.f32 %v159, %v949
  %v951 = vpop.f32.mrb[0].mxu0
  %v952 = vadd.f32 %v163, %v951
  %953 = vdwg.mxu0
  %954 = vmatprep.subr.bf16.mxu0 %v597
  %955 = vmatpush1.bf16.msra.mxu0 %v596
  %956 = vmatprep.subr.bf16.mxu0 %v605
  %957 = vmatpush1.bf16.msra.mxu0 %v604
  %958 = vmatprep.subr.bf16.mxu0 %v613
  %959 = vmatpush1.bf16.msra.mxu0 %v612
  %960 = vmatprep.subr.bf16.mxu0 %v621
  %961 = vmatpush1.bf16.msra.mxu0 %v620
  %962 = vmatprep.subr.bf16.mxu0 %v629
  %963 = vmatpush1.bf16.msra.mxu0 %v628
  %964 = vmatprep.subr.bf16.mxu0 %v637
  %965 = vmatpush1.bf16.msra.mxu0 %v636
  %966 = vmatprep.subr.bf16.mxu0 %v645
  %967 = vmatpush1.bf16.msra.mxu0 %v644
  %968 = vmatprep.subr.bf16.mxu0 %v653
  %969 = vmatpush1.bf16.msra.mxu0 %v652
  %970 = vmatprep.subr.bf16.mxu0 %v661
  %971 = vmatpush1.bf16.msra.mxu0 %v660
  %972 = vmatprep.subr.bf16.mxu0 %v669
  %973 = vmatpush1.bf16.msra.mxu0 %v668
  %974 = vmatprep.subr.bf16.mxu0 %v677
  %975 = vmatpush1.bf16.msra.mxu0 %v676
  %976 = vmatprep.subr.bf16.mxu0 %v685
  %977 = vmatpush1.bf16.msra.mxu0 %v684
  %978 = vmatprep.subr.bf16.mxu0 %v693
  %979 = vmatpush1.bf16.msra.mxu0 %v692
  %980 = vmatprep.subr.bf16.mxu0 %v701
  %981 = vmatpush1.bf16.msra.mxu0 %v700
  %982 = vmatprep.subr.bf16.mxu0 %v709
  %983 = vmatpush1.bf16.msra.mxu0 %v708
  %984 = vmatprep.subr.bf16.mxu0 %v717
  %985 = vmatpush1.bf16.msra.mxu0 %v716
  %986 = vmatprep.mubr.bf16.mxu0 %v201
  %987 = vmatmul.mubr.bf16.gmra.mrb[0].mxu0 %v200
  %v988 = vpop.f32.mrb[0].mxu0
  %v989 = vadd.f32 %v167, %v988
  %v990 = vpop.f32.mrb[0].mxu0
  %v991 = vadd.f32 %v171, %v990
  %v992 = vpop.f32.mrb[0].mxu0
  %v993 = vadd.f32 %v167, %v992
  %v994 = vpop.f32.mrb[0].mxu0
  %v995 = vadd.f32 %v171, %v994
  %996 = vmatprep.mubr.bf16.mxu0 %v203
  %997 = vmatmul.mubr.bf16.gmra.mrb[0].mxu0 %v202
  %v998 = vpop.f32.mrb[0].mxu0
  %v999 = vadd.f32 %v167, %v998
  %v1000 = vpop.f32.mrb[0].mxu0
  %v1001 = vadd.f32 %v171, %v1000
  %v1002 = vpop.f32.mrb[0].mxu0
  %v1003 = vadd.f32 %v167, %v1002
  %v1004 = vpop.f32.mrb[0].mxu0
  %v1005 = vadd.f32 %v171, %v1004
  %1006 = vdwg.mxu0
  %1007 = vmatprep.subr.bf16.mxu0 %v599
  %1008 = vmatpush1.bf16.msra.mxu0 %v598
  %1009 = vmatprep.subr.bf16.mxu0 %v607
  %1010 = vmatpush1.bf16.msra.mxu0 %v606
  %1011 = vmatprep.subr.bf16.mxu0 %v615
  %1012 = vmatpush1.bf16.msra.mxu0 %v614
  %1013 = vmatprep.subr.bf16.mxu0 %v623
  %1014 = vmatpush1.bf16.msra.mxu0 %v622
  %1015 = vmatprep.subr.bf16.mxu0 %v631
  %1016 = vmatpush1.bf16.msra.mxu0 %v630
  %1017 = vmatprep.subr.bf16.mxu0 %v639
  %1018 = vmatpush1.bf16.msra.mxu0 %v638
  %1019 = vmatprep.subr.bf16.mxu0 %v647
  %1020 = vmatpush1.bf16.msra.mxu0 %v646
  %1021 = vmatprep.subr.bf16.mxu0 %v655
  %1022 = vmatpush1.bf16.msra.mxu0 %v654
  %1023 = vmatprep.subr.bf16.mxu0 %v663
  %1024 = vmatpush1.bf16.msra.mxu0 %v662
  %1025 = vmatprep.subr.bf16.mxu0 %v671
  %1026 = vmatpush1.bf16.msra.mxu0 %v670
  %1027 = vmatprep.subr.bf16.mxu0 %v679
  %1028 = vmatpush1.bf16.msra.mxu0 %v678
  %1029 = vmatprep.subr.bf16.mxu0 %v687
  %1030 = vmatpush1.bf16.msra.mxu0 %v686
  %1031 = vmatprep.subr.bf16.mxu0 %v695
  %1032 = vmatpush1.bf16.msra.mxu0 %v694
  %1033 = vmatprep.subr.bf16.mxu0 %v703
  %1034 = vmatpush1.bf16.msra.mxu0 %v702
  %1035 = vmatprep.subr.bf16.mxu0 %v711
  %1036 = vmatpush1.bf16.msra.mxu0 %v710
  %1037 = vmatprep.subr.bf16.mxu0 %v719
  %1038 = vmatpush1.bf16.msra.mxu0 %v718
  %1039 = vmatprep.mubr.bf16.mxu0 %v201
  %1040 = vmatmul.mubr.bf16.gmra.mrb[0].mxu0 %v200
  %v1041 = vpop.f32.mrb[0].mxu0
  %v1042 = vadd.f32 %v175, %v1041
  %v1043 = vpop.f32.mrb[0].mxu0
  %v1044 = vadd.f32 %v179, %v1043
  %v1045 = vpop.f32.mrb[0].mxu0
  %v1046 = vadd.f32 %v175, %v1045
  %v1047 = vpop.f32.mrb[0].mxu0
  %v1048 = vadd.f32 %v179, %v1047
  %1049 = vmatprep.mubr.bf16.mxu0 %v203
  %1050 = vmatmul.mubr.bf16.gmra.mrb[0].mxu0 %v202
  %v1051 = vpop.f32.mrb[0].mxu0
  %v1052 = vadd.f32 %v175, %v1051
  %v1053 = vpop.f32.mrb[0].mxu0
  %v1054 = vadd.f32 %v179, %v1053
  %v1055 = vpop.f32.mrb[0].mxu0
  %v1056 = vadd.f32 %v175, %v1055
  %v1057 = vpop.f32.mrb[0].mxu0
  %v1058 = vadd.f32 %v179, %v1057
  %1059 = vdwg.mxu0
  %1060 = vst [vmem:[%s3] sm:$0xff] %v883
  %1061 = vst [vmem:[%s3 + $0x8] sm:$0xff] %v885
  %1062 = vst [vmem:[%s3 + $0x10] sm:$0xff] %v936
  %1063 = vst [vmem:[%s3 + $0x18] sm:$0xff] %v938
  %1064 = vst [vmem:[%s3 + $0x20] sm:$0xff] %v989
  %1065 = vst [vmem:[%s3 + $0x28] sm:$0xff] %v991
  %1066 = vst [vmem:[%s3 + $0x30] sm:$0xff] %v1042
  %1067 = vst [vmem:[%s3 + $0x38] sm:$0xff] %v1044
  %1068 = vst [vmem:[%s3 + $0x40] sm:$0xff] %v887
  %1069 = vst [vmem:[%s3 + $0x48] sm:$0xff] %v889
  %1070 = vst [vmem:[%s3 + $0x50] sm:$0xff] %v940
  %1071 = vst [vmem:[%s3 + $0x58] sm:$0xff] %v942
  %1072 = vst [vmem:[%s3 + $0x60] sm:$0xff] %v993
  %1073 = vst [vmem:[%s3 + $0x68] sm:$0xff] %v995
  %1074 = vst [vmem:[%s3 + $0x70] sm:$0xff] %v1046
  %1075 = vst [vmem:[%s3 + $0x78] sm:$0xff] %v1048
  %1076 = vst [vmem:[%s3 + $0x80] sm:$0xff] %v893
  %1077 = vst [vmem:[%s3 + $0x88] sm:$0xff] %v895
  %1078 = vst [vmem:[%s3 + $0x90] sm:$0xff] %v946
  %1079 = vst [vmem:[%s3 + $0x98] sm:$0xff] %v948
  %1080 = vst [vmem:[%s3 + $0xa0] sm:$0xff] %v999
  %1081 = vst [vmem:[%s3 + $0xa8] sm:$0xff] %v1001
  %1082 = vst [vmem:[%s3 + $0xb0] sm:$0xff] %v1052
  %1083 = vst [vmem:[%s3 + $0xb8] sm:$0xff] %v1054
  %1084 = vst [vmem:[%s3 + $0xc0] sm:$0xff] %v897
  %1085 = vst [vmem:[%s3 + $0xc8] sm:$0xff] %v899
  %1086 = vst [vmem:[%s3 + $0xd0] sm:$0xff] %v950
  %1087 = vst [vmem:[%s3 + $0xd8] sm:$0xff] %v952
  %1088 = vst [vmem:[%s3 + $0xe0] sm:$0xff] %v1003
  %1089 = vst [vmem:[%s3 + $0xe8] sm:$0xff] %v1005
  %1090 = vst [vmem:[%s3 + $0xf0] sm:$0xff] %v1056
  %1091 = vst [vmem:[%s3 + $0xf8] sm:$0xff] %v1058
  // Predicated region
  $region14: #{net_forward.9} parent=0 // pred_check
    _
  $region15: #{net_forward.9} parent=0 // pred_check_branch
    %1093 = sbr.rel (0) target = $region17
  $region16: #{net_forward.9} parent=0 // pred_region
    _
  $region17: #{net_forward.9} parent=0 // pred_fallthru
    _
  // Predicated region
  $region18: #{net_forward.9} parent=0 // pred_check
    _
  $region19: #{net_forward.9} parent=0 // pred_check_branch
    %1095 = sbr.rel (0) target = $region21
  $region20: #{net_forward.9} parent=0 // pred_region
    _
  $region21: #{net_forward.9} parent=0 // pred_fallthru
    _

// kernel: net_forward.13
$region0: #{net_forward.13}
  #allocation0 [shape = 'u32[]', space=smem, size = 0x4, offset = 0x4, fixed_abs, tag = 'smem constant byte address 0x4 - core index']
  #allocation1 [shape = 'u32[144,128]{1,0:T(1,128)}', space=vmem, size = 0x12000, scoped, tag = 'internal scratch']
  %s0 = inlined_call_operand.vmem [shape: bf16[32,256], index: 0, kind: input, shape index: {}]
  %s1 = inlined_call_operand.vmem [shape: bf16[256,128], index: 1, kind: input, shape index: {}]
  %s2 = inlined_call_operand.vmem [shape: f32[1,128], index: 2, kind: input, shape index: {}]
  %s3 = inlined_call_operand.vmem [shape: f32[32,128], index: 3, kind: output, shape index: {}]
  %s4 = sld [smem:[#allocation0]]
  $region22: #{net_forward.13} parent=0
    _
  %s6 = ssub.s32 1, %s4
  %s7 = scalar_select 0, %s6, %s4
  // Predicated region
  $region2: #{net_forward.13} parent=0 // pred_check
    _
  $region3: #{net_forward.13} parent=0 // pred_check_branch
    %9 = sbr.rel (0) target = $region5
  $region4: #{net_forward.13} parent=0 // pred_region
    _
  $region5: #{net_forward.13} parent=0 // pred_fallthru
    _
  // Predicated region
  $region6: #{net_forward.13} parent=0 // pred_check
    _
  $region7: #{net_forward.13} parent=0 // pred_check_branch
    %11 = sbr.rel (0) target = $region9
  $region8: #{net_forward.13} parent=0 // pred_region
    _
  $region9: #{net_forward.13} parent=0 // pred_fallthru
    _
  // Predicated region
  $region10: #{net_forward.13} parent=0 // pred_check
    _
  $region11: #{net_forward.13} parent=0 // pred_check_branch
    %13 = sbr.rel (0) target = $region13
  $region12: #{net_forward.13} parent=0 // pred_region
    _
  $region13: #{net_forward.13} parent=0 // pred_fallthru
    _
  %v15 = vld [vmem:[%s0] sm:$0xff]
  %v16 = vld [vmem:[%s0 + $0x8] sm:$0xff]
  %v17 = vld [vmem:[%s0 + $0x10] sm:$0xff]
  %v18 = vld [vmem:[%s0 + $0x18] sm:$0xff]
  %v19 = vld [vmem:[%s1] sm:$0xf]
  %v20 = vld [vmem:[%s1 + $0x4] sm:$0xf]
  %v21 = vld [vmem:[%s1 + $0x8] sm:$0xf]
  %v22 = vld [vmem:[%s1 + $0xc] sm:$0xf]
  %v23 = vld [vmem:[%s1 + $0x10] sm:$0xf]
  %v24 = vld [vmem:[%s1 + $0x14] sm:$0xf]
  %v25 = vld [vmem:[%s1 + $0x18] sm:$0xf]
  %v26 = vld [vmem:[%s1 + $0x1c] sm:$0xf]
  %v27 = vld [vmem:[%s1 + $0x20] sm:$0xf]
  %v28 = vld [vmem:[%s1 + $0x24] sm:$0xf]
  %v29 = vld [vmem:[%s1 + $0x28] sm:$0xf]
  %v30 = vld [vmem:[%s1 + $0x2c] sm:$0xf]
  %v31 = vld [vmem:[%s1 + $0x30] sm:$0xf]
  %v32 = vld [vmem:[%s1 + $0x34] sm:$0xf]
  %v33 = vld [vmem:[%s1 + $0x38] sm:$0xf]
  %v34 = vld [vmem:[%s1 + $0x3c] sm:$0xf]
  %v35 = vld [vmem:[%s1 + $0x40] sm:$0xf]
  %v36 = vld [vmem:[%s1 + $0x44] sm:$0xf]
  %v37 = vld [vmem:[%s1 + $0x48] sm:$0xf]
  %v38 = vld [vmem:[%s1 + $0x4c] sm:$0xf]
  %v39 = vld [vmem:[%s1 + $0x50] sm:$0xf]
  %v40 = vld [vmem:[%s1 + $0x54] sm:$0xf]
  %v41 = vld [vmem:[%s1 + $0x58] sm:$0xf]
  %v42 = vld [vmem:[%s1 + $0x5c] sm:$0xf]
  %v43 = vld [vmem:[%s1 + $0x60] sm:$0xf]
  %v44 = vld [vmem:[%s1 + $0x64] sm:$0xf]
  %v45 = vld [vmem:[%s1 + $0x68] sm:$0xf]
  %v46 = vld [vmem:[%s1 + $0x6c] sm:$0xf]
  %v47 = vld [vmem:[%s1 + $0x70] sm:$0xf]
  %v48 = vld [vmem:[%s1 + $0x74] sm:$0xf]
  %v49 = vld [vmem:[%s1 + $0x78] sm:$0xf]
  %v50 = vld [vmem:[%s1 + $0x7c] sm:$0xf]
  %v51 = vld [vmem:[%s2] sm:$0x1]
  %v53 = vlaneseq
  %v54 = vshrl.u32 %v53, 7
  %v55 = vsub.s32 0, %v54
  %v56 = vrot.slane %v51, %v55
  %v62 = vunpack.c.l.b16 %v15
  %v63 = vunpack.c.h.b16 %v15
  %v64 = vunpack.c.l.b16 %v16
  %v65 = vunpack.c.h.b16 %v16
  %v66 = vunpack.c.l.b16 %v17
  %v67 = vunpack.c.h.b16 %v17
  %v68 = vunpack.c.l.b16 %v18
  %v69 = vunpack.c.h.b16 %v18
  %v70 = vpack.c.b16 %v64, %v62
  %v71 = vpack.c.b16 %v65, %v63
  %v72 = vpack.c.b16 %v68, %v66
  %v73 = vpack.c.b16 %v69, %v67
  %v110 = vunpack.c.l.b16 %v19
  %v111 = vunpack.c.l.b16 %v20
  %v112 = vunpack.c.l.b16 %v21
  %v113 = vunpack.c.l.b16 %v22
  %v114 = vunpack.c.l.b16 %v23
  %v115 = vunpack.c.l.b16 %v24
  %v116 = vunpack.c.l.b16 %v25
  %v117 = vunpack.c.l.b16 %v26
  %v118 = vunpack.c.l.b16 %v27
  %v119 = vunpack.c.l.b16 %v28
  %v120 = vunpack.c.l.b16 %v29
  %v121 = vunpack.c.l.b16 %v30
  %v122 = vunpack.c.l.b16 %v31
  %v123 = vunpack.c.l.b16 %v32
  %v124 = vunpack.c.l.b16 %v33
  %v125 = vunpack.c.l.b16 %v34
  %v126 = vunpack.c.l.b16 %v35
  %v127 = vunpack.c.l.b16 %v36
  %v128 = vunpack.c.l.b16 %v37
  %v129 = vunpack.c.l.b16 %v38
  %v130 = vunpack.c.l.b16 %v39
  %v131 = vunpack.c.l.b16 %v40
  %v132 = vunpack.c.l.b16 %v41
  %v133 = vunpack.c.l.b16 %v42
  %v134 = vunpack.c.l.b16 %v43
  %v135 = vunpack.c.l.b16 %v44
  %v136 = vunpack.c.l.b16 %v45
  %v137 = vunpack.c.l.b16 %v46
  %v138 = vunpack.c.l.b16 %v47
  %v139 = vunpack.c.l.b16 %v48
  %v140 = vunpack.c.l.b16 %v49
  %v141 = vunpack.c.l.b16 %v50
  %v142 = vpack.c.b16 %v111, %v110
  %v143 = vpack.c.b16 %v113, %v112
  %v144 = vpack.c.b16 %v115, %v114
  %v145 = vpack.c.b16 %v117, %v116
  %v146 = vpack.c.b16 %v119, %v118
  %v147 = vpack.c.b16 %v121, %v120
  %v148 = vpack.c.b16 %v123, %v122
  %v149 = vpack.c.b16 %v125, %v124
  %v150 = vpack.c.b16 %v127, %v126
  %v151 = vpack.c.b16 %v129, %v128
  %v152 = vpack.c.b16 %v131, %v130
  %v153 = vpack.c.b16 %v133, %v132
  %v154 = vpack.c.b16 %v135, %v134
  %v155 = vpack.c.b16 %v137, %v136
  %v156 = vpack.c.b16 %v139, %v138
  %v157 = vpack.c.b16 %v141, %v140
  %174 = vmatprep.subr.bf16.mxu0 0
  %175 = vmatpush1.bf16.msra.mxu0 %v142
  %176 = vmatprep.subr.bf16.mxu0 0
  %177 = vmatpush1.bf16.msra.mxu0 %v143
  %178 = vmatprep.subr.bf16.mxu0 0
  %179 = vmatpush1.bf16.msra.mxu0 %v144
  %180 = vmatprep.subr.bf16.mxu0 0
  %181 = vmatpush1.bf16.msra.mxu0 %v145
  %182 = vmatprep.subr.bf16.mxu0 0
  %183 = vmatpush1.bf16.msra.mxu0 %v146
  %184 = vmatprep.subr.bf16.mxu0 0
  %185 = vmatpush1.bf16.msra.mxu0 %v147
  %186 = vmatprep.subr.bf16.mxu0 0
  %187 = vmatpush1.bf16.msra.mxu0 %v148
  %188 = vmatprep.subr.bf16.mxu0 0
  %189 = vmatpush1.bf16.msra.mxu0 %v149
  %190 = vmatprep.subr.bf16.mxu0 0
  %191 = vmatpush1.bf16.msra.mxu0 %v150
  %192 = vmatprep.subr.bf16.mxu0 0
  %193 = vmatpush1.bf16.msra.mxu0 %v151
  %194 = vmatprep.subr.bf16.mxu0 0
  %195 = vmatpush1.bf16.msra.mxu0 %v152
  %196 = vmatprep.subr.bf16.mxu0 0
  %197 = vmatpush1.bf16.msra.mxu0 %v153
  %198 = vmatprep.subr.bf16.mxu0 0
  %199 = vmatpush1.bf16.msra.mxu0 %v154
  %200 = vmatprep.subr.bf16.mxu0 0
  %201 = vmatpush1.bf16.msra.mxu0 %v155
  %202 = vmatprep.subr.bf16.mxu0 0
  %203 = vmatpush1.bf16.msra.mxu0 %v156
  %204 = vmatprep.subr.bf16.mxu0 0
  %205 = vmatpush1.bf16.msra.mxu0 %v157
  %206 = vmatprep.mubr.bf16.mxu0 %v71
  %207 = vmatmul.mubr.bf16.gmra.mrb[0].mxu0 %v70
  %v208 = vpop.f32.mrb[0].mxu0
  %v209 = vadd.f32 %v56, %v208
  %v210 = vpop.f32.mrb[0].mxu0
  %v211 = vpop.f32.mrb[0].mxu0
  %v212 = vadd.f32 %v56, %v211
  %v213 = vpop.f32.mrb[0].mxu0
  %214 = vmatprep.mubr.bf16.mxu0 %v73
  %215 = vmatmul.mubr.bf16.gmra.mrb[0].mxu0 %v72
  %v216 = vpop.f32.mrb[0].mxu0
  %v217 = vadd.f32 %v56, %v216
  %v218 = vpop.f32.mrb[0].mxu0
  %v219 = vpop.f32.mrb[0].mxu0
  %v220 = vadd.f32 %v56, %v219
  %v221 = vpop.f32.mrb[0].mxu0
  %222 = vdwg.mxu0
  %223 = vst [vmem:[%s3] sm:$0xff] %v209
  %224 = vst [vmem:[%s3 + $0x8] sm:$0xff] %v212
  %225 = vst [vmem:[%s3 + $0x10] sm:$0xff] %v217
  %226 = vst [vmem:[%s3 + $0x18] sm:$0xff] %v220
  // Predicated region
  $region14: #{net_forward.13} parent=0 // pred_check
    _
  $region15: #{net_forward.13} parent=0 // pred_check_branch
    %228 = sbr.rel (0) target = $region17
  $region16: #{net_forward.13} parent=0 // pred_region
    _
  $region17: #{net_forward.13} parent=0 // pred_fallthru
    _
  // Predicated region
  $region18: #{net_forward.13} parent=0 // pred_check
    _
  $region19: #{net_forward.13} parent=0 // pred_check_branch
    %230 = sbr.rel (0) target = $region21
  $region20: #{net_forward.13} parent=0 // pred_region
    _
  $region21: #{net_forward.13} parent=0 // pred_fallthru
    _

// kernel: net_forward.11
$region0: #{net_forward.11}
  #allocation0 [shape = 'u32[]', space=smem, size = 0x4, offset = 0x4, fixed_abs, tag = 'smem constant byte address 0x4 - core index']
  #allocation1 [shape = 'u32[144,128]{1,0:T(1,128)}', space=vmem, size = 0x12000, scoped, tag = 'internal scratch']
  %s0 = inlined_call_operand.vmem [shape: bf16[4,256], index: 0, kind: input, shape index: {}]
  %s1 = inlined_call_operand.vmem [shape: bf16[256,512], index: 1, kind: input, shape index: {}]
  %s2 = inlined_call_operand.vmem [shape: f32[1,512], index: 2, kind: input, shape index: {}]
  %s3 = inlined_call_operand.vmem [shape: f32[4,512], index: 3, kind: output, shape index: {}]
  %s4 = sld [smem:[#allocation0]]
  $region22: #{net_forward.11} parent=0
    _
  %s6 = ssub.s32 1, %s4
  %s7 = scalar_select 0, %s6, %s4
  // Predicated region
  $region2: #{net_forward.11} parent=0 // pred_check
    _
  $region3: #{net_forward.11} parent=0 // pred_check_branch
    %9 = sbr.rel (0) target = $region5
  $region4: #{net_forward.11} parent=0 // pred_region
    _
  $region5: #{net_forward.11} parent=0 // pred_fallthru
    _
  // Predicated region
  $region6: #{net_forward.11} parent=0 // pred_check
    _
  $region7: #{net_forward.11} parent=0 // pred_check_branch
    %11 = sbr.rel (0) target = $region9
  $region8: #{net_forward.11} parent=0 // pred_region
    _
  $region9: #{net_forward.11} parent=0 // pred_fallthru
    _
  // Predicated region
  $region10: #{net_forward.11} parent=0 // pred_check
    _
  $region11: #{net_forward.11} parent=0 // pred_check_branch
    %13 = sbr.rel (0) target = $region13
  $region12: #{net_forward.11} parent=0 // pred_region
    _
  $region13: #{net_forward.11} parent=0 // pred_fallthru
    _
  %v14 = vld [vmem:[%s0] sm:$0xf]
  %v15 = vld [vmem:[%s1] sm:$0xff]
  %v16 = vld [vmem:[%s1 + $0x8] sm:$0xff]
  %v17 = vld [vmem:[%s1 + $0x10] sm:$0xff]
  %v18 = vld [vmem:[%s1 + $0x18] sm:$0xff]
  %v19 = vld [vmem:[%s1 + $0x20] sm:$0xff]
  %v20 = vld [vmem:[%s1 + $0x28] sm:$0xff]
  %v21 = vld [vmem:[%s1 + $0x30] sm:$0xff]
  %v22 = vld [vmem:[%s1 + $0x38] sm:$0xff]
  %v23 = vld [vmem:[%s1 + $0x40] sm:$0xff]
  %v24 = vld [vmem:[%s1 + $0x48] sm:$0xff]
  %v25 = vld [vmem:[%s1 + $0x50] sm:$0xff]
  %v26 = vld [vmem:[%s1 + $0x58] sm:$0xff]
  %v27 = vld [vmem:[%s1 + $0x60] sm:$0xff]
  %v28 = vld [vmem:[%s1 + $0x68] sm:$0xff]
  %v29 = vld [vmem:[%s1 + $0x70] sm:$0xff]
  %v30 = vld [vmem:[%s1 + $0x78] sm:$0xff]
  %v31 = vld [vmem:[%s1 + $0x80] sm:$0xff]
  %v32 = vld [vmem:[%s1 + $0x88] sm:$0xff]
  %v33 = vld [vmem:[%s1 + $0x90] sm:$0xff]
  %v34 = vld [vmem:[%s1 + $0x98] sm:$0xff]
  %v35 = vld [vmem:[%s1 + $0xa0] sm:$0xff]
  %v36 = vld [vmem:[%s1 + $0xa8] sm:$0xff]
  %v37 = vld [vmem:[%s1 + $0xb0] sm:$0xff]
  %v38 = vld [vmem:[%s1 + $0xb8] sm:$0xff]
  %v39 = vld [vmem:[%s1 + $0xc0] sm:$0xff]
  %v40 = vld [vmem:[%s1 + $0xc8] sm:$0xff]
  %v41 = vld [vmem:[%s1 + $0xd0] sm:$0xff]
  %v42 = vld [vmem:[%s1 + $0xd8] sm:$0xff]
  %v43 = vld [vmem:[%s1 + $0xe0] sm:$0xff]
  %v44 = vld [vmem:[%s1 + $0xe8] sm:$0xff]
  %v45 = vld [vmem:[%s1 + $0xf0] sm:$0xff]
  %v46 = vld [vmem:[%s1 + $0xf8] sm:$0xff]
  %v47 = vld [vmem:[%s1 + $0x100] sm:$0xff]
  %v48 = vld [vmem:[%s1 + $0x108] sm:$0xff]
  %v49 = vld [vmem:[%s1 + $0x110] sm:$0xff]
  %v50 = vld [vmem:[%s1 + $0x118] sm:$0xff]
  %v51 = vld [vmem:[%s1 + $0x120] sm:$0xff]
  %v52 = vld [vmem:[%s1 + $0x128] sm:$0xff]
  %v53 = vld [vmem:[%s1 + $0x130] sm:$0xff]
  %v54 = vld [vmem:[%s1 + $0x138] sm:$0xff]
  %v55 = vld [vmem:[%s1 + $0x140] sm:$0xff]
  %v56 = vld [vmem:[%s1 + $0x148] sm:$0xff]
  %v57 = vld [vmem:[%s1 + $0x150] sm:$0xff]
  %v58 = vld [vmem:[%s1 + $0x158] sm:$0xff]
  %v59 = vld [vmem:[%s1 + $0x160] sm:$0xff]
  %v60 = vld [vmem:[%s1 + $0x168] sm:$0xff]
  %v61 = vld [vmem:[%s1 + $0x170] sm:$0xff]
  %v62 = vld [vmem:[%s1 + $0x178] sm:$0xff]
  %v63 = vld [vmem:[%s1 + $0x180] sm:$0xff]
  %v64 = vld [vmem:[%s1 + $0x188] sm:$0xff]
  %v65 = vld [vmem:[%s1 + $0x190] sm:$0xff]
  %v66 = vld [vmem:[%s1 + $0x198] sm:$0xff]
  %v67 = vld [vmem:[%s1 + $0x1a0] sm:$0xff]
  %v68 = vld [vmem:[%s1 + $0x1a8] sm:$0xff]
  %v69 = vld [vmem:[%s1 + $0x1b0] sm:$0xff]
  %v70 = vld [vmem:[%s1 + $0x1b8] sm:$0xff]
  %v71 = vld [vmem:[%s1 + $0x1c0] sm:$0xff]
  %v72 = vld [vmem:[%s1 + $0x1c8] sm:$0xff]
  %v73 = vld [vmem:[%s1 + $0x1d0] sm:$0xff]
  %v74 = vld [vmem:[%s1 + $0x1d8] sm:$0xff]
  %v75 = vld [vmem:[%s1 + $0x1e0] sm:$0xff]
  %v76 = vld [vmem:[%s1 + $0x1e8] sm:$0xff]
  %v77 = vld [vmem:[%s1 + $0x1f0] sm:$0xff]
  %v78 = vld [vmem:[%s1 + $0x1f8] sm:$0xff]
  %v79 = vld [vmem:[%s2] sm:$0xf]
  %v81 = vlaneseq
  %v82 = vshrl.u32 %v81, 7
  %v83 = vsub.s32 0, %v82
  %v84 = vrot.slane %v79, %v83
  %v85 = vlaneseq
  %v86 = vshrl.u32 %v85, 7
  %v87 = vsub.s32 1, %v86
  %v88 = vrot.slane %v79, %v87
  %v89 = vlaneseq
  %v90 = vshrl.u32 %v89, 7
  %v91 = vsub.s32 2, %v90
  %v92 = vrot.slane %v79, %v91
  %v93 = vlaneseq
  %v94 = vshrl.u32 %v93, 7
  %v95 = vsub.s32 3, %v94
  %v96 = vrot.slane %v79, %v95
  %v103 = vunpack.c.l.s4 1983009808
  %v104 = vunpack.c.0.s8 %v103
  %v105 = vlaneseq
  %v106 = vshrl.u32 %v105, 7
  %v107 = vsub.s32 %v104, %v106
  %v108 = vrot.slane %v14, %v107
  %v109 = vcombine.high %v108, %v108
  %v176 = vunpack.c.l.b16 %v15
  %v177 = vunpack.c.h.b16 %v15
  %v178 = vunpack.c.l.b16 %v16
  %v179 = vunpack.c.h.b16 %v16
  %v180 = vunpack.c.l.b16 %v17
  %v181 = vunpack.c.h.b16 %v17
  %v182 = vunpack.c.l.b16 %v18
  %v183 = vunpack.c.h.b16 %v18
  %v184 = vunpack.c.l.b16 %v19
  %v185 = vunpack.c.h.b16 %v19
  %v186 = vunpack.c.l.b16 %v20
  %v187 = vunpack.c.h.b16 %v20
  %v188 = vunpack.c.l.b16 %v21
  %v189 = vunpack.c.h.b16 %v21
  %v190 = vunpack.c.l.b16 %v22
  %v191 = vunpack.c.h.b16 %v22
  %v192 = vunpack.c.l.b16 %v23
  %v193 = vunpack.c.h.b16 %v23
  %v194 = vunpack.c.l.b16 %v24
  %v195 = vunpack.c.h.b16 %v24
  %v196 = vunpack.c.l.b16 %v25
  %v197 = vunpack.c.h.b16 %v25
  %v198 = vunpack.c.l.b16 %v26
  %v199 = vunpack.c.h.b16 %v26
  %v200 = vunpack.c.l.b16 %v27
  %v201 = vunpack.c.h.b16 %v27
  %v202 = vunpack.c.l.b16 %v28
  %v203 = vunpack.c.h.b16 %v28
  %v204 = vunpack.c.l.b16 %v29
  %v205 = vunpack.c.h.b16 %v29
  %v206 = vunpack.c.l.b16 %v30
  %v207 = vunpack.c.h.b16 %v30
  %v208 = vunpack.c.l.b16 %v31
  %v209 = vunpack.c.h.b16 %v31
  %v210 = vunpack.c.l.b16 %v32
  %v211 = vunpack.c.h.b16 %v32
  %v212 = vunpack.c.l.b16 %v33
  %v213 = vunpack.c.h.b16 %v33
  %v214 = vunpack.c.l.b16 %v34
  %v215 = vunpack.c.h.b16 %v34
  %v216 = vunpack.c.l.b16 %v35
  %v217 = vunpack.c.h.b16 %v35
  %v218 = vunpack.c.l.b16 %v36
  %v219 = vunpack.c.h.b16 %v36
  %v220 = vunpack.c.l.b16 %v37
  %v221 = vunpack.c.h.b16 %v37
  %v222 = vunpack.c.l.b16 %v38
  %v223 = vunpack.c.h.b16 %v38
  %v224 = vunpack.c.l.b16 %v39
  %v225 = vunpack.c.h.b16 %v39
  %v226 = vunpack.c.l.b16 %v40
  %v227 = vunpack.c.h.b16 %v40
  %v228 = vunpack.c.l.b16 %v41
  %v229 = vunpack.c.h.b16 %v41
  %v230 = vunpack.c.l.b16 %v42
  %v231 = vunpack.c.h.b16 %v42
  %v232 = vunpack.c.l.b16 %v43
  %v233 = vunpack.c.h.b16 %v43
  %v234 = vunpack.c.l.b16 %v44
  %v235 = vunpack.c.h.b16 %v44
  %v236 = vunpack.c.l.b16 %v45
  %v237 = vunpack.c.h.b16 %v45
  %v238 = vunpack.c.l.b16 %v46
  %v239 = vunpack.c.h.b16 %v46
  %v240 = vunpack.c.l.b16 %v47
  %v241 = vunpack.c.h.b16 %v47
  %v242 = vunpack.c.l.b16 %v48
  %v243 = vunpack.c.h.b16 %v48
  %v244 = vunpack.c.l.b16 %v49
  %v245 = vunpack.c.h.b16 %v49
  %v246 = vunpack.c.l.b16 %v50
  %v247 = vunpack.c.h.b16 %v50
  %v248 = vunpack.c.l.b16 %v51
  %v249 = vunpack.c.h.b16 %v51
  %v250 = vunpack.c.l.b16 %v52
  %v251 = vunpack.c.h.b16 %v52
  %v252 = vunpack.c.l.b16 %v53
  %v253 = vunpack.c.h.b16 %v53
  %v254 = vunpack.c.l.b16 %v54
  %v255 = vunpack.c.h.b16 %v54
  %v256 = vunpack.c.l.b16 %v55
  %v257 = vunpack.c.h.b16 %v55
  %v258 = vunpack.c.l.b16 %v56
  %v259 = vunpack.c.h.b16 %v56
  %v260 = vunpack.c.l.b16 %v57
  %v261 = vunpack.c.h.b16 %v57
  %v262 = vunpack.c.l.b16 %v58
  %v263 = vunpack.c.h.b16 %v58
  %v264 = vunpack.c.l.b16 %v59
  %v265 = vunpack.c.h.b16 %v59
  %v266 = vunpack.c.l.b16 %v60
  %v267 = vunpack.c.h.b16 %v60
  %v268 = vunpack.c.l.b16 %v61
  %v269 = vunpack.c.h.b16 %v61
  %v270 = vunpack.c.l.b16 %v62
  %v271 = vunpack.c.h.b16 %v62
  %v272 = vunpack.c.l.b16 %v63
  %v273 = vunpack.c.h.b16 %v63
  %v274 = vunpack.c.l.b16 %v64
  %v275 = vunpack.c.h.b16 %v64
  %v276 = vunpack.c.l.b16 %v65
  %v277 = vunpack.c.h.b16 %v65
  %v278 = vunpack.c.l.b16 %v66
  %v279 = vunpack.c.h.b16 %v66
  %v280 = vunpack.c.l.b16 %v67
  %v281 = vunpack.c.h.b16 %v67
  %v282 = vunpack.c.l.b16 %v68
  %v283 = vunpack.c.h.b16 %v68
  %v284 = vunpack.c.l.b16 %v69
  %v285 = vunpack.c.h.b16 %v69
  %v286 = vunpack.c.l.b16 %v70
  %v287 = vunpack.c.h.b16 %v70
  %v288 = vunpack.c.l.b16 %v71
  %v289 = vunpack.c.h.b16 %v71
  %v290 = vunpack.c.l.b16 %v72
  %v291 = vunpack.c.h.b16 %v72
  %v292 = vunpack.c.l.b16 %v73
  %v293 = vunpack.c.h.b16 %v73
  %v294 = vunpack.c.l.b16 %v74
  %v295 = vunpack.c.h.b16 %v74
  %v296 = vunpack.c.l.b16 %v75
  %v297 = vunpack.c.h.b16 %v75
  %v298 = vunpack.c.l.b16 %v76
  %v299 = vunpack.c.h.b16 %v76
  %v300 = vunpack.c.l.b16 %v77
  %v301 = vunpack.c.h.b16 %v77
  %v302 = vunpack.c.l.b16 %v78
  %v303 = vunpack.c.h.b16 %v78
  %v304 = vpack.c.b16 %v180, %v176
  %v305 = vpack.c.b16 %v181, %v177
  %v306 = vpack.c.b16 %v182, %v178
  %v307 = vpack.c.b16 %v183, %v179
  %v308 = vpack.c.b16 %v188, %v184
  %v309 = vpack.c.b16 %v189, %v185
  %v310 = vpack.c.b16 %v190, %v186
  %v311 = vpack.c.b16 %v191, %v187
  %v312 = vpack.c.b16 %v196, %v192
  %v313 = vpack.c.b16 %v197, %v193
  %v314 = vpack.c.b16 %v198, %v194
  %v315 = vpack.c.b16 %v199, %v195
  %v316 = vpack.c.b16 %v204, %v200
  %v317 = vpack.c.b16 %v205, %v201
  %v318 = vpack.c.b16 %v206, %v202
  %v319 = vpack.c.b16 %v207, %v203
  %v320 = vpack.c.b16 %v212, %v208
  %v321 = vpack.c.b16 %v213, %v209
  %v322 = vpack.c.b16 %v214, %v210
  %v323 = vpack.c.b16 %v215, %v211
  %v324 = vpack.c.b16 %v220, %v216
  %v325 = vpack.c.b16 %v221, %v217
  %v326 = vpack.c.b16 %v222, %v218
  %v327 = vpack.c.b16 %v223, %v219
  %v328 = vpack.c.b16 %v228, %v224
  %v329 = vpack.c.b16 %v229, %v225
  %v330 = vpack.c.b16 %v230, %v226
  %v331 = vpack.c.b16 %v231, %v227
  %v332 = vpack.c.b16 %v236, %v232
  %v333 = vpack.c.b16 %v237, %v233
  %v334 = vpack.c.b16 %v238, %v234
  %v335 = vpack.c.b16 %v239, %v235
  %v336 = vpack.c.b16 %v244, %v240
  %v337 = vpack.c.b16 %v245, %v241
  %v338 = vpack.c.b16 %v246, %v242
  %v339 = vpack.c.b16 %v247, %v243
  %v340 = vpack.c.b16 %v252, %v248
  %v341 = vpack.c.b16 %v253, %v249
  %v342 = vpack.c.b16 %v254, %v250
  %v343 = vpack.c.b16 %v255, %v251
  %v344 = vpack.c.b16 %v260, %v256
  %v345 = vpack.c.b16 %v261, %v257
  %v346 = vpack.c.b16 %v262, %v258
  %v347 = vpack.c.b16 %v263, %v259
  %v348 = vpack.c.b16 %v268, %v264
  %v349 = vpack.c.b16 %v269, %v265
  %v350 = vpack.c.b16 %v270, %v266
  %v351 = vpack.c.b16 %v271, %v267
  %v352 = vpack.c.b16 %v276, %v272
  %v353 = vpack.c.b16 %v277, %v273
  %v354 = vpack.c.b16 %v278, %v274
  %v355 = vpack.c.b16 %v279, %v275
  %v356 = vpack.c.b16 %v284, %v280
  %v357 = vpack.c.b16 %v285, %v281
  %v358 = vpack.c.b16 %v286, %v282
  %v359 = vpack.c.b16 %v287, %v283
  %v360 = vpack.c.b16 %v292, %v288
  %v361 = vpack.c.b16 %v293, %v289
  %v362 = vpack.c.b16 %v294, %v290
  %v363 = vpack.c.b16 %v295, %v291
  %v364 = vpack.c.b16 %v300, %v296
  %v365 = vpack.c.b16 %v301, %v297
  %v366 = vpack.c.b16 %v302, %v298
  %v367 = vpack.c.b16 %v303, %v299
  %432 = vmatprep.subr.bf16.mxu0 %v305
  %433 = vmatpush1.bf16.msra.mxu0 %v304
  %434 = vmatprep.subr.bf16.mxu0 %v309
  %435 = vmatpush1.bf16.msra.mxu0 %v308
  %436 = vmatprep.subr.bf16.mxu0 %v313
  %437 = vmatpush1.bf16.msra.mxu0 %v312
  %438 = vmatprep.subr.bf16.mxu0 %v317
  %439 = vmatpush1.bf16.msra.mxu0 %v316
  %440 = vmatprep.subr.bf16.mxu0 %v321
  %441 = vmatpush1.bf16.msra.mxu0 %v320
  %442 = vmatprep.subr.bf16.mxu0 %v325
  %443 = vmatpush1.bf16.msra.mxu0 %v324
  %444 = vmatprep.subr.bf16.mxu0 %v329
  %445 = vmatpush1.bf16.msra.mxu0 %v328
  %446 = vmatprep.subr.bf16.mxu0 %v333
  %447 = vmatpush1.bf16.msra.mxu0 %v332
  %448 = vmatprep.subr.bf16.mxu0 %v337
  %449 = vmatpush1.bf16.msra.mxu0 %v336
  %450 = vmatprep.subr.bf16.mxu0 %v341
  %451 = vmatpush1.bf16.msra.mxu0 %v340
  %452 = vmatprep.subr.bf16.mxu0 %v345
  %453 = vmatpush1.bf16.msra.mxu0 %v344
  %454 = vmatprep.subr.bf16.mxu0 %v349
  %455 = vmatpush1.bf16.msra.mxu0 %v348
  %456 = vmatprep.subr.bf16.mxu0 %v353
  %457 = vmatpush1.bf16.msra.mxu0 %v352
  %458 = vmatprep.subr.bf16.mxu0 %v357
  %459 = vmatpush1.bf16.msra.mxu0 %v356
  %460 = vmatprep.subr.bf16.mxu0 %v361
  %461 = vmatpush1.bf16.msra.mxu0 %v360
  %462 = vmatprep.subr.bf16.mxu0 %v365
  %463 = vmatpush1.bf16.msra.mxu0 %v364
  %464 = vmatprep.mubr.bf16.mxu0 %v109
  %465 = vmatmul.mubr.bf16.gmra.mrb[0].mxu0 %v108
  %v466 = vpop.f32.mrb[0].mxu0
  %v467 = vadd.f32 %v84, %v466
  %v468 = vpop.f32.mrb[0].mxu0
  %v469 = vadd.f32 %v88, %v468
  %v470 = vpop.f32.mrb[0].mxu0
  %v471 = vpop.f32.mrb[0].mxu0
  %472 = vdwg.mxu0
  %473 = vmatprep.subr.bf16.mxu0 %v307
  %474 = vmatpush1.bf16.msra.mxu0 %v306
  %475 = vmatprep.subr.bf16.mxu0 %v311
  %476 = vmatpush1.bf16.msra.mxu0 %v310
  %477 = vmatprep.subr.bf16.mxu0 %v315
  %478 = vmatpush1.bf16.msra.mxu0 %v314
  %479 = vmatprep.subr.bf16.mxu0 %v319
  %480 = vmatpush1.bf16.msra.mxu0 %v318
  %481 = vmatprep.subr.bf16.mxu0 %v323
  %482 = vmatpush1.bf16.msra.mxu0 %v322
  %483 = vmatprep.subr.bf16.mxu0 %v327
  %484 = vmatpush1.bf16.msra.mxu0 %v326
  %485 = vmatprep.subr.bf16.mxu0 %v331
  %486 = vmatpush1.bf16.msra.mxu0 %v330
  %487 = vmatprep.subr.bf16.mxu0 %v335
  %488 = vmatpush1.bf16.msra.mxu0 %v334
  %489 = vmatprep.subr.bf16.mxu0 %v339
  %490 = vmatpush1.bf16.msra.mxu0 %v338
  %491 = vmatprep.subr.bf16.mxu0 %v343
  %492 = vmatpush1.bf16.msra.mxu0 %v342
  %493 = vmatprep.subr.bf16.mxu0 %v347
  %494 = vmatpush1.bf16.msra.mxu0 %v346
  %495 = vmatprep.subr.bf16.mxu0 %v351
  %496 = vmatpush1.bf16.msra.mxu0 %v350
  %497 = vmatprep.subr.bf16.mxu0 %v355
  %498 = vmatpush1.bf16.msra.mxu0 %v354
  %499 = vmatprep.subr.bf16.mxu0 %v359
  %500 = vmatpush1.bf16.msra.mxu0 %v358
  %501 = vmatprep.subr.bf16.mxu0 %v363
  %502 = vmatpush1.bf16.msra.mxu0 %v362
  %503 = vmatprep.subr.bf16.mxu0 %v367
  %504 = vmatpush1.bf16.msra.mxu0 %v366
  %505 = vmatprep.mubr.bf16.mxu0 %v109
  %506 = vmatmul.mubr.bf16.gmra.mrb[0].mxu0 %v108
  %v507 = vpop.f32.mrb[0].mxu0
  %v508 = vadd.f32 %v92, %v507
  %v509 = vpop.f32.mrb[0].mxu0
  %v510 = vadd.f32 %v96, %v509
  %v511 = vpop.f32.mrb[0].mxu0
  %v512 = vpop.f32.mrb[0].mxu0
  %513 = vdwg.mxu0
  %v518 = vcombine.low %v467, %v469
  %v519 = vcombine.low %v508, %v510
  %522 = vst [vmem:[%s3] sm:$0xff] %v518
  %523 = vst [vmem:[%s3 + $0x8] sm:$0xff] %v519
  // Predicated region
  $region14: #{net_forward.11} parent=0 // pred_check
    _
  $region15: #{net_forward.11} parent=0 // pred_check_branch
    %525 = sbr.rel (0) target = $region17
  $region16: #{net_forward.11} parent=0 // pred_region
    _
  $region17: #{net_forward.11} parent=0 // pred_fallthru
    _
  // Predicated region
  $region18: #{net_forward.11} parent=0 // pred_check
    _
  $region19: #{net_forward.11} parent=0 // pred_check_branch
    %527 = sbr.rel (0) target = $region21
  $region20: #{net_forward.11} parent=0 // pred_region
    _
  $region21: #{net_forward.11} parent=0 // pred_fallthru
    _

// kernel: net_forward.12
$region0: #{net_forward.12}
  #allocation0 [shape = 'u32[]', space=smem, size = 0x4, offset = 0x4, fixed_abs, tag = 'smem constant byte address 0x4 - core index']
  #allocation1 [shape = 'u32[144,128]{1,0:T(1,128)}', space=vmem, size = 0x12000, scoped, tag = 'internal scratch']
  %s0 = inlined_call_operand.vmem [shape: f32[2,16,256], index: 0, kind: input, shape index: {}]
  %s1 = inlined_call_operand.vmem [shape: f32[2,2,256], index: 1, kind: input, shape index: {}]
  %s2 = inlined_call_operand.vmem [shape: f32[2,2,256], index: 2, kind: input, shape index: {}]
  %s3 = inlined_call_operand.vmem [shape: bf16[256,128], index: 3, kind: input, shape index: {}]
  %s4 = inlined_call_operand.vmem [shape: f32[1,128], index: 4, kind: input, shape index: {}]
  %s5 = inlined_call_operand.vmem [shape: f32[2,2,16,128], index: 5, kind: output, shape index: {}]
  %s6 = sld [smem:[#allocation0]]
  $region53: #{net_forward.12} parent=0
    _
  %s8 = ssub.s32 1, %s6
  %s9 = scalar_select 0, %s8, %s6
  loop: start=0, step=1, limit=4
  $region2: #{net_forward.12} parent=0 // loop_pre_header
    _
  $region3: #{net_forward.12} parent=0 // loop_header
    %s11 = sphi 0, %s15
    %p12 = scmp.ge.s32.totalorder %s11, 4
    %s21 = sphi 0, %s23
    %s24 = sphi 0, %s21
    %s25 = sphi 0, %s24
    %s41 = sphi 0, %s25
    %s47 = sphi 0, %s49
    %s50 = sphi 0, %s47
    %s51 = sphi 0, %s50
    %s67 = sphi 0, %s51
    %s73 = sphi 0, %s75
    %s76 = sphi 0, %s73
    %s77 = sphi 0, %s76
    %s93 = sphi 0, %s77
    %s97 = sphi 0, %s97
    %s99 = sphi 0, %s97
    %s100 = sphi 0, %s99
    %s114 = sphi 0, %s100
    %s118 = sphi 0, %s118
    %s120 = sphi 0, %s118
    %s121 = sphi 0, %s120
    %s135 = sphi 0, %s121
    %s141 = sphi 0, %s143
    %s144 = sphi 0, %s141
    %s145 = sphi 0, %s144
    %s161 = sphi 0, %s145
  $region4: #{net_forward.12} parent=0 // loop_header_branch
    %14 = sbr.rel (%p12) target = $region8
  $region5: #{net_forward.12} parent=0 // loop_body
    %s16 = ssub.s32 %s11, 1
    %s17 = ssub.s32 %s11, 2
    %s18 = sadd.s32 %s11, 1
    %s19 = ssub.s32 %s11, %s18
    %p20 = scmp.eq.s32.totalorder %s19, 0
    %s22 = sadd.s32 %s21, 1
    %s23 = scalar_select %p20, %s21, %s22
    %p26 = pneg %p20
    %p27 = scmp.eq.s32.totalorder %s11, 1
    %p28 = por %p26, %p27
    %p29 = scmp.ne.s32.totalorder %s21, %s24
    %p30 = scmp.eq.s32.totalorder %s11, 0
    %p31 = por %p29, %p30
    %p32 = scmp.ne.s32.totalorder %s21, %s24
    %p33 = scmp.eq.s32.totalorder %s16, 1
    %p34 = por %p32, %p33
    %p35 = scmp.ne.s32.totalorder %s24, %s25
    %p36 = scmp.eq.s32.totalorder %s16, 0
    %p37 = por %p35, %p36
    %p38 = scmp.ne.s32.totalorder %s24, %s25
    %p39 = scmp.eq.s32.totalorder %s17, 1
    %p40 = por %p38, %p39
    %p42 = scmp.ne.s32.totalorder %s25, %s41
    %p43 = scmp.eq.s32.totalorder %s17, 0
    %p44 = por %p42, %p43
    %s45 = ssub.s32 %s11, %s18
    %p46 = scmp.eq.s32.totalorder %s45, 0
    %s48 = sadd.s32 %s47, 1
    %s49 = scalar_select %p46, %s47, %s48
    %p52 = pneg %p46
    %p53 = scmp.eq.s32.totalorder %s11, 1
    %p54 = por %p52, %p53
    %p55 = scmp.ne.s32.totalorder %s47, %s50
    %p56 = scmp.eq.s32.totalorder %s11, 0
    %p57 = por %p55, %p56
    %p58 = scmp.ne.s32.totalorder %s47, %s50
    %p59 = scmp.eq.s32.totalorder %s16, 1
    %p60 = por %p58, %p59
    %p61 = scmp.ne.s32.totalorder %s50, %s51
    %p62 = scmp.eq.s32.totalorder %s16, 0
    %p63 = por %p61, %p62
    %p64 = scmp.ne.s32.totalorder %s50, %s51
    %p65 = scmp.eq.s32.totalorder %s17, 1
    %p66 = por %p64, %p65
    %p68 = scmp.ne.s32.totalorder %s51, %s67
    %p69 = scmp.eq.s32.totalorder %s17, 0
    %p70 = por %p68, %p69
    %s71 = ssub.s32 %s11, %s18
    %p72 = scmp.eq.s32.totalorder %s71, 0
    %s74 = sadd.s32 %s73, 1
    %s75 = scalar_select %p72, %s73, %s74
    %p78 = pneg %p72
    %p79 = scmp.eq.s32.totalorder %s11, 1
    %p80 = por %p78, %p79
    %p81 = scmp.ne.s32.totalorder %s73, %s76
    %p82 = scmp.eq.s32.totalorder %s11, 0
    %p83 = por %p81, %p82
    %p84 = scmp.ne.s32.totalorder %s73, %s76
    %p85 = scmp.eq.s32.totalorder %s16, 1
    %p86 = por %p84, %p85
    %p87 = scmp.ne.s32.totalorder %s76, %s77
    %p88 = scmp.eq.s32.totalorder %s16, 0
    %p89 = por %p87, %p88
    %p90 = scmp.ne.s32.totalorder %s76, %s77
    %p91 = scmp.eq.s32.totalorder %s17, 1
    %p92 = por %p90, %p91
    %p94 = scmp.ne.s32.totalorder %s77, %s93
    %p95 = scmp.eq.s32.totalorder %s17, 0
    %p96 = por %p94, %p95
    %s98 = sadd.s32 %s97, 1
    %p101 = scmp.eq.s32.totalorder %s11, 1
    %p102 = scmp.ne.s32.totalorder %s97, %s99
    %p103 = scmp.eq.s32.totalorder %s11, 0
    %p104 = por %p102, %p103
    %p105 = scmp.ne.s32.totalorder %s97, %s99
    %p106 = scmp.eq.s32.totalorder %s16, 1
    %p107 = por %p105, %p106
    %p108 = scmp.ne.s32.totalorder %s99, %s100
    %p109 = scmp.eq.s32.totalorder %s16, 0
    %p110 = por %p108, %p109
    %p111 = scmp.ne.s32.totalorder %s99, %s100
    %p112 = scmp.eq.s32.totalorder %s17, 1
    %p113 = por %p111, %p112
    %p115 = scmp.ne.s32.totalorder %s100, %s114
    %p116 = scmp.eq.s32.totalorder %s17, 0
    %p117 = por %p115, %p116
    %s119 = sadd.s32 %s118, 1
    %p122 = scmp.eq.s32.totalorder %s11, 1
    %p123 = scmp.ne.s32.totalorder %s118, %s120
    %p124 = scmp.eq.s32.totalorder %s11, 0
    %p125 = por %p123, %p124
    %p126 = scmp.ne.s32.totalorder %s118, %s120
    %p127 = scmp.eq.s32.totalorder %s16, 1
    %p128 = por %p126, %p127
    %p129 = scmp.ne.s32.totalorder %s120, %s121
    %p130 = scmp.eq.s32.totalorder %s16, 0
    %p131 = por %p129, %p130
    %p132 = scmp.ne.s32.totalorder %s120, %s121
    %p133 = scmp.eq.s32.totalorder %s17, 1
    %p134 = por %p132, %p133
    %p136 = scmp.ne.s32.totalorder %s121, %s135
    %p137 = scmp.eq.s32.totalorder %s17, 0
    %p138 = por %p136, %p137
    %s139 = ssub.s32 %s11, %s18
    %p140 = scmp.eq.s32.totalorder %s139, 0
    %s142 = sadd.s32 %s141, 1
    %s143 = scalar_select %p140, %s141, %s142
    %p146 = pneg %p140
    %p147 = scmp.eq.s32.totalorder %s11, 1
    %p148 = por %p146, %p147
    %p149 = scmp.ne.s32.totalorder %s141, %s144
    %p150 = scmp.eq.s32.totalorder %s11, 0
    %p151 = por %p149, %p150
    %p152 = scmp.ne.s32.totalorder %s141, %s144
    %p153 = scmp.eq.s32.totalorder %s16, 1
    %p154 = por %p152, %p153
    %p155 = scmp.ne.s32.totalorder %s144, %s145
    %p156 = scmp.eq.s32.totalorder %s16, 0
    %p157 = por %p155, %p156
    %p158 = scmp.ne.s32.totalorder %s144, %s145
    %p159 = scmp.eq.s32.totalorder %s17, 1
    %p160 = por %p158, %p159
    %p162 = scmp.ne.s32.totalorder %s145, %s161
    %p163 = scmp.eq.s32.totalorder %s17, 0
    %p164 = por %p162, %p163
    %p165 = scmp.le.s32.totalorder 1, %s11
    %p166 = scmp.lt.s32.totalorder %s11, 3
    %p167 = pnand %p165, %p166
    %p168 = pneg %p167
    // Predicated region
    $region9: #{net_forward.12} parent=5 // pred_check
      _
    $region10: #{net_forward.12} parent=5 // pred_check_branch
      %170 = sbr.rel (%p167) target = $region12
    $region11: #{net_forward.12} parent=5 // pred_region
      %s171 = ssub.s32 %s11, 1
      // Predicated region
      $region13: #{net_forward.12} parent=11 // pred_check
        %p172 = pneg %p110
      $region14: #{net_forward.12} parent=11 // pred_check_branch
        %174 = sbr.rel (%p172) target = $region16
      $region15: #{net_forward.12} parent=11 // pred_region
        _
      $region16: #{net_forward.12} parent=11 // pred_fallthru
        _
      // Predicated region
      $region17: #{net_forward.12} parent=11 // pred_check
        %p175 = pneg %p131
      $region18: #{net_forward.12} parent=11 // pred_check_branch
        %177 = sbr.rel (%p175) target = $region20
      $region19: #{net_forward.12} parent=11 // pred_region
        _
      $region20: #{net_forward.12} parent=11 // pred_fallthru
        _
    $region12: #{net_forward.12} parent=5 // pred_fallthru
      _
    %p178 = scmp.lt.s32.totalorder %s11, 2
    // Predicated region
    $region21: #{net_forward.12} parent=5 // pred_check
      %p179 = pneg %p178
    $region22: #{net_forward.12} parent=5 // pred_check_branch
      %181 = sbr.rel (%p179) target = $region24
    $region23: #{net_forward.12} parent=5 // pred_region
      // Predicated region
      $region25: #{net_forward.12} parent=23 // pred_check
        %p182 = pneg %p31
      $region26: #{net_forward.12} parent=23 // pred_check_branch
        %184 = sbr.rel (%p182) target = $region28
      $region27: #{net_forward.12} parent=23 // pred_region
        %p185 = scmp.lt.s32.totalorder %s11, 1
        %s186 = scalar_select %p185, %s11, 1
        %s187 = smul.addr %s186, 4
        %s188 = smul.addr %s187, 8
        %s189 = scalar_lea.vmem %s0, %s188
      $region28: #{net_forward.12} parent=23 // pred_fallthru
        _
      // Predicated region
      $region29: #{net_forward.12} parent=23 // pred_check
        %p190 = pneg %p57
      $region30: #{net_forward.12} parent=23 // pred_check_branch
        %192 = sbr.rel (%p190) target = $region32
      $region31: #{net_forward.12} parent=23 // pred_region
        %p193 = scmp.lt.s32.totalorder %s11, 1
        %s194 = scalar_select %p193, %s11, 1
        %s195 = smul.addr %s194, 2
        %s196 = smul.addr %s195, 2
        %s197 = scalar_lea.vmem %s1, %s196
      $region32: #{net_forward.12} parent=23 // pred_fallthru
        _
      // Predicated region
      $region33: #{net_forward.12} parent=23 // pred_check
        %p198 = pneg %p83
      $region34: #{net_forward.12} parent=23 // pred_check_branch
        %200 = sbr.rel (%p198) target = $region36
      $region35: #{net_forward.12} parent=23 // pred_region
        %p201 = scmp.lt.s32.totalorder %s11, 1
        %s202 = scalar_select %p201, %s11, 1
        %s203 = smul.addr %s202, 2
        %s204 = smul.addr %s203, 2
        %s205 = scalar_lea.vmem %s2, %s204
      $region36: #{net_forward.12} parent=23 // pred_fallthru
        _
    $region24: #{net_forward.12} parent=5 // pred_fallthru
      _
    %p206 = scmp.le.s32.totalorder 1, %s11
    %p207 = scmp.lt.s32.totalorder %s11, 3
    %p208 = pnand %p206, %p207
    %p209 = pneg %p208
    // Predicated region
    $region37: #{net_forward.12} parent=5 // pred_check
      _
    $region38: #{net_forward.12} parent=5 // pred_check_branch
      %211 = sbr.rel (%p208) target = $region40
    $region39: #{net_forward.12} parent=5 // pred_region
      %s212 = ssub.s32 %s11, 1
      %p213 = scmp.lt.s32.totalorder %s16, 1
      %s214 = scalar_select %p213, %s16, 1
      %s215 = smul.addr %s214, 4
      %s216 = smul.addr %s215, 8
      %s217 = scalar_lea.vmem %s0, %s216
      %p218 = pneg %p37
      %p219 = pneg %p34
      %p220 = scmp.lt.s32.totalorder %s16, 1
      %s221 = scalar_select %p220, %s16, 1
      %s222 = smul.addr %s221, 2
      %s223 = smul.addr %s222, 2
      %s224 = scalar_lea.vmem %s1, %s223
      %p225 = pneg %p63
      %p226 = pneg %p60
      %p227 = scmp.lt.s32.totalorder %s16, 1
      %s228 = scalar_select %p227, %s16, 1
      %s229 = smul.addr %s228, 2
      %s230 = smul.addr %s229, 2
      %s231 = scalar_lea.vmem %s2, %s230
      %p232 = pneg %p89
      %p233 = pneg %p86
      %p234 = pneg %p110
      %p235 = pneg %p107
      %p236 = pneg %p131
      %p237 = pneg %p128
      %p238 = pneg %p157
      %p239 = pneg %p154
      %p240 = scmp.lt.s32.totalorder %s16, 1
      %s241 = scalar_select %p240, %s16, 1
      %s242 = smul.addr %s241, 4
      %s243 = smul.addr %s242, 8
      %s244 = scalar_lea.vmem %s5, %s243
      %p245 = scmp.lt.s32.totalorder %s16, 1
      %s246 = scalar_select %p245, %s16, 1
      %s247 = smul.addr %s246, 4
      %s248 = smul.addr %s247, 8
      %s249 = scalar_lea.vmem %s0, %s248
      %p250 = scmp.lt.s32.totalorder %s16, 1
      %s251 = scalar_select %p250, %s16, 1
      %s252 = smul.addr %s251, 2
      %s253 = smul.addr %s252, 2
      %s254 = scalar_lea.vmem %s1, %s253
      %p255 = scmp.lt.s32.totalorder %s16, 1
      %s256 = scalar_select %p255, %s16, 1
      %s257 = smul.addr %s256, 2
      %s258 = smul.addr %s257, 2
      %s259 = scalar_lea.vmem %s2, %s258
      %p260 = scmp.lt.s32.totalorder %s16, 1
      %s261 = scalar_select %p260, %s16, 1
      %s262 = smul.addr %s261, 4
      %s263 = smul.addr %s262, 8
      %s264 = scalar_lea.vmem %s5, %s263
      %v266 = vld [vmem:[%s249] sm:$0xff]
      %v267 = vld [vmem:[%s249 + $0x8] sm:$0xff]
      %v268 = vld [vmem:[%s249 + $0x10] sm:$0xff]
      %v269 = vld [vmem:[%s249 + $0x18] sm:$0xff]
      %v270 = vadd.f32 %v266, %v267
      %271 = vadd.xlane.f32.xlu0 %v270
      %v272 = vpop.xlane.xlu0 %271
      %v273 = vadd.f32 %v268, %v269
      %274 = vadd.xlane.f32.xlu0 %v273
      %v275 = vpop.xlane.xlu0 %274
      %v276 = vmul.f32 %v272, 0.00390625
      %v277 = vmul.f32 %v275, 0.00390625
      %v278 = vsub.f32 %v266, %v276
      %v279 = vsub.f32 %v267, %v276
      %v280 = vsub.f32 %v268, %v277
      %v281 = vsub.f32 %v269, %v277
      %v282 = vmul.f32 %v278, %v278
      %v283 = vmul.f32 %v279, %v279
      %v284 = vmul.f32 %v280, %v280
      %v285 = vmul.f32 %v281, %v281
      %v286 = vadd.f32 %v282, %v283
      %287 = vadd.xlane.f32.xlu0 %v286
      %v288 = vpop.xlane.xlu0 %287
      %v289 = vadd.f32 %v284, %v285
      %290 = vadd.xlane.f32.xlu0 %v289
      %v291 = vpop.xlane.xlu0 %290
      %v292 = vmul.f32 %v288, 0.00390625
      %v293 = vmul.f32 %v291, 0.00390625
      %v294 = vadd.f32 %v292, 1e-12
      %v295 = vadd.f32 %v293, 1e-12
      %v296 = vrsqrt.pop %v294
      %v297 = vrsqrt.pop %v295
      %v298 = vmul.f32 %v278, %v296
      %v299 = vmul.f32 %v279, %v296
      %v300 = vmul.f32 %v280, %v297
      %v301 = vmul.f32 %v281, %v297
      %v302 = vld [vmem:[%s254] sm:$0xf]
      %v303 = vld [vmem:[%s259] sm:$0xf]
      %v306 = vunpack.c.l.s4 1966171168
      %v307 = vunpack.c.0.s8 %v306
      %v308 = vlaneseq
      %v309 = vshrl.u32 %v308, 7
      %v310 = vsub.s32 %v307, %v309
      %v311 = vrot.slane %v303, %v310
      %v312 = vcombine.high %v311, %v311
      %v313 = vlaneseq
      %v314 = vshrl.u32 %v313, 7
      %v315 = vsub.s32 0, %v314
      %v316 = vrot.slane %v311, %v315
      %v317 = vlaneseq
      %v318 = vshrl.u32 %v317, 7
      %v319 = vsub.s32 1, %v318
      %v320 = vrot.slane %v311, %v319
      %v321 = vlaneseq
      %v322 = vshrl.u32 %v321, 7
      %v323 = vsub.s32 0, %v322
      %v324 = vrot.slane %v312, %v323
      %v325 = vlaneseq
      %v326 = vshrl.u32 %v325, 7
      %v327 = vsub.s32 1, %v326
      %v328 = vrot.slane %v312, %v327
      %v333 = vmul.f32 %v298, %v316
      %v334 = vmul.f32 %v299, %v320
      %v335 = vmul.f32 %v300, %v316
      %v336 = vmul.f32 %v301, %v320
      %v337 = vmul.f32 %v298, %v324
      %v338 = vmul.f32 %v299, %v328
      %v339 = vmul.f32 %v300, %v324
      %v340 = vmul.f32 %v301, %v328
      %v343 = vunpack.c.l.s4 1966171168
      %v344 = vunpack.c.0.s8 %v343
      %v345 = vlaneseq
      %v346 = vshrl.u32 %v345, 7
      %v347 = vsub.s32 %v344, %v346
      %v348 = vrot.slane %v302, %v347
      %v349 = vcombine.high %v348, %v348
      %v350 = vlaneseq
      %v351 = vshrl.u32 %v350, 7
      %v352 = vsub.s32 0, %v351
      %v353 = vrot.slane %v348, %v352
      %v354 = vlaneseq
      %v355 = vshrl.u32 %v354, 7
      %v356 = vsub.s32 1, %v355
      %v357 = vrot.slane %v348, %v356
      %v358 = vlaneseq
      %v359 = vshrl.u32 %v358, 7
      %v360 = vsub.s32 0, %v359
      %v361 = vrot.slane %v349, %v360
      %v362 = vlaneseq
      %v363 = vshrl.u32 %v362, 7
      %v364 = vsub.s32 1, %v363
      %v365 = vrot.slane %v349, %v364
      %v370 = vadd.f32 %v333, %v353
      %v371 = vadd.f32 %v334, %v357
      %v372 = vadd.f32 %v335, %v353
      %v373 = vadd.f32 %v336, %v357
      %v374 = vadd.f32 %v337, %v361
      %v375 = vadd.f32 %v338, %v365
      %v376 = vadd.f32 %v339, %v361
      %v377 = vadd.f32 %v340, %v365
      %v378 = vpack.c.bf16 %v372, %v370
      %v379 = vpack.c.bf16 %v373, %v371
      %v380 = vpack.c.bf16 %v376, %v374
      %v381 = vpack.c.bf16 %v377, %v375
      %v382 = vld [vmem:[%s3] sm:$0xf]
      %v383 = vld [vmem:[%s3 + $0x4] sm:$0xf]
      %v384 = vld [vmem:[%s3 + $0x8] sm:$0xf]
      %v385 = vld [vmem:[%s3 + $0xc] sm:$0xf]
      %v386 = vld [vmem:[%s3 + $0x10] sm:$0xf]
      %v387 = vld [vmem:[%s3 + $0x14] sm:$0xf]
      %v388 = vld [vmem:[%s3 + $0x18] sm:$0xf]
      %v389 = vld [vmem:[%s3 + $0x1c] sm:$0xf]
      %v390 = vld [vmem:[%s3 + $0x20] sm:$0xf]
      %v391 = vld [vmem:[%s3 + $0x24] sm:$0xf]
      %v392 = vld [vmem:[%s3 + $0x28] sm:$0xf]
      %v393 = vld [vmem:[%s3 + $0x2c] sm:$0xf]
      %v394 = vld [vmem:[%s3 + $0x30] sm:$0xf]
      %v395 = vld [vmem:[%s3 + $0x34] sm:$0xf]
      %v396 = vld [vmem:[%s3 + $0x38] sm:$0xf]
      %v397 = vld [vmem:[%s3 + $0x3c] sm:$0xf]
      %v398 = vld [vmem:[%s3 + $0x40] sm:$0xf]
      %v399 = vld [vmem:[%s3 + $0x44] sm:$0xf]
      %v400 = vld [vmem:[%s3 + $0x48] sm:$0xf]
      %v401 = vld [vmem:[%s3 + $0x4c] sm:$0xf]
      %v402 = vld [vmem:[%s3 + $0x50] sm:$0xf]
      %v403 = vld [vmem:[%s3 + $0x54] sm:$0xf]
      %v404 = vld [vmem:[%s3 + $0x58] sm:$0xf]
      %v405 = vld [vmem:[%s3 + $0x5c] sm:$0xf]
      %v406 = vld [vmem:[%s3 + $0x60] sm:$0xf]
      %v407 = vld [vmem:[%s3 + $0x64] sm:$0xf]
      %v408 = vld [vmem:[%s3 + $0x68] sm:$0xf]
      %v409 = vld [vmem:[%s3 + $0x6c] sm:$0xf]
      %v410 = vld [vmem:[%s3 + $0x70] sm:$0xf]
      %v411 = vld [vmem:[%s3 + $0x74] sm:$0xf]
      %v412 = vld [vmem:[%s3 + $0x78] sm:$0xf]
      %v413 = vld [vmem:[%s3 + $0x7c] sm:$0xf]
      %v414 = vld [vmem:[%s4] sm:$0x1]
      %v416 = vlaneseq
      %v417 = vshrl.u32 %v416, 7
      %v418 = vsub.s32 0, %v417
      %v419 = vrot.slane %v414, %v418
      %v453 = vunpack.c.l.b16 %v382
      %v454 = vunpack.c.l.b16 %v383
      %v455 = vunpack.c.l.b16 %v384
      %v456 = vunpack.c.l.b16 %v385
      %v457 = vunpack.c.l.b16 %v386
      %v458 = vunpack.c.l.b16 %v387
      %v459 = vunpack.c.l.b16 %v388
      %v460 = vunpack.c.l.b16 %v389
      %v461 = vunpack.c.l.b16 %v390
      %v462 = vunpack.c.l.b16 %v391
      %v463 = vunpack.c.l.b16 %v392
      %v464 = vunpack.c.l.b16 %v393
      %v465 = vunpack.c.l.b16 %v394
      %v466 = vunpack.c.l.b16 %v395
      %v467 = vunpack.c.l.b16 %v396
      %v468 = vunpack.c.l.b16 %v397
      %v469 = vunpack.c.l.b16 %v398
      %v470 = vunpack.c.l.b16 %v399
      %v471 = vunpack.c.l.b16 %v400
      %v472 = vunpack.c.l.b16 %v401
      %v473 = vunpack.c.l.b16 %v402
      %v474 = vunpack.c.l.b16 %v403
      %v475 = vunpack.c.l.b16 %v404
      %v476 = vunpack.c.l.b16 %v405
      %v477 = vunpack.c.l.b16 %v406
      %v478 = vunpack.c.l.b16 %v407
      %v479 = vunpack.c.l.b16 %v408
      %v480 = vunpack.c.l.b16 %v409
      %v481 = vunpack.c.l.b16 %v410
      %v482 = vunpack.c.l.b16 %v411
      %v483 = vunpack.c.l.b16 %v412
      %v484 = vunpack.c.l.b16 %v413
      %v485 = vpack.c.b16 %v454, %v453
      %v486 = vpack.c.b16 %v456, %v455
      %v487 = vpack.c.b16 %v458, %v457
      %v488 = vpack.c.b16 %v460, %v459
      %v489 = vpack.c.b16 %v462, %v461
      %v490 = vpack.c.b16 %v464, %v463
      %v491 = vpack.c.b16 %v466, %v465
      %v492 = vpack.c.b16 %v468, %v467
      %v493 = vpack.c.b16 %v470, %v469
      %v494 = vpack.c.b16 %v472, %v471
      %v495 = vpack.c.b16 %v474, %v473
      %v496 = vpack.c.b16 %v476, %v475
      %v497 = vpack.c.b16 %v478, %v477
      %v498 = vpack.c.b16 %v480, %v479
      %v499 = vpack.c.b16 %v482, %v481
      %v500 = vpack.c.b16 %v484, %v483
      %517 = vmatprep.subr.bf16.mxu0 0
      %518 = vmatpush1.bf16.msra.mxu0 %v485
      %519 = vmatprep.subr.bf16.mxu0 0
      %520 = vmatpush1.bf16.msra.mxu0 %v486
      %521 = vmatprep.subr.bf16.mxu0 0
      %522 = vmatpush1.bf16.msra.mxu0 %v487
      %523 = vmatprep.subr.bf16.mxu0 0
      %524 = vmatpush1.bf16.msra.mxu0 %v488
      %525 = vmatprep.subr.bf16.mxu0 0
      %526 = vmatpush1.bf16.msra.mxu0 %v489
      %527 = vmatprep.subr.bf16.mxu0 0
      %528 = vmatpush1.bf16.msra.mxu0 %v490
      %529 = vmatprep.subr.bf16.mxu0 0
      %530 = vmatpush1.bf16.msra.mxu0 %v491
      %531 = vmatprep.subr.bf16.mxu0 0
      %532 = vmatpush1.bf16.msra.mxu0 %v492
      %533 = vmatprep.subr.bf16.mxu0 0
      %534 = vmatpush1.bf16.msra.mxu0 %v493
      %535 = vmatprep.subr.bf16.mxu0 0
      %536 = vmatpush1.bf16.msra.mxu0 %v494
      %537 = vmatprep.subr.bf16.mxu0 0
      %538 = vmatpush1.bf16.msra.mxu0 %v495
      %539 = vmatprep.subr.bf16.mxu0 0
      %540 = vmatpush1.bf16.msra.mxu0 %v496
      %541 = vmatprep.subr.bf16.mxu0 0
      %542 = vmatpush1.bf16.msra.mxu0 %v497
      %543 = vmatprep.subr.bf16.mxu0 0
      %544 = vmatpush1.bf16.msra.mxu0 %v498
      %545 = vmatprep.subr.bf16.mxu0 0
      %546 = vmatpush1.bf16.msra.mxu0 %v499
      %547 = vmatprep.subr.bf16.mxu0 0
      %548 = vmatpush1.bf16.msra.mxu0 %v500
      %549 = vmatprep.mubr.bf16.mxu0 %v379
      %550 = vmatmul.mubr.bf16.gmra.mrb[0].mxu0 %v378
      %v551 = vpop.f32.mrb[0].mxu0
      %v552 = vadd.f32 %v419, %v551
      %v553 = vpop.f32.mrb[0].mxu0
      %v554 = vpop.f32.mrb[0].mxu0
      %v555 = vadd.f32 %v419, %v554
      %v556 = vpop.f32.mrb[0].mxu0
      %557 = vmatprep.mubr.bf16.mxu0 %v381
      %558 = vmatmul.mubr.bf16.gmra.mrb[0].mxu0 %v380
      %v559 = vpop.f32.mrb[0].mxu0
      %v560 = vadd.f32 %v419, %v559
      %v561 = vpop.f32.mrb[0].mxu0
      %v562 = vpop.f32.mrb[0].mxu0
      %v563 = vadd.f32 %v419, %v562
      %v564 = vpop.f32.mrb[0].mxu0
      %565 = vdwg.mxu0
      %566 = vst [vmem:[%s264] sm:$0xff] %v552
      %567 = vst [vmem:[%s264 + $0x8] sm:$0xff] %v555
      %568 = vst [vmem:[%s264 + $0x10] sm:$0xff] %v560
      %569 = vst [vmem:[%s264 + $0x18] sm:$0xff] %v563
      %p570 = scmp.lt.s32.totalorder %s16, 1
      %s571 = scalar_select %p570, %s16, 1
      %s572 = smul.addr %s571, 4
      %s573 = smul.addr %s572, 8
      %s574 = scalar_lea.vmem %s5, %s573
      // Predicated region
      $region41: #{net_forward.12} parent=39 // pred_check
        %p575 = pneg %p154
      $region42: #{net_forward.12} parent=39 // pred_check_branch
        %577 = sbr.rel (%p575) target = $region44
      $region43: #{net_forward.12} parent=39 // pred_region
        _
      $region44: #{net_forward.12} parent=39 // pred_fallthru
        _
    $region40: #{net_forward.12} parent=5 // pred_fallthru
      _
    %p578 = scmp.le.s32.totalorder 2, %s11
    // Predicated region
    $region45: #{net_forward.12} parent=5 // pred_check
      %p579 = pneg %p578
    $region46: #{net_forward.12} parent=5 // pred_check_branch
      %581 = sbr.rel (%p579) target = $region48
    $region47: #{net_forward.12} parent=5 // pred_region
      %s582 = ssub.s32 %s11, 2
      // Predicated region
      $region49: #{net_forward.12} parent=47 // pred_check
        %p583 = pneg %p160
      $region50: #{net_forward.12} parent=47 // pred_check_branch
        %585 = sbr.rel (%p583) target = $region52
      $region51: #{net_forward.12} parent=47 // pred_region
        %p586 = scmp.lt.s32.totalorder %s17, 1
        %s587 = scalar_select %p586, %s17, 1
        %s588 = smul.addr %s587, 4
        %s589 = smul.addr %s588, 8
        %s590 = scalar_lea.vmem %s5, %s589
      $region52: #{net_forward.12} parent=47 // pred_fallthru
        _
    $region48: #{net_forward.12} parent=5 // pred_fallthru
      _
  $region6: #{net_forward.12} parent=0 // loop_footer
    %s15 = sadd.s32 1, %s11
  $region7: #{net_forward.12} parent=0 // loop_footer_branch
    %10 = sbr.rel target = $region3
  $region8: #{net_forward.12} parent=0 // loop_exit
    _

</llo_original>
